<compile_context>
chip_gen: v5e
topology: v5e:2x2
jax: 0.10.0
libtpu: 0.0.40
codegen_flags: <defaults>
</compile_context>

<pallas_src>
import functools

import jax
import jax.numpy as jnp
from jax.experimental import pallas as pl
from jax.experimental.pallas import tpu as pltpu

# ----------------------------- sizes -----------------------------------------
B = 2          # batch
T = 8          # question length
K = 8          # number of visual objects
V_DIM = 32     # visual feature dim
EMB = 32       # word embedding dim
HID = 32       # num_hid
N_ANS = 16     # answer vocabulary
Q_VOCAB = 64   # question token vocabulary
G_VOCAB = 64   # generator (caption) vocabulary
MAX_LEN = 6    # generator sequence length
LANE = 128     # vreg lane width; every weight block / gate is padded to this


# --------------------- packed-weight slab layouts -----------------------------
def _layout(entries):
    offs, cur = {}, 0
    for name, rows in entries:
        offs[name] = cur
        cur += rows
    return offs, cur


# slab Q (width 3*LANE): fused question-embedding input-gate table, GRU W_hh, b_hh
Q_LAYOUT = [("q_tab", Q_VOCAB), ("whh", LANE), ("bhh", 8)]
Q_OFF, Q_ROWS = _layout(Q_LAYOUT)

# slab G (width 4*LANE): fused caption-embedding input-gate table, LSTM W_hh, b_hh
G_LAYOUT = [("g_tab", G_VOCAB), ("whh", LANE), ("bhh", 8)]
G_OFF, G_ROWS = _layout(G_LAYOUT)

# slab M (width LANE): attention / q_net / v_net / classifier / output proj.
M_LAYOUT = [
    ("att_wv", V_DIM), ("att_wq", LANE), ("att_wa", 8),
    ("qnet_w", LANE), ("qnet_b", 8),
    ("vnet_w", V_DIM), ("vnet_b", 8),
    ("cls_w1", LANE), ("cls_b1", 8),
    ("cls_w2", LANE), ("cls_b2", 8),
    ("gen_wout", LANE), ("gen_bout", 8),
]
M_OFF, M_ROWS = _layout(M_LAYOUT)


# ----------------------------- fused forward kernel ---------------------------
def vqae_kernel(ids_ref, v_ref, slabq_ref, slabg_ref, slabm_ref,
                out_ref, gi_ref, gx_ref, hall_ref):
    f32 = jnp.float32
    n_q = gi_ref.shape[0]          # T * B
    n_g = gx_ref.shape[0]          # MAX_LEN * B
    n_t = n_q // B
    n_len = n_g // B

    def mslab(name, rows):
        off = M_OFF[name]
        return slabm_ref[off:off + rows, :]

    # ---- token ids -> fused input gates via one-hot matmuls (MXU "gather") ---
    q_ids = ids_ref[:n_q, :]                                  # (T*B, 1) int32
    g_ids = ids_ref[n_q:n_q + n_g, :]                         # (L*B, 1) int32
    onehot_q = jnp.where(
        jax.lax.broadcasted_iota(jnp.int32, (n_q, Q_VOCAB), 1) == q_ids, 1.0, 0.0)
    gi_ref[...] = jnp.dot(
        onehot_q, slabq_ref[Q_OFF["q_tab"]:Q_OFF["q_tab"] + Q_VOCAB, :],
        preferred_element_type=f32)                           # (T*B, 3*LANE)
    onehot_g = jnp.where(
        jax.lax.broadcasted_iota(jnp.int32, (n_g, G_VOCAB), 1) == g_ids, 1.0, 0.0)
    gx_ref[...] = jnp.dot(
        onehot_g, slabg_ref[G_OFF["g_tab"]:G_OFF["g_tab"] + G_VOCAB, :],
        preferred_element_type=f32)                           # (L*B, 4*LANE)

    # ---- GRU question encoder (PyTorch gate order [r, z, n]) -----------------
    gru_whh = slabq_ref[Q_OFF["whh"]:Q_OFF["whh"] + LANE, :]   # (128, 3*128)
    gru_bhh = jnp.broadcast_to(
        slabq_ref[Q_OFF["bhh"]:Q_OFF["bhh"] + 1, :], (B, 3 * LANE))  # hoisted
    h = jnp.zeros((B, LANE), f32)                              # lanes >= HID stay 0
    for t in range(n_t):                                       # fully unrolled
        gi = gi_ref[t * B:(t + 1) * B, :]                      # (B, 3*LANE)
        gh = jnp.dot(h, gru_whh, preferred_element_type=f32) + gru_bhh
        rz = jax.nn.sigmoid(gi[:, :2 * LANE] + gh[:, :2 * LANE])   # fused r|z
        r = rz[:, :LANE]
        z = rz[:, LANE:]
        n = jnp.tanh(gi[:, 2 * LANE:] + r * gh[:, 2 * LANE:])
        h = (1.0 - z) * n + z * h
    q_emb = h                                                  # (B, 128)

    # ---- attention over K objects + weighted visual sum ----------------------
    v_flat = v_ref[...]                                        # (B*K, V_DIM)
    v_proj = jax.nn.relu(jnp.dot(v_flat, mslab("att_wv", V_DIM),
                                 preferred_element_type=f32))  # (B*K, 128)
    q_proj = jax.nn.relu(jnp.dot(q_emb, mslab("att_wq", LANE),
                                 preferred_element_type=f32))  # (B, 128)
    wa = mslab("att_wa", 1)                                    # (1, 128)
    joint_att = v_proj.reshape(B, K, LANE) * q_proj[:, None, :]
    att_logits = jnp.sum(joint_att * wa[None, :, :], axis=-1)  # (B, K)
    att_max = jnp.max(att_logits, axis=-1, keepdims=True)
    att_exp = jnp.exp(att_logits - att_max)
    att = att_exp / jnp.sum(att_exp, axis=-1, keepdims=True)   # softmax over K
    v_emb = jnp.sum(att[:, :, None] * v_flat.reshape(B, K, V_DIM), axis=1)

    # ---- joint representation + answer classifier ----------------------------
    q_repr = jax.nn.relu(jnp.dot(q_emb, mslab("qnet_w", LANE),
                                 preferred_element_type=f32) + mslab("qnet_b", 1))
    v_repr = jax.nn.relu(jnp.dot(v_emb, mslab("vnet_w", V_DIM),
                                 preferred_element_type=f32) + mslab("vnet_b", 1))
    joint = q_repr * v_repr                                    # (B, 128), pads 0
    cls_hid = jax.nn.relu(jnp.dot(joint, mslab("cls_w1", LANE),
                                  preferred_element_type=f32) + mslab("cls_b1", 1))
    vqa_logits = (jnp.dot(cls_hid, mslab("cls_w2", LANE),
                          preferred_element_type=f32) + mslab("cls_b2", 1))

    # ---- LSTM caption generator (teacher forcing; h0 = joint, c0 = 0) --------
    gen_whh = slabg_ref[G_OFF["whh"]:G_OFF["whh"] + LANE, :]    # (128, 4*128)
    gen_bhh = jnp.broadcast_to(
        slabg_ref[G_OFF["bhh"]:G_OFF["bhh"] + 1, :], (B, 4 * LANE))  # hoisted
    h = joint
    c = jnp.zeros((B, LANE), f32)
    for t in range(n_len):                                      # fully unrolled
        gates = (gx_ref[t * B:(t + 1) * B, :]
                 + jnp.dot(h, gen_whh, preferred_element_type=f32) + gen_bhh)
        i_f = jax.nn.sigmoid(gates[:, :2 * LANE])               # fused i|f
        i_g = i_f[:, :LANE]
        f_g = i_f[:, LANE:]
        g_g = jnp.tanh(gates[:, 2 * LANE:3 * LANE])
        o_g = jax.nn.sigmoid(gates[:, 3 * LANE:])
        c = f_g * c + i_g * g_g
        h = o_g * jnp.tanh(c)
        hall_ref[t * B:(t + 1) * B, :] = h

    # output projection hoisted out of the loop; single merged lane-dense slab:
    # rows [0, L*B) = generator logits, rows [L*B, L*B + B) = answer logits.
    out_ref[:n_g, :] = (jnp.dot(hall_ref[...], mslab("gen_wout", LANE),
                                preferred_element_type=f32) + mslab("gen_bout", 1))
    out_ref[n_g:n_g + B, :] = vqa_logits


# ----------------------------- parameter init ---------------------------------
def init_params(key):
    ks = jax.random.split(key, 20)
    s = 0.05

    def rn(k, shape):
        return (s * jax.random.normal(k, shape)).astype(jnp.float32)

    return {
        "w_emb": rn(ks[0], (Q_VOCAB, EMB)),
        # GRU question encoder (gate order [r, z, n], weights stored (in, 3H))
        "gru_wih": rn(ks[1], (EMB, 3 * HID)),
        "gru_whh": rn(ks[2], (HID, 3 * HID)),
        "gru_bih": rn(ks[3], (1, 3 * HID)),
        "gru_bhh": rn(ks[4], (1, 3 * HID)),
        # attention
        "att_wv": rn(ks[5], (V_DIM, HID)),
        "att_wq": rn(ks[6], (HID, HID)),
        "att_wa": rn(ks[7], (HID, 1)),
        # q_net / v_net
        "qnet_w": rn(ks[8], (HID, HID)),
        "qnet_b": rn(ks[9], (1, HID)),
        "vnet_w": rn(ks[10], (V_DIM, HID)),
        "vnet_b": rn(ks[11], (1, HID)),
        # classifier (HID -> 2*HID -> N_ANS)
        "cls_w1": rn(ks[12], (HID, 2 * HID)),
        "cls_b1": rn(ks[13], (1, 2 * HID)),
        "cls_w2": rn(ks[14], (2 * HID, N_ANS)),
        "cls_b2": rn(ks[15], (1, N_ANS)),
        # generator: gt embedding + LSTM (gate order [i, f, g, o]) + out proj
        "gen_emb": rn(ks[16], (G_VOCAB, EMB)),
        "gen_wih": rn(ks[17], (EMB, 4 * HID)),
        "gen_whh": rn(ks[18], (HID, 4 * HID)),
        "gen_bih": jnp.zeros((1, 4 * HID), jnp.float32),
        "gen_bhh": jnp.zeros((1, 4 * HID), jnp.float32),
        "gen_wout": rn(ks[19], (HID, G_VOCAB)),
        "gen_bout": jnp.zeros((1, G_VOCAB), jnp.float32),
    }


# --------------- one-time weight packing (outside the per-call path) ----------
def pack_params(p):
    def pad_rows(w, rows):
        return jnp.pad(w, ((0, rows - w.shape[0]), (0, 0)))

    def pad_block(w, rows, cols=LANE):
        return jnp.pad(w, ((0, rows - w.shape[0]), (0, cols - w.shape[1])))

    def pad_gates(w, n_gates):          # (rows, n_gates*HID) -> (rows, n_gates*LANE)
        r = w.shape[0]
        w3 = w.reshape(r, n_gates, HID)
        w3 = jnp.pad(w3, ((0, 0), (0, 0), (0, LANE - HID)))
        return w3.reshape(r, n_gates * LANE)

    def pack(layout, blocks, width):
        parts = []
        for name, rows in layout:
            blk = blocks[name]
            assert blk.shape == (rows, width), (name, blk.shape, rows, width)
            parts.append(blk)
        return jnp.concatenate(parts, axis=0)

    # GRU slab: fold w_emb into the input-gate weights, pad each gate to 128 lanes
    q_tab = p["w_emb"] @ p["gru_wih"] + p["gru_bih"]            # (Q_VOCAB, 3*HID)
    slab_q = pack(Q_LAYOUT, {
        "q_tab": pad_gates(q_tab, 3),
        "whh": pad_gates(pad_rows(p["gru_whh"], LANE), 3),
        "bhh": pad_gates(pad_rows(p["gru_bhh"], 8), 3),
    }, 3 * LANE)

    # LSTM slab
    g_tab = p["gen_emb"] @ p["gen_wih"] + p["gen_bih"]          # (G_VOCAB, 4*HID)
    slab_g = pack(G_LAYOUT, {
        "g_tab": pad_gates(g_tab, 4),
        "whh": pad_gates(pad_rows(p["gen_whh"], LANE), 4),
        "bhh": pad_gates(pad_rows(p["gen_bhh"], 8), 4),
    }, 4 * LANE)

    # misc slab (everything lane-padded to 128; rows padded with zeros)
    slab_m = pack(M_LAYOUT, {
        "att_wv": pad_block(p["att_wv"], V_DIM),
        "att_wq": pad_block(p["att_wq"], LANE),
        "att_wa": pad_block(p["att_wa"].reshape(1, HID), 8),
        "qnet_w": pad_block(p["qnet_w"], LANE),
        "qnet_b": pad_block(p["qnet_b"], 8),
        "vnet_w": pad_block(p["vnet_w"], V_DIM),
        "vnet_b": pad_block(p["vnet_b"], 8),
        "cls_w1": pad_block(p["cls_w1"], LANE),
        "cls_b1": pad_block(p["cls_b1"], 8),
        "cls_w2": pad_block(p["cls_w2"], LANE),
        "cls_b2": pad_block(p["cls_b2"], 8),
        "gen_wout": pad_block(p["gen_wout"], LANE),
        "gen_bout": pad_block(p["gen_bout"], 8),
    }, LANE)

    return {"slab_q": slab_q, "slab_g": slab_g, "slab_m": slab_m}


# ----------------------------- VQAE.forward -----------------------------------
@functools.partial(jax.jit, static_argnames=("max_len",))
def vqae_forward(packed, v, q, gt, lengths, max_len):
    del lengths  # TODO(synk): only used for pack_padded loss masking downstream
    n_t = q.shape[1]
    n_q = n_t * B
    n_g = max_len * B

    # token ids, time-major (row = t*B + b), as one int32 VMEM column
    ids = jnp.concatenate(
        [jnp.transpose(q).reshape(n_q, 1),
         jnp.transpose(gt[:, :max_len]).reshape(n_g, 1)], axis=0).astype(jnp.int32)
    v_flat = v.reshape(B * K, V_DIM)

    vmem = pl.BlockSpec(memory_space=pltpu.MemorySpace.VMEM)
    out = pl.pallas_call(
        vqae_kernel,
        out_shape=jax.ShapeDtypeStruct((n_g + B, LANE), jnp.float32),
        in_specs=[vmem] * 5,
        out_specs=vmem,
        scratch_shapes=[
            pltpu.VMEM((n_q, 3 * LANE), jnp.float32),   # fused GRU input gates
            pltpu.VMEM((n_g, 4 * LANE), jnp.float32),   # fused LSTM input gates
            pltpu.VMEM((n_g, LANE), jnp.float32),       # LSTM hidden states
        ],
    )(ids, v_flat, packed["slab_q"], packed["slab_g"], packed["slab_m"])

    vqe_logits = (out[:n_g, :G_VOCAB]
                  .reshape(max_len, B, G_VOCAB)
                  .transpose(1, 0, 2))                          # (B, L, V)
    vqa_logits = out[n_g:n_g + B, :N_ANS]                       # (B, N_ANS)
    return vqa_logits, vqe_logits


# ----------------------- pure-JAX reference (for checking) --------------------
def vqae_reference(params, v, q, gt, max_len):
    w_emb = params["w_emb"][q]                                  # (B, T, EMB)
    h = jnp.zeros((B, HID), jnp.float32)
    for t in range(q.shape[1]):
        x = w_emb[:, t, :]
        gi = x @ params["gru_wih"] + params["gru_bih"]
        gh = h @ params["gru_whh"] + params["gru_bhh"]
        r = jax.nn.sigmoid(gi[:, :HID] + gh[:, :HID])
        z = jax.nn.sigmoid(gi[:, HID:2 * HID] + gh[:, HID:2 * HID])
        n = jnp.tanh(gi[:, 2 * HID:] + r * gh[:, 2 * HID:])
        h = (1.0 - z) * n + z * h
    q_emb = h
    v_proj = jax.nn.relu(jnp.einsum("bkv,vh->bkh", v, params["att_wv"]))
    q_proj = jax.nn.relu(q_emb @ params["att_wq"])
    logits = jnp.einsum("bkh,h->bk", v_proj * q_proj[:, None, :],
                        params["att_wa"][:, 0])
    att = jax.nn.softmax(logits, axis=-1)
    v_emb = jnp.sum(att[:, :, None] * v, axis=1)
    q_repr = jax.nn.relu(q_emb @ params["qnet_w"] + params["qnet_b"])
    v_repr = jax.nn.relu(v_emb @ params["vnet_w"] + params["vnet_b"])
    joint = q_repr * v_repr
    cls_hid = jax.nn.relu(joint @ params["cls_w1"] + params["cls_b1"])
    vqa = cls_hid @ params["cls_w2"] + params["cls_b2"]
    h, c = joint, jnp.zeros_like(joint)
    outs = []
    for t in range(max_len):
        x = params["gen_emb"][gt[:, t]]
        gates = (x @ params["gen_wih"] + params["gen_bih"]
                 + h @ params["gen_whh"] + params["gen_bhh"])
        i_g = jax.nn.sigmoid(gates[:, :HID])
        f_g = jax.nn.sigmoid(gates[:, HID:2 * HID])
        g_g = jnp.tanh(gates[:, 2 * HID:3 * HID])
        o_g = jax.nn.sigmoid(gates[:, 3 * HID:])
        c = f_g * c + i_g * g_g
        h = o_g * jnp.tanh(c)
        outs.append(h @ params["gen_wout"] + params["gen_bout"])
    return vqa, jnp.stack(outs, axis=1)


# ----------------------------- main -------------------------------------------
if __name__ == "__main__":
    key = jax.random.PRNGKey(0)
    kp, kv, kq, kg = jax.random.split(key, 4)

    params = init_params(kp)
    packed = pack_params(params)   # one-time packing, outside the per-call path

    v = jax.random.normal(kv, (B, K, V_DIM), dtype=jnp.float32)
    q = jax.random.randint(kq, (B, T), 0, Q_VOCAB, dtype=jnp.int32)
    gt = jax.random.randint(kg, (B, MAX_LEN), 0, G_VOCAB, dtype=jnp.int32)
    lengths = jnp.full((B,), MAX_LEN, dtype=jnp.int32)

    vqa_logits, vqe_logits = vqae_forward(packed, v, q, gt, lengths, MAX_LEN)
    jax.block_until_ready((vqa_logits, vqe_logits))

    assert vqa_logits.shape == (B, N_ANS)
    assert vqe_logits.shape == (B, MAX_LEN, G_VOCAB)
    assert bool(jnp.all(jnp.isfinite(vqa_logits)))
    assert bool(jnp.all(jnp.isfinite(vqe_logits)))

    ref_vqa, ref_vqe = vqae_reference(params, v, q, gt, MAX_LEN)
    assert bool(jnp.allclose(vqa_logits, ref_vqa, rtol=2e-3, atol=2e-3))
    assert bool(jnp.allclose(vqe_logits, ref_vqe, rtol=2e-3, atol=2e-3))

    print("KERNEL_OK")
</pallas_src>

<mosaic_0001>
module attributes {stable_mosaic.version = 11 : i64} {
  func.func @vqae_kernel(%arg0: memref<28x1xi32, #tpu.memory_space<vmem>>, %arg1: memref<16x32xf32, #tpu.memory_space<vmem>>, %arg2: memref<200x384xf32, #tpu.memory_space<vmem>>, %arg3: memref<200x512xf32, #tpu.memory_space<vmem>>, %arg4: memref<752x128xf32, #tpu.memory_space<vmem>>, %arg5: memref<14x128xf32, #tpu.memory_space<vmem>>, %arg6: memref<16x384xf32, #tpu.memory_space<vmem>>, %arg7: memref<12x512xf32, #tpu.memory_space<vmem>>, %arg8: memref<12x128xf32, #tpu.memory_space<vmem>>) attributes {dimension_semantics = [], scalar_prefetch = 0 : i64, scratch_operands = 3 : i64, tpu.core_type = #tpu.core_type<tc>} {
    %c0 = arith.constant 0 : index
    %c0_0 = arith.constant 0 : index
    %0 = vector.load %arg0[%c0, %c0_0] : memref<28x1xi32, #tpu.memory_space<vmem>>, vector<16x1xi32>
    %c16 = arith.constant 16 : index
    %c0_1 = arith.constant 0 : index
    %1 = vector.load %arg0[%c16, %c0_1] : memref<28x1xi32, #tpu.memory_space<vmem>>, vector<12x1xi32>
    %2 = tpu.iota {dimensions = array<i32: 1>} : vector<16x64xi32>
    %3 = vector.broadcast %0 : vector<16x1xi32> to vector<16x64xi32>
    %4 = arith.cmpi eq, %2, %3 : vector<16x64xi32>
    %cst = arith.constant 1.000000e+00 : f32
    %cst_2 = arith.constant 0.000000e+00 : f32
    %5 = vector.broadcast %cst : f32 to vector<16x64xf32>
    %6 = vector.broadcast %cst_2 : f32 to vector<16x64xf32>
    %7 = arith.select %4, %5, %6 : vector<16x64xi1>, vector<16x64xf32>
    %c0_3 = arith.constant 0 : index
    %c0_4 = arith.constant 0 : index
    %8 = vector.load %arg2[%c0_3, %c0_4] : memref<200x384xf32, #tpu.memory_space<vmem>>, vector<64x384xf32>
    %cst_5 = arith.constant dense<0.000000e+00> : vector<16x384xf32>
    %9 = tpu.matmul %7, %8, %cst_5 {dimension_numbers = #tpu.dot_dimension_numbers<[1], [0], [0], [1], [0, 0, 1, 1], [], []>} : vector<16x64xf32>, vector<64x384xf32>, vector<16x384xf32> -> vector<16x384xf32>
    %c0_6 = arith.constant 0 : index
    %c0_7 = arith.constant 0 : index
    %10 = vector.load %arg6[%c0_6, %c0_7] : memref<16x384xf32, #tpu.memory_space<vmem>>, vector<16x384xf32>
    tpu.vector_store %arg6[%c0_6, %c0_7], %9 {strides = array<i32>} : memref<16x384xf32, #tpu.memory_space<vmem>>, vector<16x384xf32>,
    %11 = tpu.iota {dimensions = array<i32: 1>} : vector<12x64xi32>
    %12 = vector.broadcast %1 : vector<12x1xi32> to vector<12x64xi32>
    %13 = arith.cmpi eq, %11, %12 : vector<12x64xi32>
    %cst_8 = arith.constant 1.000000e+00 : f32
    %cst_9 = arith.constant 0.000000e+00 : f32
    %14 = vector.broadcast %cst_8 : f32 to vector<12x64xf32>
    %15 = vector.broadcast %cst_9 : f32 to vector<12x64xf32>
    %16 = arith.select %13, %14, %15 : vector<12x64xi1>, vector<12x64xf32>
    %c0_10 = arith.constant 0 : index
    %c0_11 = arith.constant 0 : index
    %17 = vector.load %arg3[%c0_10, %c0_11] : memref<200x512xf32, #tpu.memory_space<vmem>>, vector<64x512xf32>
    %cst_12 = arith.constant dense<0.000000e+00> : vector<12x512xf32>
    %18 = tpu.matmul %16, %17, %cst_12 {dimension_numbers = #tpu.dot_dimension_numbers<[1], [0], [0], [1], [0, 0, 1, 1], [], []>} : vector<12x64xf32>, vector<64x512xf32>, vector<12x512xf32> -> vector<12x512xf32>
    %c0_13 = arith.constant 0 : index
    %c0_14 = arith.constant 0 : index
    %19 = vector.load %arg7[%c0_13, %c0_14] : memref<12x512xf32, #tpu.memory_space<vmem>>, vector<12x512xf32>
    tpu.vector_store %arg7[%c0_13, %c0_14], %18 {strides = array<i32>} : memref<12x512xf32, #tpu.memory_space<vmem>>, vector<12x512xf32>,
    %c64 = arith.constant 64 : index
    %c0_15 = arith.constant 0 : index
    %20 = vector.load %arg2[%c64, %c0_15] : memref<200x384xf32, #tpu.memory_space<vmem>>, vector<128x384xf32>
    %c192 = arith.constant 192 : index
    %c0_16 = arith.constant 0 : index
    %21 = vector.load %arg2[%c192, %c0_16] : memref<200x384xf32, #tpu.memory_space<vmem>>, vector<1x384xf32>
    %22 = vector.shape_cast %21 : vector<1x384xf32> to vector<1x384xf32>
    %23 = vector.broadcast %22 : vector<1x384xf32> to vector<2x384xf32>
    %cst_17 = arith.constant 0.000000e+00 : f32
    %24 = vector.broadcast %cst_17 : f32 to vector<2x128xf32>
    %c0_18 = arith.constant 0 : index
    %c0_19 = arith.constant 0 : index
    %25 = vector.load %arg6[%c0_18, %c0_19] : memref<16x384xf32, #tpu.memory_space<vmem>>, vector<2x384xf32>
    %cst_20 = arith.constant dense<0.000000e+00> : vector<2x384xf32>
    %26 = tpu.matmul %24, %20, %cst_20 {dimension_numbers = #tpu.dot_dimension_numbers<[1], [0], [0], [1], [0, 0, 1, 1], [], []>} : vector<2x128xf32>, vector<128x384xf32>, vector<2x384xf32> -> vector<2x384xf32>
    %27 = arith.addf %26, %23 : vector<2x384xf32>
    %28 = vector.extract_strided_slice %25 {offsets = [0, 0], sizes = [2, 256], strides = [1, 1]} : vector<2x384xf32> to vector<2x256xf32>
    %29 = vector.extract_strided_slice %27 {offsets = [0, 0], sizes = [2, 256], strides = [1, 1]} : vector<2x384xf32> to vector<2x256xf32>
    %30 = arith.addf %28, %29 : vector<2x256xf32>
    %31 = arith.negf %30 : vector<2x256xf32>
    %32 = math.exp %31 : vector<2x256xf32>
    %cst_21 = arith.constant 1.000000e+00 : f32
    %33 = vector.broadcast %cst_21 : f32 to vector<2x256xf32>
    %34 = arith.addf %33, %32 : vector<2x256xf32>
    %35 = arith.divf %33, %34 : vector<2x256xf32>
    %36 = vector.extract_strided_slice %35 {offsets = [0, 0], sizes = [2, 128], strides = [1, 1]} : vector<2x256xf32> to vector<2x128xf32>
    %37 = vector.extract_strided_slice %35 {offsets = [0, 128], sizes = [2, 128], strides = [1, 1]} : vector<2x256xf32> to vector<2x128xf32>
    %38 = vector.extract_strided_slice %25 {offsets = [0, 256], sizes = [2, 128], strides = [1, 1]} : vector<2x384xf32> to vector<2x128xf32>
    %39 = vector.extract_strided_slice %27 {offsets = [0, 256], sizes = [2, 128], strides = [1, 1]} : vector<2x384xf32> to vector<2x128xf32>
    %40 = arith.mulf %36, %39 : vector<2x128xf32>
    %41 = arith.addf %38, %40 : vector<2x128xf32>
    %42 = math.tanh %41 : vector<2x128xf32>
    %cst_22 = arith.constant 1.000000e+00 : f32
    %43 = vector.broadcast %cst_22 : f32 to vector<2x128xf32>
    %44 = arith.subf %43, %37 : vector<2x128xf32>
    %45 = arith.mulf %44, %42 : vector<2x128xf32>
    %46 = arith.mulf %37, %24 : vector<2x128xf32>
    %47 = arith.addf %45, %46 : vector<2x128xf32>
    %c2 = arith.constant 2 : index
    %c0_23 = arith.constant 0 : index
    %48 = vector.load %arg6[%c2, %c0_23] : memref<16x384xf32, #tpu.memory_space<vmem>>, vector<2x384xf32>
    %cst_24 = arith.constant dense<0.000000e+00> : vector<2x384xf32>
    %49 = tpu.matmul %47, %20, %cst_24 {dimension_numbers = #tpu.dot_dimension_numbers<[1], [0], [0], [1], [0, 0, 1, 1], [], []>} : vector<2x128xf32>, vector<128x384xf32>, vector<2x384xf32> -> vector<2x384xf32>
    %50 = arith.addf %49, %23 : vector<2x384xf32>
    %51 = vector.extract_strided_slice %48 {offsets = [0, 0], sizes = [2, 256], strides = [1, 1]} : vector<2x384xf32> to vector<2x256xf32>
    %52 = vector.extract_strided_slice %50 {offsets = [0, 0], sizes = [2, 256], strides = [1, 1]} : vector<2x384xf32> to vector<2x256xf32>
    %53 = arith.addf %51, %52 : vector<2x256xf32>
    %54 = arith.negf %53 : vector<2x256xf32>
    %55 = math.exp %54 : vector<2x256xf32>
    %cst_25 = arith.constant 1.000000e+00 : f32
    %56 = vector.broadcast %cst_25 : f32 to vector<2x256xf32>
    %57 = arith.addf %56, %55 : vector<2x256xf32>
    %58 = arith.divf %56, %57 : vector<2x256xf32>
    %59 = vector.extract_strided_slice %58 {offsets = [0, 0], sizes = [2, 128], strides = [1, 1]} : vector<2x256xf32> to vector<2x128xf32>
    %60 = vector.extract_strided_slice %58 {offsets = [0, 128], sizes = [2, 128], strides = [1, 1]} : vector<2x256xf32> to vector<2x128xf32>
    %61 = vector.extract_strided_slice %48 {offsets = [0, 256], sizes = [2, 128], strides = [1, 1]} : vector<2x384xf32> to vector<2x128xf32>
    %62 = vector.extract_strided_slice %50 {offsets = [0, 256], sizes = [2, 128], strides = [1, 1]} : vector<2x384xf32> to vector<2x128xf32>
    %63 = arith.mulf %59, %62 : vector<2x128xf32>
    %64 = arith.addf %61, %63 : vector<2x128xf32>
    %65 = math.tanh %64 : vector<2x128xf32>
    %cst_26 = arith.constant 1.000000e+00 : f32
    %66 = vector.broadcast %cst_26 : f32 to vector<2x128xf32>
    %67 = arith.subf %66, %60 : vector<2x128xf32>
    %68 = arith.mulf %67, %65 : vector<2x128xf32>
    %69 = arith.mulf %60, %47 : vector<2x128xf32>
    %70 = arith.addf %68, %69 : vector<2x128xf32>
    %c4 = arith.constant 4 : index
    %c0_27 = arith.constant 0 : index
    %71 = vector.load %arg6[%c4, %c0_27] : memref<16x384xf32, #tpu.memory_space<vmem>>, vector<2x384xf32>
    %cst_28 = arith.constant dense<0.000000e+00> : vector<2x384xf32>
    %72 = tpu.matmul %70, %20, %cst_28 {dimension_numbers = #tpu.dot_dimension_numbers<[1], [0], [0], [1], [0, 0, 1, 1], [], []>} : vector<2x128xf32>, vector<128x384xf32>, vector<2x384xf32> -> vector<2x384xf32>
    %73 = arith.addf %72, %23 : vector<2x384xf32>
    %74 = vector.extract_strided_slice %71 {offsets = [0, 0], sizes = [2, 256], strides = [1, 1]} : vector<2x384xf32> to vector<2x256xf32>
    %75 = vector.extract_strided_slice %73 {offsets = [0, 0], sizes = [2, 256], strides = [1, 1]} : vector<2x384xf32> to vector<2x256xf32>
    %76 = arith.addf %74, %75 : vector<2x256xf32>
    %77 = arith.negf %76 : vector<2x256xf32>
    %78 = math.exp %77 : vector<2x256xf32>
    %cst_29 = arith.constant 1.000000e+00 : f32
    %79 = vector.broadcast %cst_29 : f32 to vector<2x256xf32>
    %80 = arith.addf %79, %78 : vector<2x256xf32>
    %81 = arith.divf %79, %80 : vector<2x256xf32>
    %82 = vector.extract_strided_slice %81 {offsets = [0, 0], sizes = [2, 128], strides = [1, 1]} : vector<2x256xf32> to vector<2x128xf32>
    %83 = vector.extract_strided_slice %81 {offsets = [0, 128], sizes = [2, 128], strides = [1, 1]} : vector<2x256xf32> to vector<2x128xf32>
    %84 = vector.extract_strided_slice %71 {offsets = [0, 256], sizes = [2, 128], strides = [1, 1]} : vector<2x384xf32> to vector<2x128xf32>
    %85 = vector.extract_strided_slice %73 {offsets = [0, 256], sizes = [2, 128], strides = [1, 1]} : vector<2x384xf32> to vector<2x128xf32>
    %86 = arith.mulf %82, %85 : vector<2x128xf32>
    %87 = arith.addf %84, %86 : vector<2x128xf32>
    %88 = math.tanh %87 : vector<2x128xf32>
    %cst_30 = arith.constant 1.000000e+00 : f32
    %89 = vector.broadcast %cst_30 : f32 to vector<2x128xf32>
    %90 = arith.subf %89, %83 : vector<2x128xf32>
    %91 = arith.mulf %90, %88 : vector<2x128xf32>
    %92 = arith.mulf %83, %70 : vector<2x128xf32>
    %93 = arith.addf %91, %92 : vector<2x128xf32>
    %c6 = arith.constant 6 : index
    %c0_31 = arith.constant 0 : index
    %94 = vector.load %arg6[%c6, %c0_31] : memref<16x384xf32, #tpu.memory_space<vmem>>, vector<2x384xf32>
    %cst_32 = arith.constant dense<0.000000e+00> : vector<2x384xf32>
    %95 = tpu.matmul %93, %20, %cst_32 {dimension_numbers = #tpu.dot_dimension_numbers<[1], [0], [0], [1], [0, 0, 1, 1], [], []>} : vector<2x128xf32>, vector<128x384xf32>, vector<2x384xf32> -> vector<2x384xf32>
    %96 = arith.addf %95, %23 : vector<2x384xf32>
    %97 = vector.extract_strided_slice %94 {offsets = [0, 0], sizes = [2, 256], strides = [1, 1]} : vector<2x384xf32> to vector<2x256xf32>
    %98 = vector.extract_strided_slice %96 {offsets = [0, 0], sizes = [2, 256], strides = [1, 1]} : vector<2x384xf32> to vector<2x256xf32>
    %99 = arith.addf %97, %98 : vector<2x256xf32>
    %100 = arith.negf %99 : vector<2x256xf32>
    %101 = math.exp %100 : vector<2x256xf32>
    %cst_33 = arith.constant 1.000000e+00 : f32
    %102 = vector.broadcast %cst_33 : f32 to vector<2x256xf32>
    %103 = arith.addf %102, %101 : vector<2x256xf32>
    %104 = arith.divf %102, %103 : vector<2x256xf32>
    %105 = vector.extract_strided_slice %104 {offsets = [0, 0], sizes = [2, 128], strides = [1, 1]} : vector<2x256xf32> to vector<2x128xf32>
    %106 = vector.extract_strided_slice %104 {offsets = [0, 128], sizes = [2, 128], strides = [1, 1]} : vector<2x256xf32> to vector<2x128xf32>
    %107 = vector.extract_strided_slice %94 {offsets = [0, 256], sizes = [2, 128], strides = [1, 1]} : vector<2x384xf32> to vector<2x128xf32>
    %108 = vector.extract_strided_slice %96 {offsets = [0, 256], sizes = [2, 128], strides = [1, 1]} : vector<2x384xf32> to vector<2x128xf32>
    %109 = arith.mulf %105, %108 : vector<2x128xf32>
    %110 = arith.addf %107, %109 : vector<2x128xf32>
    %111 = math.tanh %110 : vector<2x128xf32>
    %cst_34 = arith.constant 1.000000e+00 : f32
    %112 = vector.broadcast %cst_34 : f32 to vector<2x128xf32>
    %113 = arith.subf %112, %106 : vector<2x128xf32>
    %114 = arith.mulf %113, %111 : vector<2x128xf32>
    %115 = arith.mulf %106, %93 : vector<2x128xf32>
    %116 = arith.addf %114, %115 : vector<2x128xf32>
    %c8 = arith.constant 8 : index
    %c0_35 = arith.constant 0 : index
    %117 = vector.load %arg6[%c8, %c0_35] : memref<16x384xf32, #tpu.memory_space<vmem>>, vector<2x384xf32>
    %cst_36 = arith.constant dense<0.000000e+00> : vector<2x384xf32>
    %118 = tpu.matmul %116, %20, %cst_36 {dimension_numbers = #tpu.dot_dimension_numbers<[1], [0], [0], [1], [0, 0, 1, 1], [], []>} : vector<2x128xf32>, vector<128x384xf32>, vector<2x384xf32> -> vector<2x384xf32>
    %119 = arith.addf %118, %23 : vector<2x384xf32>
    %120 = vector.extract_strided_slice %117 {offsets = [0, 0], sizes = [2, 256], strides = [1, 1]} : vector<2x384xf32> to vector<2x256xf32>
    %121 = vector.extract_strided_slice %119 {offsets = [0, 0], sizes = [2, 256], strides = [1, 1]} : vector<2x384xf32> to vector<2x256xf32>
    %122 = arith.addf %120, %121 : vector<2x256xf32>
    %123 = arith.negf %122 : vector<2x256xf32>
    %124 = math.exp %123 : vector<2x256xf32>
    %cst_37 = arith.constant 1.000000e+00 : f32
    %125 = vector.broadcast %cst_37 : f32 to vector<2x256xf32>
    %126 = arith.addf %125, %124 : vector<2x256xf32>
    %127 = arith.divf %125, %126 : vector<2x256xf32>
    %128 = vector.extract_strided_slice %127 {offsets = [0, 0], sizes = [2, 128], strides = [1, 1]} : vector<2x256xf32> to vector<2x128xf32>
    %129 = vector.extract_strided_slice %127 {offsets = [0, 128], sizes = [2, 128], strides = [1, 1]} : vector<2x256xf32> to vector<2x128xf32>
    %130 = vector.extract_strided_slice %117 {offsets = [0, 256], sizes = [2, 128], strides = [1, 1]} : vector<2x384xf32> to vector<2x128xf32>
    %131 = vector.extract_strided_slice %119 {offsets = [0, 256], sizes = [2, 128], strides = [1, 1]} : vector<2x384xf32> to vector<2x128xf32>
    %132 = arith.mulf %128, %131 : vector<2x128xf32>
    %133 = arith.addf %130, %132 : vector<2x128xf32>
    %134 = math.tanh %133 : vector<2x128xf32>
    %cst_38 = arith.constant 1.000000e+00 : f32
    %135 = vector.broadcast %cst_38 : f32 to vector<2x128xf32>
    %136 = arith.subf %135, %129 : vector<2x128xf32>
    %137 = arith.mulf %136, %134 : vector<2x128xf32>
    %138 = arith.mulf %129, %116 : vector<2x128xf32>
    %139 = arith.addf %137, %138 : vector<2x128xf32>
    %c10 = arith.constant 10 : index
    %c0_39 = arith.constant 0 : index
    %140 = vector.load %arg6[%c10, %c0_39] : memref<16x384xf32, #tpu.memory_space<vmem>>, vector<2x384xf32>
    %cst_40 = arith.constant dense<0.000000e+00> : vector<2x384xf32>
    %141 = tpu.matmul %139, %20, %cst_40 {dimension_numbers = #tpu.dot_dimension_numbers<[1], [0], [0], [1], [0, 0, 1, 1], [], []>} : vector<2x128xf32>, vector<128x384xf32>, vector<2x384xf32> -> vector<2x384xf32>
    %142 = arith.addf %141, %23 : vector<2x384xf32>
    %143 = vector.extract_strided_slice %140 {offsets = [0, 0], sizes = [2, 256], strides = [1, 1]} : vector<2x384xf32> to vector<2x256xf32>
    %144 = vector.extract_strided_slice %142 {offsets = [0, 0], sizes = [2, 256], strides = [1, 1]} : vector<2x384xf32> to vector<2x256xf32>
    %145 = arith.addf %143, %144 : vector<2x256xf32>
    %146 = arith.negf %145 : vector<2x256xf32>
    %147 = math.exp %146 : vector<2x256xf32>
    %cst_41 = arith.constant 1.000000e+00 : f32
    %148 = vector.broadcast %cst_41 : f32 to vector<2x256xf32>
    %149 = arith.addf %148, %147 : vector<2x256xf32>
    %150 = arith.divf %148, %149 : vector<2x256xf32>
    %151 = vector.extract_strided_slice %150 {offsets = [0, 0], sizes = [2, 128], strides = [1, 1]} : vector<2x256xf32> to vector<2x128xf32>
    %152 = vector.extract_strided_slice %150 {offsets = [0, 128], sizes = [2, 128], strides = [1, 1]} : vector<2x256xf32> to vector<2x128xf32>
    %153 = vector.extract_strided_slice %140 {offsets = [0, 256], sizes = [2, 128], strides = [1, 1]} : vector<2x384xf32> to vector<2x128xf32>
    %154 = vector.extract_strided_slice %142 {offsets = [0, 256], sizes = [2, 128], strides = [1, 1]} : vector<2x384xf32> to vector<2x128xf32>
    %155 = arith.mulf %151, %154 : vector<2x128xf32>
    %156 = arith.addf %153, %155 : vector<2x128xf32>
    %157 = math.tanh %156 : vector<2x128xf32>
    %cst_42 = arith.constant 1.000000e+00 : f32
    %158 = vector.broadcast %cst_42 : f32 to vector<2x128xf32>
    %159 = arith.subf %158, %152 : vector<2x128xf32>
    %160 = arith.mulf %159, %157 : vector<2x128xf32>
    %161 = arith.mulf %152, %139 : vector<2x128xf32>
    %162 = arith.addf %160, %161 : vector<2x128xf32>
    %c12 = arith.constant 12 : index
    %c0_43 = arith.constant 0 : index
    %163 = vector.load %arg6[%c12, %c0_43] : memref<16x384xf32, #tpu.memory_space<vmem>>, vector<2x384xf32>
    %cst_44 = arith.constant dense<0.000000e+00> : vector<2x384xf32>
    %164 = tpu.matmul %162, %20, %cst_44 {dimension_numbers = #tpu.dot_dimension_numbers<[1], [0], [0], [1], [0, 0, 1, 1], [], []>} : vector<2x128xf32>, vector<128x384xf32>, vector<2x384xf32> -> vector<2x384xf32>
    %165 = arith.addf %164, %23 : vector<2x384xf32>
    %166 = vector.extract_strided_slice %163 {offsets = [0, 0], sizes = [2, 256], strides = [1, 1]} : vector<2x384xf32> to vector<2x256xf32>
    %167 = vector.extract_strided_slice %165 {offsets = [0, 0], sizes = [2, 256], strides = [1, 1]} : vector<2x384xf32> to vector<2x256xf32>
    %168 = arith.addf %166, %167 : vector<2x256xf32>
    %169 = arith.negf %168 : vector<2x256xf32>
    %170 = math.exp %169 : vector<2x256xf32>
    %cst_45 = arith.constant 1.000000e+00 : f32
    %171 = vector.broadcast %cst_45 : f32 to vector<2x256xf32>
    %172 = arith.addf %171, %170 : vector<2x256xf32>
    %173 = arith.divf %171, %172 : vector<2x256xf32>
    %174 = vector.extract_strided_slice %173 {offsets = [0, 0], sizes = [2, 128], strides = [1, 1]} : vector<2x256xf32> to vector<2x128xf32>
    %175 = vector.extract_strided_slice %173 {offsets = [0, 128], sizes = [2, 128], strides = [1, 1]} : vector<2x256xf32> to vector<2x128xf32>
    %176 = vector.extract_strided_slice %163 {offsets = [0, 256], sizes = [2, 128], strides = [1, 1]} : vector<2x384xf32> to vector<2x128xf32>
    %177 = vector.extract_strided_slice %165 {offsets = [0, 256], sizes = [2, 128], strides = [1, 1]} : vector<2x384xf32> to vector<2x128xf32>
    %178 = arith.mulf %174, %177 : vector<2x128xf32>
    %179 = arith.addf %176, %178 : vector<2x128xf32>
    %180 = math.tanh %179 : vector<2x128xf32>
    %cst_46 = arith.constant 1.000000e+00 : f32
    %181 = vector.broadcast %cst_46 : f32 to vector<2x128xf32>
    %182 = arith.subf %181, %175 : vector<2x128xf32>
    %183 = arith.mulf %182, %180 : vector<2x128xf32>
    %184 = arith.mulf %175, %162 : vector<2x128xf32>
    %185 = arith.addf %183, %184 : vector<2x128xf32>
    %c14 = arith.constant 14 : index
    %c0_47 = arith.constant 0 : index
    %186 = vector.load %arg6[%c14, %c0_47] : memref<16x384xf32, #tpu.memory_space<vmem>>, vector<2x384xf32>
    %cst_48 = arith.constant dense<0.000000e+00> : vector<2x384xf32>
    %187 = tpu.matmul %185, %20, %cst_48 {dimension_numbers = #tpu.dot_dimension_numbers<[1], [0], [0], [1], [0, 0, 1, 1], [], []>} : vector<2x128xf32>, vector<128x384xf32>, vector<2x384xf32> -> vector<2x384xf32>
    %188 = arith.addf %187, %23 : vector<2x384xf32>
    %189 = vector.extract_strided_slice %186 {offsets = [0, 0], sizes = [2, 256], strides = [1, 1]} : vector<2x384xf32> to vector<2x256xf32>
    %190 = vector.extract_strided_slice %188 {offsets = [0, 0], sizes = [2, 256], strides = [1, 1]} : vector<2x384xf32> to vector<2x256xf32>
    %191 = arith.addf %189, %190 : vector<2x256xf32>
    %192 = arith.negf %191 : vector<2x256xf32>
    %193 = math.exp %192 : vector<2x256xf32>
    %cst_49 = arith.constant 1.000000e+00 : f32
    %194 = vector.broadcast %cst_49 : f32 to vector<2x256xf32>
    %195 = arith.addf %194, %193 : vector<2x256xf32>
    %196 = arith.divf %194, %195 : vector<2x256xf32>
    %197 = vector.extract_strided_slice %196 {offsets = [0, 0], sizes = [2, 128], strides = [1, 1]} : vector<2x256xf32> to vector<2x128xf32>
    %198 = vector.extract_strided_slice %196 {offsets = [0, 128], sizes = [2, 128], strides = [1, 1]} : vector<2x256xf32> to vector<2x128xf32>
    %199 = vector.extract_strided_slice %186 {offsets = [0, 256], sizes = [2, 128], strides = [1, 1]} : vector<2x384xf32> to vector<2x128xf32>
    %200 = vector.extract_strided_slice %188 {offsets = [0, 256], sizes = [2, 128], strides = [1, 1]} : vector<2x384xf32> to vector<2x128xf32>
    %201 = arith.mulf %197, %200 : vector<2x128xf32>
    %202 = arith.addf %199, %201 : vector<2x128xf32>
    %203 = math.tanh %202 : vector<2x128xf32>
    %cst_50 = arith.constant 1.000000e+00 : f32
    %204 = vector.broadcast %cst_50 : f32 to vector<2x128xf32>
    %205 = arith.subf %204, %198 : vector<2x128xf32>
    %206 = arith.mulf %205, %203 : vector<2x128xf32>
    %207 = arith.mulf %198, %185 : vector<2x128xf32>
    %208 = arith.addf %206, %207 : vector<2x128xf32>
    %c0_51 = arith.constant 0 : index
    %c0_52 = arith.constant 0 : index
    %209 = vector.load %arg1[%c0_51, %c0_52] : memref<16x32xf32, #tpu.memory_space<vmem>>, vector<16x32xf32>
    %c0_53 = arith.constant 0 : index
    %c0_54 = arith.constant 0 : index
    %210 = vector.load %arg4[%c0_53, %c0_54] : memref<752x128xf32, #tpu.memory_space<vmem>>, vector<32x128xf32>
    %cst_55 = arith.constant dense<0.000000e+00> : vector<16x128xf32>
    %211 = tpu.matmul %209, %210, %cst_55 {dimension_numbers = #tpu.dot_dimension_numbers<[1], [0], [0], [1], [0, 0, 1, 1], [], []>} : vector<16x32xf32>, vector<32x128xf32>, vector<16x128xf32> -> vector<16x128xf32>
    %cst_56 = arith.constant 0.000000e+00 : f32
    %212 = vector.broadcast %cst_56 : f32 to vector<16x128xf32>
    %213 = arith.maximumf %211, %212 : vector<16x128xf32>
    %c32 = arith.constant 32 : index
    %c0_57 = arith.constant 0 : index
    %214 = vector.load %arg4[%c32, %c0_57] : memref<752x128xf32, #tpu.memory_space<vmem>>, vector<128x128xf32>
    %cst_58 = arith.constant dense<0.000000e+00> : vector<2x128xf32>
    %215 = tpu.matmul %208, %214, %cst_58 {dimension_numbers = #tpu.dot_dimension_numbers<[1], [0], [0], [1], [0, 0, 1, 1], [], []>} : vector<2x128xf32>, vector<128x128xf32>, vector<2x128xf32> -> vector<2x128xf32>
    %cst_59 = arith.constant 0.000000e+00 : f32
    %216 = vector.broadcast %cst_59 : f32 to vector<2x128xf32>
    %217 = arith.maximumf %215, %216 : vector<2x128xf32>
    %c160 = arith.constant 160 : index
    %c0_60 = arith.constant 0 : index
    %218 = vector.load %arg4[%c160, %c0_60] : memref<752x128xf32, #tpu.memory_space<vmem>>, vector<1x128xf32>
    %219 = vector.shape_cast %213 : vector<16x128xf32> to vector<2x8x128xf32>
    %220 = vector.shape_cast %217 : vector<2x128xf32> to vector<2x1x128xf32>
    %221 = vector.broadcast %220 : vector<2x1x128xf32> to vector<2x8x128xf32>
    %222 = arith.mulf %219, %221 : vector<2x8x128xf32>
    %223 = vector.shape_cast %218 : vector<1x128xf32> to vector<1x1x128xf32>
    %224 = vector.broadcast %223 : vector<1x1x128xf32> to vector<2x8x128xf32>
    %225 = arith.mulf %222, %224 : vector<2x8x128xf32>
    %cst_61 = arith.constant dense<0.000000e+00> : vector<2x8xf32>
    %226 = vector.multi_reduction <add>, %225, %cst_61 [2] : vector<2x8x128xf32> to vector<2x8xf32>
    %cst_62 = arith.constant dense<0xFF800000> : vector<2xf32>
    %227 = vector.multi_reduction <maximumf>, %226, %cst_62 [1] : vector<2x8xf32> to vector<2xf32>
    %228 = vector.shape_cast %227 : vector<2xf32> to vector<2x1xf32>
    %229 = vector.broadcast %228 : vector<2x1xf32> to vector<2x8xf32>
    %230 = arith.subf %226, %229 : vector<2x8xf32>
    %231 = math.exp %230 : vector<2x8xf32>
    %cst_63 = arith.constant dense<0.000000e+00> : vector<2xf32>
    %232 = vector.multi_reduction <add>, %231, %cst_63 [1] : vector<2x8xf32> to vector<2xf32>
    %233 = vector.shape_cast %232 : vector<2xf32> to vector<2x1xf32>
    %234 = vector.broadcast %233 : vector<2x1xf32> to vector<2x8xf32>
    %235 = arith.divf %231, %234 : vector<2x8xf32>
    %236 = vector.shape_cast %235 : vector<2x8xf32> to vector<2x8x1xf32>
    %237 = vector.shape_cast %209 : vector<16x32xf32> to vector<2x8x32xf32>
    %238 = vector.broadcast %236 : vector<2x8x1xf32> to vector<2x8x32xf32>
    %239 = arith.mulf %238, %237 : vector<2x8x32xf32>
    %cst_64 = arith.constant dense<0.000000e+00> : vector<2x32xf32>
    %240 = vector.multi_reduction <add>, %239, %cst_64 [1] : vector<2x8x32xf32> to vector<2x32xf32>
    %c168 = arith.constant 168 : index
    %c0_65 = arith.constant 0 : index
    %241 = vector.load %arg4[%c168, %c0_65] : memref<752x128xf32, #tpu.memory_space<vmem>>, vector<128x128xf32>
    %cst_66 = arith.constant dense<0.000000e+00> : vector<2x128xf32>
    %242 = tpu.matmul %208, %241, %cst_66 {dimension_numbers = #tpu.dot_dimension_numbers<[1], [0], [0], [1], [0, 0, 1, 1], [], []>} : vector<2x128xf32>, vector<128x128xf32>, vector<2x128xf32> -> vector<2x128xf32>
    %c296 = arith.constant 296 : index
    %c0_67 = arith.constant 0 : index
    %243 = vector.load %arg4[%c296, %c0_67] : memref<752x128xf32, #tpu.memory_space<vmem>>, vector<1x128xf32>
    %244 = vector.broadcast %243 : vector<1x128xf32> to vector<2x128xf32>
    %245 = arith.addf %242, %244 : vector<2x128xf32>
    %cst_68 = arith.constant 0.000000e+00 : f32
    %246 = vector.broadcast %cst_68 : f32 to vector<2x128xf32>
    %247 = arith.maximumf %245, %246 : vector<2x128xf32>
    %c304 = arith.constant 304 : index
    %c0_69 = arith.constant 0 : index
    %248 = vector.load %arg4[%c304, %c0_69] : memref<752x128xf32, #tpu.memory_space<vmem>>, vector<32x128xf32>
    %cst_70 = arith.constant dense<0.000000e+00> : vector<2x128xf32>
    %249 = tpu.matmul %240, %248, %cst_70 {dimension_numbers = #tpu.dot_dimension_numbers<[1], [0], [0], [1], [0, 0, 1, 1], [], []>} : vector<2x32xf32>, vector<32x128xf32>, vector<2x128xf32> -> vector<2x128xf32>
    %c336 = arith.constant 336 : index
    %c0_71 = arith.constant 0 : index
    %250 = vector.load %arg4[%c336, %c0_71] : memref<752x128xf32, #tpu.memory_space<vmem>>, vector<1x128xf32>
    %251 = vector.broadcast %250 : vector<1x128xf32> to vector<2x128xf32>
    %252 = arith.addf %249, %251 : vector<2x128xf32>
    %cst_72 = arith.constant 0.000000e+00 : f32
    %253 = vector.broadcast %cst_72 : f32 to vector<2x128xf32>
    %254 = arith.maximumf %252, %253 : vector<2x128xf32>
    %255 = arith.mulf %247, %254 : vector<2x128xf32>
    %c344 = arith.constant 344 : index
    %c0_73 = arith.constant 0 : index
    %256 = vector.load %arg4[%c344, %c0_73] : memref<752x128xf32, #tpu.memory_space<vmem>>, vector<128x128xf32>
    %cst_74 = arith.constant dense<0.000000e+00> : vector<2x128xf32>
    %257 = tpu.matmul %255, %256, %cst_74 {dimension_numbers = #tpu.dot_dimension_numbers<[1], [0], [0], [1], [0, 0, 1, 1], [], []>} : vector<2x128xf32>, vector<128x128xf32>, vector<2x128xf32> -> vector<2x128xf32>
    %c472 = arith.constant 472 : index
    %c0_75 = arith.constant 0 : index
    %258 = vector.load %arg4[%c472, %c0_75] : memref<752x128xf32, #tpu.memory_space<vmem>>, vector<1x128xf32>
    %259 = vector.broadcast %258 : vector<1x128xf32> to vector<2x128xf32>
    %260 = arith.addf %257, %259 : vector<2x128xf32>
    %cst_76 = arith.constant 0.000000e+00 : f32
    %261 = vector.broadcast %cst_76 : f32 to vector<2x128xf32>
    %262 = arith.maximumf %260, %261 : vector<2x128xf32>
    %c480 = arith.constant 480 : index
    %c0_77 = arith.constant 0 : index
    %263 = vector.load %arg4[%c480, %c0_77] : memref<752x128xf32, #tpu.memory_space<vmem>>, vector<128x128xf32>
    %cst_78 = arith.constant dense<0.000000e+00> : vector<2x128xf32>
    %264 = tpu.matmul %262, %263, %cst_78 {dimension_numbers = #tpu.dot_dimension_numbers<[1], [0], [0], [1], [0, 0, 1, 1], [], []>} : vector<2x128xf32>, vector<128x128xf32>, vector<2x128xf32> -> vector<2x128xf32>
    %c608 = arith.constant 608 : index
    %c0_79 = arith.constant 0 : index
    %265 = vector.load %arg4[%c608, %c0_79] : memref<752x128xf32, #tpu.memory_space<vmem>>, vector<1x128xf32>
    %266 = vector.broadcast %265 : vector<1x128xf32> to vector<2x128xf32>
    %267 = arith.addf %264, %266 : vector<2x128xf32>
    %c64_80 = arith.constant 64 : index
    %c0_81 = arith.constant 0 : index
    %268 = vector.load %arg3[%c64_80, %c0_81] : memref<200x512xf32, #tpu.memory_space<vmem>>, vector<128x512xf32>
    %c192_82 = arith.constant 192 : index
    %c0_83 = arith.constant 0 : index
    %269 = vector.load %arg3[%c192_82, %c0_83] : memref<200x512xf32, #tpu.memory_space<vmem>>, vector<1x512xf32>
    %270 = vector.shape_cast %269 : vector<1x512xf32> to vector<1x512xf32>
    %271 = vector.broadcast %270 : vector<1x512xf32> to vector<2x512xf32>
    %cst_84 = arith.constant 0.000000e+00 : f32
    %272 = vector.broadcast %cst_84 : f32 to vector<2x128xf32>
    %c0_85 = arith.constant 0 : index
    %c0_86 = arith.constant 0 : index
    %273 = vector.load %arg7[%c0_85, %c0_86] : memref<12x512xf32, #tpu.memory_space<vmem>>, vector<2x512xf32>
    %cst_87 = arith.constant dense<0.000000e+00> : vector<2x512xf32>
    %274 = tpu.matmul %255, %268, %cst_87 {dimension_numbers = #tpu.dot_dimension_numbers<[1], [0], [0], [1], [0, 0, 1, 1], [], []>} : vector<2x128xf32>, vector<128x512xf32>, vector<2x512xf32> -> vector<2x512xf32>
    %275 = arith.addf %273, %274 : vector<2x512xf32>
    %276 = arith.addf %275, %271 : vector<2x512xf32>
    %277 = vector.extract_strided_slice %276 {offsets = [0, 0], sizes = [2, 256], strides = [1, 1]} : vector<2x512xf32> to vector<2x256xf32>
    %278 = arith.negf %277 : vector<2x256xf32>
    %279 = math.exp %278 : vector<2x256xf32>
    %cst_88 = arith.constant 1.000000e+00 : f32
    %280 = vector.broadcast %cst_88 : f32 to vector<2x256xf32>
    %281 = arith.addf %280, %279 : vector<2x256xf32>
    %282 = arith.divf %280, %281 : vector<2x256xf32>
    %283 = vector.extract_strided_slice %282 {offsets = [0, 0], sizes = [2, 128], strides = [1, 1]} : vector<2x256xf32> to vector<2x128xf32>
    %284 = vector.extract_strided_slice %282 {offsets = [0, 128], sizes = [2, 128], strides = [1, 1]} : vector<2x256xf32> to vector<2x128xf32>
    %285 = vector.extract_strided_slice %276 {offsets = [0, 256], sizes = [2, 128], strides = [1, 1]} : vector<2x512xf32> to vector<2x128xf32>
    %286 = math.tanh %285 : vector<2x128xf32>
    %287 = vector.extract_strided_slice %276 {offsets = [0, 384], sizes = [2, 128], strides = [1, 1]} : vector<2x512xf32> to vector<2x128xf32>
    %288 = arith.negf %287 : vector<2x128xf32>
    %289 = math.exp %288 : vector<2x128xf32>
    %cst_89 = arith.constant 1.000000e+00 : f32
    %290 = vector.broadcast %cst_89 : f32 to vector<2x128xf32>
    %291 = arith.addf %290, %289 : vector<2x128xf32>
    %292 = arith.divf %290, %291 : vector<2x128xf32>
    %293 = arith.mulf %284, %272 : vector<2x128xf32>
    %294 = arith.mulf %283, %286 : vector<2x128xf32>
    %295 = arith.addf %293, %294 : vector<2x128xf32>
    %296 = math.tanh %295 : vector<2x128xf32>
    %297 = arith.mulf %292, %296 : vector<2x128xf32>
    %c0_90 = arith.constant 0 : index
    %c0_91 = arith.constant 0 : index
    %298 = vector.load %arg8[%c0_90, %c0_91] : memref<12x128xf32, #tpu.memory_space<vmem>>, vector<2x128xf32>
    tpu.vector_store %arg8[%c0_90, %c0_91], %297 {strides = array<i32>} : memref<12x128xf32, #tpu.memory_space<vmem>>, vector<2x128xf32>,
    %c2_92 = arith.constant 2 : index
    %c0_93 = arith.constant 0 : index
    %299 = vector.load %arg7[%c2_92, %c0_93] : memref<12x512xf32, #tpu.memory_space<vmem>>, vector<2x512xf32>
    %cst_94 = arith.constant dense<0.000000e+00> : vector<2x512xf32>
    %300 = tpu.matmul %297, %268, %cst_94 {dimension_numbers = #tpu.dot_dimension_numbers<[1], [0], [0], [1], [0, 0, 1, 1], [], []>} : vector<2x128xf32>, vector<128x512xf32>, vector<2x512xf32> -> vector<2x512xf32>
    %301 = arith.addf %299, %300 : vector<2x512xf32>
    %302 = arith.addf %301, %271 : vector<2x512xf32>
    %303 = vector.extract_strided_slice %302 {offsets = [0, 0], sizes = [2, 256], strides = [1, 1]} : vector<2x512xf32> to vector<2x256xf32>
    %304 = arith.negf %303 : vector<2x256xf32>
    %305 = math.exp %304 : vector<2x256xf32>
    %cst_95 = arith.constant 1.000000e+00 : f32
    %306 = vector.broadcast %cst_95 : f32 to vector<2x256xf32>
    %307 = arith.addf %306, %305 : vector<2x256xf32>
    %308 = arith.divf %306, %307 : vector<2x256xf32>
    %309 = vector.extract_strided_slice %308 {offsets = [0, 0], sizes = [2, 128], strides = [1, 1]} : vector<2x256xf32> to vector<2x128xf32>
    %310 = vector.extract_strided_slice %308 {offsets = [0, 128], sizes = [2, 128], strides = [1, 1]} : vector<2x256xf32> to vector<2x128xf32>
    %311 = vector.extract_strided_slice %302 {offsets = [0, 256], sizes = [2, 128], strides = [1, 1]} : vector<2x512xf32> to vector<2x128xf32>
    %312 = math.tanh %311 : vector<2x128xf32>
    %313 = vector.extract_strided_slice %302 {offsets = [0, 384], sizes = [2, 128], strides = [1, 1]} : vector<2x512xf32> to vector<2x128xf32>
    %314 = arith.negf %313 : vector<2x128xf32>
    %315 = math.exp %314 : vector<2x128xf32>
    %cst_96 = arith.constant 1.000000e+00 : f32
    %316 = vector.broadcast %cst_96 : f32 to vector<2x128xf32>
    %317 = arith.addf %316, %315 : vector<2x128xf32>
    %318 = arith.divf %316, %317 : vector<2x128xf32>
    %319 = arith.mulf %310, %295 : vector<2x128xf32>
    %320 = arith.mulf %309, %312 : vector<2x128xf32>
    %321 = arith.addf %319, %320 : vector<2x128xf32>
    %322 = math.tanh %321 : vector<2x128xf32>
    %323 = arith.mulf %318, %322 : vector<2x128xf32>
    %c2_97 = arith.constant 2 : index
    %c0_98 = arith.constant 0 : index
    %324 = vector.load %arg8[%c2_97, %c0_98] : memref<12x128xf32, #tpu.memory_space<vmem>>, vector<2x128xf32>
    tpu.vector_store %arg8[%c2_97, %c0_98], %323 {strides = array<i32>} : memref<12x128xf32, #tpu.memory_space<vmem>>, vector<2x128xf32>,
    %c4_99 = arith.constant 4 : index
    %c0_100 = arith.constant 0 : index
    %325 = vector.load %arg7[%c4_99, %c0_100] : memref<12x512xf32, #tpu.memory_space<vmem>>, vector<2x512xf32>
    %cst_101 = arith.constant dense<0.000000e+00> : vector<2x512xf32>
    %326 = tpu.matmul %323, %268, %cst_101 {dimension_numbers = #tpu.dot_dimension_numbers<[1], [0], [0], [1], [0, 0, 1, 1], [], []>} : vector<2x128xf32>, vector<128x512xf32>, vector<2x512xf32> -> vector<2x512xf32>
    %327 = arith.addf %325, %326 : vector<2x512xf32>
    %328 = arith.addf %327, %271 : vector<2x512xf32>
    %329 = vector.extract_strided_slice %328 {offsets = [0, 0], sizes = [2, 256], strides = [1, 1]} : vector<2x512xf32> to vector<2x256xf32>
    %330 = arith.negf %329 : vector<2x256xf32>
    %331 = math.exp %330 : vector<2x256xf32>
    %cst_102 = arith.constant 1.000000e+00 : f32
    %332 = vector.broadcast %cst_102 : f32 to vector<2x256xf32>
    %333 = arith.addf %332, %331 : vector<2x256xf32>
    %334 = arith.divf %332, %333 : vector<2x256xf32>
    %335 = vector.extract_strided_slice %334 {offsets = [0, 0], sizes = [2, 128], strides = [1, 1]} : vector<2x256xf32> to vector<2x128xf32>
    %336 = vector.extract_strided_slice %334 {offsets = [0, 128], sizes = [2, 128], strides = [1, 1]} : vector<2x256xf32> to vector<2x128xf32>
    %337 = vector.extract_strided_slice %328 {offsets = [0, 256], sizes = [2, 128], strides = [1, 1]} : vector<2x512xf32> to vector<2x128xf32>
    %338 = math.tanh %337 : vector<2x128xf32>
    %339 = vector.extract_strided_slice %328 {offsets = [0, 384], sizes = [2, 128], strides = [1, 1]} : vector<2x512xf32> to vector<2x128xf32>
    %340 = arith.negf %339 : vector<2x128xf32>
    %341 = math.exp %340 : vector<2x128xf32>
    %cst_103 = arith.constant 1.000000e+00 : f32
    %342 = vector.broadcast %cst_103 : f32 to vector<2x128xf32>
    %343 = arith.addf %342, %341 : vector<2x128xf32>
    %344 = arith.divf %342, %343 : vector<2x128xf32>
    %345 = arith.mulf %336, %321 : vector<2x128xf32>
    %346 = arith.mulf %335, %338 : vector<2x128xf32>
    %347 = arith.addf %345, %346 : vector<2x128xf32>
    %348 = math.tanh %347 : vector<2x128xf32>
    %349 = arith.mulf %344, %348 : vector<2x128xf32>
    %c4_104 = arith.constant 4 : index
    %c0_105 = arith.constant 0 : index
    %350 = vector.load %arg8[%c4_104, %c0_105] : memref<12x128xf32, #tpu.memory_space<vmem>>, vector<2x128xf32>
    tpu.vector_store %arg8[%c4_104, %c0_105], %349 {strides = array<i32>} : memref<12x128xf32, #tpu.memory_space<vmem>>, vector<2x128xf32>,
    %c6_106 = arith.constant 6 : index
    %c0_107 = arith.constant 0 : index
    %351 = vector.load %arg7[%c6_106, %c0_107] : memref<12x512xf32, #tpu.memory_space<vmem>>, vector<2x512xf32>
    %cst_108 = arith.constant dense<0.000000e+00> : vector<2x512xf32>
    %352 = tpu.matmul %349, %268, %cst_108 {dimension_numbers = #tpu.dot_dimension_numbers<[1], [0], [0], [1], [0, 0, 1, 1], [], []>} : vector<2x128xf32>, vector<128x512xf32>, vector<2x512xf32> -> vector<2x512xf32>
    %353 = arith.addf %351, %352 : vector<2x512xf32>
    %354 = arith.addf %353, %271 : vector<2x512xf32>
    %355 = vector.extract_strided_slice %354 {offsets = [0, 0], sizes = [2, 256], strides = [1, 1]} : vector<2x512xf32> to vector<2x256xf32>
    %356 = arith.negf %355 : vector<2x256xf32>
    %357 = math.exp %356 : vector<2x256xf32>
    %cst_109 = arith.constant 1.000000e+00 : f32
    %358 = vector.broadcast %cst_109 : f32 to vector<2x256xf32>
    %359 = arith.addf %358, %357 : vector<2x256xf32>
    %360 = arith.divf %358, %359 : vector<2x256xf32>
    %361 = vector.extract_strided_slice %360 {offsets = [0, 0], sizes = [2, 128], strides = [1, 1]} : vector<2x256xf32> to vector<2x128xf32>
    %362 = vector.extract_strided_slice %360 {offsets = [0, 128], sizes = [2, 128], strides = [1, 1]} : vector<2x256xf32> to vector<2x128xf32>
    %363 = vector.extract_strided_slice %354 {offsets = [0, 256], sizes = [2, 128], strides = [1, 1]} : vector<2x512xf32> to vector<2x128xf32>
    %364 = math.tanh %363 : vector<2x128xf32>
    %365 = vector.extract_strided_slice %354 {offsets = [0, 384], sizes = [2, 128], strides = [1, 1]} : vector<2x512xf32> to vector<2x128xf32>
    %366 = arith.negf %365 : vector<2x128xf32>
    %367 = math.exp %366 : vector<2x128xf32>
    %cst_110 = arith.constant 1.000000e+00 : f32
    %368 = vector.broadcast %cst_110 : f32 to vector<2x128xf32>
    %369 = arith.addf %368, %367 : vector<2x128xf32>
    %370 = arith.divf %368, %369 : vector<2x128xf32>
    %371 = arith.mulf %362, %347 : vector<2x128xf32>
    %372 = arith.mulf %361, %364 : vector<2x128xf32>
    %373 = arith.addf %371, %372 : vector<2x128xf32>
    %374 = math.tanh %373 : vector<2x128xf32>
    %375 = arith.mulf %370, %374 : vector<2x128xf32>
    %c6_111 = arith.constant 6 : index
    %c0_112 = arith.constant 0 : index
    %376 = vector.load %arg8[%c6_111, %c0_112] : memref<12x128xf32, #tpu.memory_space<vmem>>, vector<2x128xf32>
    tpu.vector_store %arg8[%c6_111, %c0_112], %375 {strides = array<i32>} : memref<12x128xf32, #tpu.memory_space<vmem>>, vector<2x128xf32>,
    %c8_113 = arith.constant 8 : index
    %c0_114 = arith.constant 0 : index
    %377 = vector.load %arg7[%c8_113, %c0_114] : memref<12x512xf32, #tpu.memory_space<vmem>>, vector<2x512xf32>
    %cst_115 = arith.constant dense<0.000000e+00> : vector<2x512xf32>
    %378 = tpu.matmul %375, %268, %cst_115 {dimension_numbers = #tpu.dot_dimension_numbers<[1], [0], [0], [1], [0, 0, 1, 1], [], []>} : vector<2x128xf32>, vector<128x512xf32>, vector<2x512xf32> -> vector<2x512xf32>
    %379 = arith.addf %377, %378 : vector<2x512xf32>
    %380 = arith.addf %379, %271 : vector<2x512xf32>
    %381 = vector.extract_strided_slice %380 {offsets = [0, 0], sizes = [2, 256], strides = [1, 1]} : vector<2x512xf32> to vector<2x256xf32>
    %382 = arith.negf %381 : vector<2x256xf32>
    %383 = math.exp %382 : vector<2x256xf32>
    %cst_116 = arith.constant 1.000000e+00 : f32
    %384 = vector.broadcast %cst_116 : f32 to vector<2x256xf32>
    %385 = arith.addf %384, %383 : vector<2x256xf32>
    %386 = arith.divf %384, %385 : vector<2x256xf32>
    %387 = vector.extract_strided_slice %386 {offsets = [0, 0], sizes = [2, 128], strides = [1, 1]} : vector<2x256xf32> to vector<2x128xf32>
    %388 = vector.extract_strided_slice %386 {offsets = [0, 128], sizes = [2, 128], strides = [1, 1]} : vector<2x256xf32> to vector<2x128xf32>
    %389 = vector.extract_strided_slice %380 {offsets = [0, 256], sizes = [2, 128], strides = [1, 1]} : vector<2x512xf32> to vector<2x128xf32>
    %390 = math.tanh %389 : vector<2x128xf32>
    %391 = vector.extract_strided_slice %380 {offsets = [0, 384], sizes = [2, 128], strides = [1, 1]} : vector<2x512xf32> to vector<2x128xf32>
    %392 = arith.negf %391 : vector<2x128xf32>
    %393 = math.exp %392 : vector<2x128xf32>
    %cst_117 = arith.constant 1.000000e+00 : f32
    %394 = vector.broadcast %cst_117 : f32 to vector<2x128xf32>
    %395 = arith.addf %394, %393 : vector<2x128xf32>
    %396 = arith.divf %394, %395 : vector<2x128xf32>
    %397 = arith.mulf %388, %373 : vector<2x128xf32>
    %398 = arith.mulf %387, %390 : vector<2x128xf32>
    %399 = arith.addf %397, %398 : vector<2x128xf32>
    %400 = math.tanh %399 : vector<2x128xf32>
    %401 = arith.mulf %396, %400 : vector<2x128xf32>
    %c8_118 = arith.constant 8 : index
    %c0_119 = arith.constant 0 : index
    %402 = vector.load %arg8[%c8_118, %c0_119] : memref<12x128xf32, #tpu.memory_space<vmem>>, vector<2x128xf32>
    tpu.vector_store %arg8[%c8_118, %c0_119], %401 {strides = array<i32>} : memref<12x128xf32, #tpu.memory_space<vmem>>, vector<2x128xf32>,
    %c10_120 = arith.constant 10 : index
    %c0_121 = arith.constant 0 : index
    %403 = vector.load %arg7[%c10_120, %c0_121] : memref<12x512xf32, #tpu.memory_space<vmem>>, vector<2x512xf32>
    %cst_122 = arith.constant dense<0.000000e+00> : vector<2x512xf32>
    %404 = tpu.matmul %401, %268, %cst_122 {dimension_numbers = #tpu.dot_dimension_numbers<[1], [0], [0], [1], [0, 0, 1, 1], [], []>} : vector<2x128xf32>, vector<128x512xf32>, vector<2x512xf32> -> vector<2x512xf32>
    %405 = arith.addf %403, %404 : vector<2x512xf32>
    %406 = arith.addf %405, %271 : vector<2x512xf32>
    %407 = vector.extract_strided_slice %406 {offsets = [0, 0], sizes = [2, 256], strides = [1, 1]} : vector<2x512xf32> to vector<2x256xf32>
    %408 = arith.negf %407 : vector<2x256xf32>
    %409 = math.exp %408 : vector<2x256xf32>
    %cst_123 = arith.constant 1.000000e+00 : f32
    %410 = vector.broadcast %cst_123 : f32 to vector<2x256xf32>
    %411 = arith.addf %410, %409 : vector<2x256xf32>
    %412 = arith.divf %410, %411 : vector<2x256xf32>
    %413 = vector.extract_strided_slice %412 {offsets = [0, 0], sizes = [2, 128], strides = [1, 1]} : vector<2x256xf32> to vector<2x128xf32>
    %414 = vector.extract_strided_slice %412 {offsets = [0, 128], sizes = [2, 128], strides = [1, 1]} : vector<2x256xf32> to vector<2x128xf32>
    %415 = vector.extract_strided_slice %406 {offsets = [0, 256], sizes = [2, 128], strides = [1, 1]} : vector<2x512xf32> to vector<2x128xf32>
    %416 = math.tanh %415 : vector<2x128xf32>
    %417 = vector.extract_strided_slice %406 {offsets = [0, 384], sizes = [2, 128], strides = [1, 1]} : vector<2x512xf32> to vector<2x128xf32>
    %418 = arith.negf %417 : vector<2x128xf32>
    %419 = math.exp %418 : vector<2x128xf32>
    %cst_124 = arith.constant 1.000000e+00 : f32
    %420 = vector.broadcast %cst_124 : f32 to vector<2x128xf32>
    %421 = arith.addf %420, %419 : vector<2x128xf32>
    %422 = arith.divf %420, %421 : vector<2x128xf32>
    %423 = arith.mulf %414, %399 : vector<2x128xf32>
    %424 = arith.mulf %413, %416 : vector<2x128xf32>
    %425 = arith.addf %423, %424 : vector<2x128xf32>
    %426 = math.tanh %425 : vector<2x128xf32>
    %427 = arith.mulf %422, %426 : vector<2x128xf32>
    %c10_125 = arith.constant 10 : index
    %c0_126 = arith.constant 0 : index
    %428 = vector.load %arg8[%c10_125, %c0_126] : memref<12x128xf32, #tpu.memory_space<vmem>>, vector<2x128xf32>
    tpu.vector_store %arg8[%c10_125, %c0_126], %427 {strides = array<i32>} : memref<12x128xf32, #tpu.memory_space<vmem>>, vector<2x128xf32>,
    %c0_127 = arith.constant 0 : index
    %c0_128 = arith.constant 0 : index
    %429 = vector.load %arg8[%c0_127, %c0_128] : memref<12x128xf32, #tpu.memory_space<vmem>>, vector<12x128xf32>
    %c616 = arith.constant 616 : index
    %c0_129 = arith.constant 0 : index
    %430 = vector.load %arg4[%c616, %c0_129] : memref<752x128xf32, #tpu.memory_space<vmem>>, vector<128x128xf32>
    %cst_130 = arith.constant dense<0.000000e+00> : vector<12x128xf32>
    %431 = tpu.matmul %429, %430, %cst_130 {dimension_numbers = #tpu.dot_dimension_numbers<[1], [0], [0], [1], [0, 0, 1, 1], [], []>} : vector<12x128xf32>, vector<128x128xf32>, vector<12x128xf32> -> vector<12x128xf32>
    %c744 = arith.constant 744 : index
    %c0_131 = arith.constant 0 : index
    %432 = vector.load %arg4[%c744, %c0_131] : memref<752x128xf32, #tpu.memory_space<vmem>>, vector<1x128xf32>
    %433 = vector.broadcast %432 : vector<1x128xf32> to vector<12x128xf32>
    %434 = arith.addf %431, %433 : vector<12x128xf32>
    %c0_132 = arith.constant 0 : index
    %c0_133 = arith.constant 0 : index
    %435 = vector.load %arg5[%c0_132, %c0_133] : memref<14x128xf32, #tpu.memory_space<vmem>>, vector<12x128xf32>
    tpu.vector_store %arg5[%c0_132, %c0_133], %434 {strides = array<i32>} : memref<14x128xf32, #tpu.memory_space<vmem>>, vector<12x128xf32>,
    %c12_134 = arith.constant 12 : index
    %c0_135 = arith.constant 0 : index
    %436 = vector.load %arg5[%c12_134, %c0_135] : memref<14x128xf32, #tpu.memory_space<vmem>>, vector<2x128xf32>
    tpu.vector_store %arg5[%c12_134, %c0_135], %267 {strides = array<i32>} : memref<14x128xf32, #tpu.memory_space<vmem>>, vector<2x128xf32>,
    return
  }
}

</mosaic_0001>

<llo_original>
// kernel: vqae_forward.1
$region0: #{vqae_forward.1}
  #allocation0 [shape = 'u32[]', space=smem, size = 0x4, offset = 0x4, fixed_abs, tag = 'smem constant byte address 0x4 - core index']
  #allocation1 [shape = 'u32[72,128]{1,0:T(1,128)}', space=vmem, size = 0x9000, scoped, tag = 'internal scratch']
  #allocation2 [shape = 'f32[16,384]{1,0:T(8,128)}', space=vmem, size = 0x6000, scoped, tag = 'scratch operand']
  #allocation3 [shape = 'f32[12,512]{1,0:T(8,128)}', space=vmem, size = 0x8000, scoped, tag = 'scratch operand']
  #allocation4 [shape = 'f32[12,128]{1,0:T(8,128)}', space=vmem, size = 0x2000, scoped, tag = 'scratch operand']
  %s0 = inlined_call_operand.vmem [shape: s32[28,1], index: 0, kind: input, shape index: {}]
  %s1 = inlined_call_operand.vmem [shape: f32[16,32], index: 1, kind: input, shape index: {}]
  %s2 = inlined_call_operand.hbm [shape: f32[200,384], index: 2, kind: input, shape index: {}]
  %s3 = inlined_call_operand.hbm [shape: f32[200,512], index: 3, kind: input, shape index: {}]
  %s4 = inlined_call_operand.hbm [shape: f32[752,128], index: 4, kind: input, shape index: {}]
  %s5 = inlined_call_operand.vmem [shape: f32[14,128], index: 5, kind: output, shape index: {}]
  %s6 = sld [smem:[#allocation0]]
  $region42: #{vqae_forward.1} parent=0
    _
  %s8 = ssub.s32 1, %s6
  %s9 = scalar_select 0, %s8, %s6
  $region1: #{vqae_forward.1} parent=0
    #allocation5 [shape = 'u8[307200]{0}', space=vmem, size = 0x4b000, scoped, tag = 'input window, operand 2, single buffered']
    #allocation6 [shape = 's32[1]{0}', space=sflag, size = 0x4, scoped, tag = 'scoped memory for vqae_forward.1']
    #allocation7 [shape = 'u8[409600]{0}', space=vmem, size = 0x64000, scoped, tag = 'input window, operand 3, single buffered']
    #allocation8 [shape = 's32[1]{0}', space=sflag, size = 0x4, scoped, tag = 'scoped memory for vqae_forward.1']
    #allocation9 [shape = 'u8[385024]{0}', space=vmem, size = 0x5e000, scoped, tag = 'input window, operand 4, single buffered']
    %10 = vsyncpa [#allocation6], 0
    %11 = vsyncpa [#allocation8], 0
    // Predicated region
    $region2: #{vqae_forward.1} parent=1 // pred_check
      _
    $region3: #{vqae_forward.1} parent=1 // pred_check_branch
      %13 = sbr.rel (0) target = $region5
    $region4: #{vqae_forward.1} parent=1 // pred_region
      _
    $region5: #{vqae_forward.1} parent=1 // pred_fallthru
      _
    // Predicated region
    $region6: #{vqae_forward.1} parent=1 // pred_check
      _
    $region7: #{vqae_forward.1} parent=1 // pred_check_branch
      %15 = sbr.rel (0) target = $region9
    $region8: #{vqae_forward.1} parent=1 // pred_region
      _
    $region9: #{vqae_forward.1} parent=1 // pred_fallthru
      _
    // Predicated region
    $region10: #{vqae_forward.1} parent=1 // pred_check
      _
    $region11: #{vqae_forward.1} parent=1 // pred_check_branch
      %17 = sbr.rel (0) target = $region13
    $region12: #{vqae_forward.1} parent=1 // pred_region
      %19 = vsyncadd [#allocation6], 0
      %s20 = sshll.u32 %s2, 4
      %s21 = int_to_ptr.hbm [resolvable:$true] %s20
      %s22 = sshll.u32 [#allocation5], 4
      %s23 = int_to_ptr.vmem [resolvable:$true] %s22
      %28 = dma.hbm_to_vmem [thread:$0]  %s21, 9600, %s23, [#allocation6], 384, 384, 24
    $region13: #{vqae_forward.1} parent=1 // pred_fallthru
      _
    // Predicated region
    $region14: #{vqae_forward.1} parent=1 // pred_check
      _
    $region15: #{vqae_forward.1} parent=1 // pred_check_branch
      %30 = sbr.rel (0) target = $region17
    $region16: #{vqae_forward.1} parent=1 // pred_region
      %32 = vsyncadd [#allocation8], 0
      %s33 = sshll.u32 %s3, 4
      %s34 = int_to_ptr.hbm [resolvable:$true] %s33
      %s35 = sshll.u32 [#allocation7], 4
      %s36 = int_to_ptr.vmem [resolvable:$true] %s35
      %41 = dma.hbm_to_vmem [thread:$0]  %s34, 12800, %s36, [#allocation8], 512, 512, 32
    $region17: #{vqae_forward.1} parent=1 // pred_fallthru
      _
    // Predicated region
    $region18: #{vqae_forward.1} parent=1 // pred_check
      _
    $region19: #{vqae_forward.1} parent=1 // pred_check_branch
      %43 = sbr.rel (0) target = $region21
    $region20: #{vqae_forward.1} parent=1 // pred_region
      %45 = vsyncadd [#allocation8], 0
      %s46 = sshll.u32 %s4, 4
      %s47 = int_to_ptr.hbm [resolvable:$true] %s46
      %s48 = sshll.u32 [#allocation9], 4
      %s49 = int_to_ptr.vmem [resolvable:$true] %s48
      %54 = dma.hbm_to_vmem [thread:$0]  %s47, 12032, %s49, [#allocation8], 128, 128, 8
    $region21: #{vqae_forward.1} parent=1 // pred_fallthru
      _
    // Predicated region
    $region22: #{vqae_forward.1} parent=1 // pred_check
      _
    $region23: #{vqae_forward.1} parent=1 // pred_check_branch
      %56 = sbr.rel (0) target = $region25
    $region24: #{vqae_forward.1} parent=1 // pred_region
      %58 = dma.done [#allocation6], 9600
    $region25: #{vqae_forward.1} parent=1 // pred_fallthru
      _
    // Predicated region
    $region26: #{vqae_forward.1} parent=1 // pred_check
      _
    $region27: #{vqae_forward.1} parent=1 // pred_check_branch
      %60 = sbr.rel (0) target = $region29
    $region28: #{vqae_forward.1} parent=1 // pred_region
      %62 = dma.done [#allocation8], 12800
    $region29: #{vqae_forward.1} parent=1 // pred_fallthru
      _
    // Predicated region
    $region30: #{vqae_forward.1} parent=1 // pred_check
      _
    $region31: #{vqae_forward.1} parent=1 // pred_check_branch
      %64 = sbr.rel (0) target = $region33
    $region32: #{vqae_forward.1} parent=1 // pred_region
      %66 = dma.done [#allocation8], 12032
    $region33: #{vqae_forward.1} parent=1 // pred_fallthru
      _
    %v67 = vld [vmem:[%s0] sm:$0xff]
    %v68 = vld [vmem:[%s0 + $0x8] sm:$0xff]
    %v69 = vld [vmem:[%s0 + $0x10] sm:$0xff]
    %v70 = vld [vmem:[%s0 + $0x18] sm:$0xf]
    %v71 = vlaneseq
    %v72 = vand.u32 %v71, 127
    %73 = vset.pattern.permute.xlu0 0
    %74 = vperm.xlu0 %73, %v67
    %v75 = vpop.permute.xlu0 %74
    %76 = vset.pattern.permute.xlu0 0
    %77 = vperm.xlu0 %76, %v68
    %v78 = vpop.permute.xlu0 %77
    %vm79 = vcmp.eq.s32.totalorder %v72, %v75
    %vm80 = vcmp.eq.s32.totalorder %v72, %v78
    %v81 = vsel %vm79, 1.0, 0.0
    %v82 = vsel %vm80, 1.0, 0.0
    %v83 = vld [vmem:[#allocation5] sm:$0xff]
    %v84 = vld [vmem:[#allocation5 + $0x8] sm:$0xff]
    %v85 = vld [vmem:[#allocation5 + $0x10] sm:$0xff]
    %v86 = vld [vmem:[#allocation5 + $0x18] sm:$0xff]
    %v87 = vld [vmem:[#allocation5 + $0x20] sm:$0xff]
    %v88 = vld [vmem:[#allocation5 + $0x28] sm:$0xff]
    %v89 = vld [vmem:[#allocation5 + $0x30] sm:$0xff]
    %v90 = vld [vmem:[#allocation5 + $0x38] sm:$0xff]
    %v91 = vld [vmem:[#allocation5 + $0x40] sm:$0xff]
    %v92 = vld [vmem:[#allocation5 + $0x48] sm:$0xff]
    %v93 = vld [vmem:[#allocation5 + $0x50] sm:$0xff]
    %v94 = vld [vmem:[#allocation5 + $0x58] sm:$0xff]
    %v95 = vld [vmem:[#allocation5 + $0x60] sm:$0xff]
    %v96 = vld [vmem:[#allocation5 + $0x68] sm:$0xff]
    %v97 = vld [vmem:[#allocation5 + $0x70] sm:$0xff]
    %v98 = vld [vmem:[#allocation5 + $0x78] sm:$0xff]
    %v99 = vld [vmem:[#allocation5 + $0x80] sm:$0xff]
    %v100 = vld [vmem:[#allocation5 + $0x88] sm:$0xff]
    %v101 = vld [vmem:[#allocation5 + $0x90] sm:$0xff]
    %v102 = vld [vmem:[#allocation5 + $0x98] sm:$0xff]
    %v103 = vld [vmem:[#allocation5 + $0xa0] sm:$0xff]
    %v104 = vld [vmem:[#allocation5 + $0xa8] sm:$0xff]
    %v105 = vld [vmem:[#allocation5 + $0xb0] sm:$0xff]
    %v106 = vld [vmem:[#allocation5 + $0xb8] sm:$0xff]
    %vm107 = vcmask 523264
    %v109 = vsel %vm107, %v81, 0
    %v112 = vsel %vm107, %v82, 0
    %114 = vmatpush.msra.mxu0 0.0
    %115 = vmatpush.msra.mxu0 0.0
    %116 = vmatpush.msra.mxu0 0.0
    %117 = vmatpush.msra.mxu0 0.0
    %118 = vmatpush.msra.mxu0 0.0
    %119 = vmatpush.msra.mxu0 0.0
    %120 = vmatpush.msra.mxu0 0.0
    %121 = vmatpush.msra.mxu0 0.0
    %122 = vmatpush.msra.mxu0 %v104
    %123 = vmatpush.msra.mxu0 %v101
    %124 = vmatpush.msra.mxu0 %v98
    %125 = vmatpush.msra.mxu0 %v95
    %126 = vmatpush.msra.mxu0 %v92
    %127 = vmatpush.msra.mxu0 %v89
    %128 = vmatpush.msra.mxu0 %v86
    %129 = vmatpush.msra.mxu0 %v83
    %130 = vmatmul.f32.gmra.mxu0 %v109
    %v131 = vpop.f32.mrf.mxu0
    %v132 = vadd.f32 0.0, %v131
    %133 = vmatmul.f32.gmra.mxu0 %v112
    %v134 = vpop.f32.mrf.mxu0
    %v135 = vadd.f32 0.0, %v134
    %136 = vdwg.mxu0
    %137 = vmatpush.msra.mxu0 0.0
    %138 = vmatpush.msra.mxu0 0.0
    %139 = vmatpush.msra.mxu0 0.0
    %140 = vmatpush.msra.mxu0 0.0
    %141 = vmatpush.msra.mxu0 0.0
    %142 = vmatpush.msra.mxu0 0.0
    %143 = vmatpush.msra.mxu0 0.0
    %144 = vmatpush.msra.mxu0 0.0
    %145 = vmatpush.msra.mxu0 %v105
    %146 = vmatpush.msra.mxu0 %v102
    %147 = vmatpush.msra.mxu0 %v99
    %148 = vmatpush.msra.mxu0 %v96
    %149 = vmatpush.msra.mxu0 %v93
    %150 = vmatpush.msra.mxu0 %v90
    %151 = vmatpush.msra.mxu0 %v87
    %152 = vmatpush.msra.mxu0 %v84
    %153 = vmatmul.f32.gmra.mxu0 %v109
    %v154 = vpop.f32.mrf.mxu0
    %v155 = vadd.f32 0.0, %v154
    %156 = vmatmul.f32.gmra.mxu0 %v112
    %v157 = vpop.f32.mrf.mxu0
    %v158 = vadd.f32 0.0, %v157
    %159 = vdwg.mxu0
    %160 = vmatpush.msra.mxu0 0.0
    %161 = vmatpush.msra.mxu0 0.0
    %162 = vmatpush.msra.mxu0 0.0
    %163 = vmatpush.msra.mxu0 0.0
    %164 = vmatpush.msra.mxu0 0.0
    %165 = vmatpush.msra.mxu0 0.0
    %166 = vmatpush.msra.mxu0 0.0
    %167 = vmatpush.msra.mxu0 0.0
    %168 = vmatpush.msra.mxu0 %v106
    %169 = vmatpush.msra.mxu0 %v103
    %170 = vmatpush.msra.mxu0 %v100
    %171 = vmatpush.msra.mxu0 %v97
    %172 = vmatpush.msra.mxu0 %v94
    %173 = vmatpush.msra.mxu0 %v91
    %174 = vmatpush.msra.mxu0 %v88
    %175 = vmatpush.msra.mxu0 %v85
    %176 = vmatmul.f32.gmra.mxu0 %v109
    %v177 = vpop.f32.mrf.mxu0
    %v178 = vadd.f32 0.0, %v177
    %179 = vmatmul.f32.gmra.mxu0 %v112
    %v180 = vpop.f32.mrf.mxu0
    %v181 = vadd.f32 0.0, %v180
    %182 = vdwg.mxu0
    %183 = vst [vmem:[#allocation2] sm:$0xff] %v132
    %184 = vst [vmem:[#allocation2 + $0x8] sm:$0xff] %v155
    %185 = vst [vmem:[#allocation2 + $0x10] sm:$0xff] %v178
    %186 = vst [vmem:[#allocation2 + $0x18] sm:$0xff] %v135
    %187 = vst [vmem:[#allocation2 + $0x20] sm:$0xff] %v158
    %188 = vst [vmem:[#allocation2 + $0x28] sm:$0xff] %v181
    %189 = vset.pattern.permute.xlu0 0
    %190 = vperm.xlu0 %189, %v69
    %v191 = vpop.permute.xlu0 %190
    %192 = vset.pattern.permute.xlu0 0
    %193 = vperm.xlu0 %192, %v70
    %v194 = vpop.permute.xlu0 %193
    %vm195 = vcmp.eq.s32.totalorder %v72, %v191
    %vm196 = vcmp.eq.s32.totalorder %v72, %v194
    %v197 = vsel %vm195, 1.0, 0.0
    %v198 = vsel %vm196, 1.0, 0.0
    %v199 = vld [vmem:[#allocation7] sm:$0xff]
    %v200 = vld [vmem:[#allocation7 + $0x8] sm:$0xff]
    %v201 = vld [vmem:[#allocation7 + $0x10] sm:$0xff]
    %v202 = vld [vmem:[#allocation7 + $0x18] sm:$0xff]
    %v203 = vld [vmem:[#allocation7 + $0x20] sm:$0xff]
    %v204 = vld [vmem:[#allocation7 + $0x28] sm:$0xff]
    %v205 = vld [vmem:[#allocation7 + $0x30] sm:$0xff]
    %v206 = vld [vmem:[#allocation7 + $0x38] sm:$0xff]
    %v207 = vld [vmem:[#allocation7 + $0x40] sm:$0xff]
    %v208 = vld [vmem:[#allocation7 + $0x48] sm:$0xff]
    %v209 = vld [vmem:[#allocation7 + $0x50] sm:$0xff]
    %v210 = vld [vmem:[#allocation7 + $0x58] sm:$0xff]
    %v211 = vld [vmem:[#allocation7 + $0x60] sm:$0xff]
    %v212 = vld [vmem:[#allocation7 + $0x68] sm:$0xff]
    %v213 = vld [vmem:[#allocation7 + $0x70] sm:$0xff]
    %v214 = vld [vmem:[#allocation7 + $0x78] sm:$0xff]
    %v215 = vld [vmem:[#allocation7 + $0x80] sm:$0xff]
    %v216 = vld [vmem:[#allocation7 + $0x88] sm:$0xff]
    %v217 = vld [vmem:[#allocation7 + $0x90] sm:$0xff]
    %v218 = vld [vmem:[#allocation7 + $0x98] sm:$0xff]
    %v219 = vld [vmem:[#allocation7 + $0xa0] sm:$0xff]
    %v220 = vld [vmem:[#allocation7 + $0xa8] sm:$0xff]
    %v221 = vld [vmem:[#allocation7 + $0xb0] sm:$0xff]
    %v222 = vld [vmem:[#allocation7 + $0xb8] sm:$0xff]
    %v223 = vld [vmem:[#allocation7 + $0xc0] sm:$0xff]
    %v224 = vld [vmem:[#allocation7 + $0xc8] sm:$0xff]
    %v225 = vld [vmem:[#allocation7 + $0xd0] sm:$0xff]
    %v226 = vld [vmem:[#allocation7 + $0xd8] sm:$0xff]
    %v227 = vld [vmem:[#allocation7 + $0xe0] sm:$0xff]
    %v228 = vld [vmem:[#allocation7 + $0xe8] sm:$0xff]
    %v229 = vld [vmem:[#allocation7 + $0xf0] sm:$0xff]
    %v230 = vld [vmem:[#allocation7 + $0xf8] sm:$0xff]
    %v232 = vsel %vm107, %v197, 0
    %v235 = vsel %vm107, %v198, 0
    %237 = vmatpush.msra.mxu0 0.0
    %238 = vmatpush.msra.mxu0 0.0
    %239 = vmatpush.msra.mxu0 0.0
    %240 = vmatpush.msra.mxu0 0.0
    %241 = vmatpush.msra.mxu0 0.0
    %242 = vmatpush.msra.mxu0 0.0
    %243 = vmatpush.msra.mxu0 0.0
    %244 = vmatpush.msra.mxu0 0.0
    %245 = vmatpush.msra.mxu0 %v227
    %246 = vmatpush.msra.mxu0 %v223
    %247 = vmatpush.msra.mxu0 %v219
    %248 = vmatpush.msra.mxu0 %v215
    %249 = vmatpush.msra.mxu0 %v211
    %250 = vmatpush.msra.mxu0 %v207
    %251 = vmatpush.msra.mxu0 %v203
    %252 = vmatpush.msra.mxu0 %v199
    %253 = vmatmul.f32.gmra.mxu0 %v232
    %v254 = vpop.f32.mrf.mxu0
    %v255 = vadd.f32 0.0, %v254
    %256 = vmatmul.f32.gmra.mxu0 %v235
    %v257 = vpop.f32.mrf.mxu0
    %v258 = vadd.f32 0.0, %v257
    %259 = vdwg.mxu0
    %260 = vmatpush.msra.mxu0 0.0
    %261 = vmatpush.msra.mxu0 0.0
    %262 = vmatpush.msra.mxu0 0.0
    %263 = vmatpush.msra.mxu0 0.0
    %264 = vmatpush.msra.mxu0 0.0
    %265 = vmatpush.msra.mxu0 0.0
    %266 = vmatpush.msra.mxu0 0.0
    %267 = vmatpush.msra.mxu0 0.0
    %268 = vmatpush.msra.mxu0 %v228
    %269 = vmatpush.msra.mxu0 %v224
    %270 = vmatpush.msra.mxu0 %v220
    %271 = vmatpush.msra.mxu0 %v216
    %272 = vmatpush.msra.mxu0 %v212
    %273 = vmatpush.msra.mxu0 %v208
    %274 = vmatpush.msra.mxu0 %v204
    %275 = vmatpush.msra.mxu0 %v200
    %276 = vmatmul.f32.gmra.mxu0 %v232
    %v277 = vpop.f32.mrf.mxu0
    %v278 = vadd.f32 0.0, %v277
    %279 = vmatmul.f32.gmra.mxu0 %v235
    %v280 = vpop.f32.mrf.mxu0
    %v281 = vadd.f32 0.0, %v280
    %282 = vdwg.mxu0
    %283 = vmatpush.msra.mxu0 0.0
    %284 = vmatpush.msra.mxu0 0.0
    %285 = vmatpush.msra.mxu0 0.0
    %286 = vmatpush.msra.mxu0 0.0
    %287 = vmatpush.msra.mxu0 0.0
    %288 = vmatpush.msra.mxu0 0.0
    %289 = vmatpush.msra.mxu0 0.0
    %290 = vmatpush.msra.mxu0 0.0
    %291 = vmatpush.msra.mxu0 %v229
    %292 = vmatpush.msra.mxu0 %v225
    %293 = vmatpush.msra.mxu0 %v221
    %294 = vmatpush.msra.mxu0 %v217
    %295 = vmatpush.msra.mxu0 %v213
    %296 = vmatpush.msra.mxu0 %v209
    %297 = vmatpush.msra.mxu0 %v205
    %298 = vmatpush.msra.mxu0 %v201
    %299 = vmatmul.f32.gmra.mxu0 %v232
    %v300 = vpop.f32.mrf.mxu0
    %v301 = vadd.f32 0.0, %v300
    %302 = vmatmul.f32.gmra.mxu0 %v235
    %v303 = vpop.f32.mrf.mxu0
    %v304 = vadd.f32 0.0, %v303
    %305 = vdwg.mxu0
    %306 = vmatpush.msra.mxu0 0.0
    %307 = vmatpush.msra.mxu0 0.0
    %308 = vmatpush.msra.mxu0 0.0
    %309 = vmatpush.msra.mxu0 0.0
    %310 = vmatpush.msra.mxu0 0.0
    %311 = vmatpush.msra.mxu0 0.0
    %312 = vmatpush.msra.mxu0 0.0
    %313 = vmatpush.msra.mxu0 0.0
    %314 = vmatpush.msra.mxu0 %v230
    %315 = vmatpush.msra.mxu0 %v226
    %316 = vmatpush.msra.mxu0 %v222
    %317 = vmatpush.msra.mxu0 %v218
    %318 = vmatpush.msra.mxu0 %v214
    %319 = vmatpush.msra.mxu0 %v210
    %320 = vmatpush.msra.mxu0 %v206
    %321 = vmatpush.msra.mxu0 %v202
    %322 = vmatmul.f32.gmra.mxu0 %v232
    %v323 = vpop.f32.mrf.mxu0
    %v324 = vadd.f32 0.0, %v323
    %325 = vmatmul.f32.gmra.mxu0 %v235
    %v326 = vpop.f32.mrf.mxu0
    %v327 = vadd.f32 0.0, %v326
    %328 = vdwg.mxu0
    %329 = vst [vmem:[#allocation3] sm:$0xff] %v255
    %330 = vst [vmem:[#allocation3 + $0x8] sm:$0xff] %v278
    %331 = vst [vmem:[#allocation3 + $0x10] sm:$0xff] %v301
    %332 = vst [vmem:[#allocation3 + $0x18] sm:$0xff] %v324
    %333 = vst [vmem:[#allocation3 + $0x20] sm:$0xf] %v258
    %334 = vst [vmem:[#allocation3 + $0x28] sm:$0xf] %v281
    %335 = vst [vmem:[#allocation3 + $0x30] sm:$0xf] %v304
    %336 = vst [vmem:[#allocation3 + $0x38] sm:$0xf] %v327
    %v337 = vld [vmem:[#allocation5 + $0xc0] sm:$0xff]
    %v338 = vld [vmem:[#allocation5 + $0xc8] sm:$0xff]
    %v339 = vld [vmem:[#allocation5 + $0xd0] sm:$0xff]
    %v340 = vld [vmem:[#allocation5 + $0xd8] sm:$0xff]
    %v341 = vld [vmem:[#allocation5 + $0xe0] sm:$0xff]
    %v342 = vld [vmem:[#allocation5 + $0xe8] sm:$0xff]
    %v343 = vld [vmem:[#allocation5 + $0xf0] sm:$0xff]
    %v344 = vld [vmem:[#allocation5 + $0xf8] sm:$0xff]
    %v345 = vld [vmem:[#allocation5 + $0x100] sm:$0xff]
    %v346 = vld [vmem:[#allocation5 + $0x108] sm:$0xff]
    %v347 = vld [vmem:[#allocation5 + $0x110] sm:$0xff]
    %v348 = vld [vmem:[#allocation5 + $0x118] sm:$0xff]
    %v349 = vld [vmem:[#allocation5 + $0x120] sm:$0xff]
    %v350 = vld [vmem:[#allocation5 + $0x128] sm:$0xff]
    %v351 = vld [vmem:[#allocation5 + $0x130] sm:$0xff]
    %v352 = vld [vmem:[#allocation5 + $0x138] sm:$0xff]
    %v353 = vld [vmem:[#allocation5 + $0x140] sm:$0xff]
    %v354 = vld [vmem:[#allocation5 + $0x148] sm:$0xff]
    %v355 = vld [vmem:[#allocation5 + $0x150] sm:$0xff]
    %v356 = vld [vmem:[#allocation5 + $0x158] sm:$0xff]
    %v357 = vld [vmem:[#allocation5 + $0x160] sm:$0xff]
    %v358 = vld [vmem:[#allocation5 + $0x168] sm:$0xff]
    %v359 = vld [vmem:[#allocation5 + $0x170] sm:$0xff]
    %v360 = vld [vmem:[#allocation5 + $0x178] sm:$0xff]
    %v361 = vld [vmem:[#allocation5 + $0x180] sm:$0xff]
    %v362 = vld [vmem:[#allocation5 + $0x188] sm:$0xff]
    %v363 = vld [vmem:[#allocation5 + $0x190] sm:$0xff]
    %v364 = vld [vmem:[#allocation5 + $0x198] sm:$0xff]
    %v365 = vld [vmem:[#allocation5 + $0x1a0] sm:$0xff]
    %v366 = vld [vmem:[#allocation5 + $0x1a8] sm:$0xff]
    %v367 = vld [vmem:[#allocation5 + $0x1b0] sm:$0xff]
    %v368 = vld [vmem:[#allocation5 + $0x1b8] sm:$0xff]
    %v369 = vld [vmem:[#allocation5 + $0x1c0] sm:$0xff]
    %v370 = vld [vmem:[#allocation5 + $0x1c8] sm:$0xff]
    %v371 = vld [vmem:[#allocation5 + $0x1d0] sm:$0xff]
    %v372 = vld [vmem:[#allocation5 + $0x1d8] sm:$0xff]
    %v373 = vld [vmem:[#allocation5 + $0x1e0] sm:$0xff]
    %v374 = vld [vmem:[#allocation5 + $0x1e8] sm:$0xff]
    %v375 = vld [vmem:[#allocation5 + $0x1f0] sm:$0xff]
    %v376 = vld [vmem:[#allocation5 + $0x1f8] sm:$0xff]
    %v377 = vld [vmem:[#allocation5 + $0x200] sm:$0xff]
    %v378 = vld [vmem:[#allocation5 + $0x208] sm:$0xff]
    %v379 = vld [vmem:[#allocation5 + $0x210] sm:$0xff]
    %v380 = vld [vmem:[#allocation5 + $0x218] sm:$0xff]
    %v381 = vld [vmem:[#allocation5 + $0x220] sm:$0xff]
    %v382 = vld [vmem:[#allocation5 + $0x228] sm:$0xff]
    %v383 = vld [vmem:[#allocation5 + $0x230] sm:$0xff]
    %v384 = vld [vmem:[#allocation5 + $0x238] sm:$0xff]
    %s385 = scalar_lea.vmem [#allocation5], 576
    %v386 = vld [vmem:[%s385] ss:$8 sm:$0x7]
    %v388 = vperm.slane %v386, 0
    %v389 = vperm.slane %v386, 1
    %v390 = vperm.slane %v386, 2
    %v394 = vld [vmem:[#allocation2] sm:$0x3]
    %v395 = vld [vmem:[#allocation2 + $0x8] sm:$0x3]
    %v396 = vld [vmem:[#allocation2 + $0x10] sm:$0x3]
    %397 = vmatpush.msra.mxu0 %v382
    %398 = vmatpush.msra.mxu0 %v379
    %399 = vmatpush.msra.mxu0 %v376
    %400 = vmatpush.msra.mxu0 %v373
    %401 = vmatpush.msra.mxu0 %v370
    %402 = vmatpush.msra.mxu0 %v367
    %403 = vmatpush.msra.mxu0 %v364
    %404 = vmatpush.msra.mxu0 %v361
    %405 = vmatpush.msra.mxu0 %v358
    %406 = vmatpush.msra.mxu0 %v355
    %407 = vmatpush.msra.mxu0 %v352
    %408 = vmatpush.msra.mxu0 %v349
    %409 = vmatpush.msra.mxu0 %v346
    %410 = vmatpush.msra.mxu0 %v343
    %411 = vmatpush.msra.mxu0 %v340
    %412 = vmatpush.msra.mxu0 %v337
    %413 = vmatmul.f32.gmra.mxu0 0.0
    %v414 = vpop.f32.mrf.mxu0
    %v415 = vadd.f32 %v388, %v414
    %416 = vdwg.mxu0
    %417 = vmatpush.msra.mxu0 %v383
    %418 = vmatpush.msra.mxu0 %v380
    %419 = vmatpush.msra.mxu0 %v377
    %420 = vmatpush.msra.mxu0 %v374
    %421 = vmatpush.msra.mxu0 %v371
    %422 = vmatpush.msra.mxu0 %v368
    %423 = vmatpush.msra.mxu0 %v365
    %424 = vmatpush.msra.mxu0 %v362
    %425 = vmatpush.msra.mxu0 %v359
    %426 = vmatpush.msra.mxu0 %v356
    %427 = vmatpush.msra.mxu0 %v353
    %428 = vmatpush.msra.mxu0 %v350
    %429 = vmatpush.msra.mxu0 %v347
    %430 = vmatpush.msra.mxu0 %v344
    %431 = vmatpush.msra.mxu0 %v341
    %432 = vmatpush.msra.mxu0 %v338
    %433 = vmatmul.f32.gmra.mxu0 0.0
    %v434 = vpop.f32.mrf.mxu0
    %v435 = vadd.f32 %v389, %v434
    %436 = vdwg.mxu0
    %437 = vmatpush.msra.mxu0 %v384
    %438 = vmatpush.msra.mxu0 %v381
    %439 = vmatpush.msra.mxu0 %v378
    %440 = vmatpush.msra.mxu0 %v375
    %441 = vmatpush.msra.mxu0 %v372
    %442 = vmatpush.msra.mxu0 %v369
    %443 = vmatpush.msra.mxu0 %v366
    %444 = vmatpush.msra.mxu0 %v363
    %445 = vmatpush.msra.mxu0 %v360
    %446 = vmatpush.msra.mxu0 %v357
    %447 = vmatpush.msra.mxu0 %v354
    %448 = vmatpush.msra.mxu0 %v351
    %449 = vmatpush.msra.mxu0 %v348
    %450 = vmatpush.msra.mxu0 %v345
    %451 = vmatpush.msra.mxu0 %v342
    %452 = vmatpush.msra.mxu0 %v339
    %453 = vmatmul.f32.gmra.mxu0 0.0
    %v454 = vpop.f32.mrf.mxu0
    %v455 = vadd.f32 %v390, %v454
    %456 = vdwg.mxu0
    %v457 = vadd.f32 %v394, %v415
    %v458 = vadd.f32 %v395, %v435
    %v459 = vxor.u32 %v457, 2147483648
    %v460 = vxor.u32 %v458, 2147483648
    %v461 = vmul.f32 %v459, 1.442695
    %v462 = vpow.pop %v461
    %v463 = vmul.f32 %v460, 1.442695
    %v464 = vpow.pop %v463
    %v465 = vadd.f32 %v462, 1.0
    %v466 = vadd.f32 %v464, 1.0
    %v467 = vrcp.pop %v465
    %v468 = vmul.f32 %v465, %v467
    %v469 = vsub.f32 1.0, %v468
    %v470 = vmul.f32 %v467, %v469
    %v471 = vadd.f32 %v467, %v470
    %vm472 = vweird.f32 %v465
    %vm473 = vweird.f32 %v467
    %vm474 = vmor %vm472, %vm473
    %v475 = vsel %vm474, %v467, %v471
    %v476 = vand.u32 2147483647, %v465
    %vm477 = vcmp.eq.f32.partialorder %v476, 8.507059e+37
    %v478 = vand.u32 %v465, 2147483648
    %v479 = vor.u32 1.1754944e-38, %v478
    %v480 = vsel %vm477, %v479, %v475
    %v481 = vmul.f32 1.0, %v480
    %v482 = vrcp.pop %v466
    %v483 = vmul.f32 %v466, %v482
    %v484 = vsub.f32 1.0, %v483
    %v485 = vmul.f32 %v482, %v484
    %v486 = vadd.f32 %v482, %v485
    %vm487 = vweird.f32 %v466
    %vm488 = vweird.f32 %v482
    %vm489 = vmor %vm487, %vm488
    %v490 = vsel %vm489, %v482, %v486
    %v491 = vand.u32 2147483647, %v466
    %vm492 = vcmp.eq.f32.partialorder %v491, 8.507059e+37
    %v493 = vand.u32 %v466, 2147483648
    %v494 = vor.u32 1.1754944e-38, %v493
    %v495 = vsel %vm492, %v494, %v490
    %v496 = vmul.f32 1.0, %v495
    %v497 = vmul.f32 %v481, %v455
    %v498 = vadd.f32 %v396, %v497
    %v499 = vtanh.pop %v498
    %v500 = vsub.f32 1.0, %v496
    %v501 = vmul.f32 %v500, %v499
    %v502 = vmul.f32 %v496, 0.0
    %v503 = vadd.f32 %v501, %v502
    %v504 = vld [vmem:[#allocation2] sm:$0xc]
    %v505 = vld [vmem:[#allocation2 + $0x8] sm:$0xc]
    %v506 = vld [vmem:[#allocation2 + $0x10] sm:$0xc]
    %507 = vmatpush.msra.mxu0 %v382
    %508 = vmatpush.msra.mxu0 %v379
    %509 = vmatpush.msra.mxu0 %v376
    %510 = vmatpush.msra.mxu0 %v373
    %511 = vmatpush.msra.mxu0 %v370
    %512 = vmatpush.msra.mxu0 %v367
    %513 = vmatpush.msra.mxu0 %v364
    %514 = vmatpush.msra.mxu0 %v361
    %515 = vmatpush.msra.mxu0 %v358
    %516 = vmatpush.msra.mxu0 %v355
    %517 = vmatpush.msra.mxu0 %v352
    %518 = vmatpush.msra.mxu0 %v349
    %519 = vmatpush.msra.mxu0 %v346
    %520 = vmatpush.msra.mxu0 %v343
    %521 = vmatpush.msra.mxu0 %v340
    %522 = vmatpush.msra.mxu0 %v337
    %523 = vmatmul.f32.gmra.mxu0 %v503
    %v524 = vpop.f32.mrf.mxu0
    %v525 = vadd.f32 %v388, %v524
    %526 = vdwg.mxu0
    %527 = vmatpush.msra.mxu0 %v383
    %528 = vmatpush.msra.mxu0 %v380
    %529 = vmatpush.msra.mxu0 %v377
    %530 = vmatpush.msra.mxu0 %v374
    %531 = vmatpush.msra.mxu0 %v371
    %532 = vmatpush.msra.mxu0 %v368
    %533 = vmatpush.msra.mxu0 %v365
    %534 = vmatpush.msra.mxu0 %v362
    %535 = vmatpush.msra.mxu0 %v359
    %536 = vmatpush.msra.mxu0 %v356
    %537 = vmatpush.msra.mxu0 %v353
    %538 = vmatpush.msra.mxu0 %v350
    %539 = vmatpush.msra.mxu0 %v347
    %540 = vmatpush.msra.mxu0 %v344
    %541 = vmatpush.msra.mxu0 %v341
    %542 = vmatpush.msra.mxu0 %v338
    %543 = vmatmul.f32.gmra.mxu0 %v503
    %v544 = vpop.f32.mrf.mxu0
    %v545 = vadd.f32 %v389, %v544
    %546 = vdwg.mxu0
    %547 = vmatpush.msra.mxu0 %v384
    %548 = vmatpush.msra.mxu0 %v381
    %549 = vmatpush.msra.mxu0 %v378
    %550 = vmatpush.msra.mxu0 %v375
    %551 = vmatpush.msra.mxu0 %v372
    %552 = vmatpush.msra.mxu0 %v369
    %553 = vmatpush.msra.mxu0 %v366
    %554 = vmatpush.msra.mxu0 %v363
    %555 = vmatpush.msra.mxu0 %v360
    %556 = vmatpush.msra.mxu0 %v357
    %557 = vmatpush.msra.mxu0 %v354
    %558 = vmatpush.msra.mxu0 %v351
    %559 = vmatpush.msra.mxu0 %v348
    %560 = vmatpush.msra.mxu0 %v345
    %561 = vmatpush.msra.mxu0 %v342
    %562 = vmatpush.msra.mxu0 %v339
    %563 = vmatmul.f32.gmra.mxu0 %v503
    %v564 = vpop.f32.mrf.mxu0
    %v565 = vadd.f32 %v390, %v564
    %566 = vdwg.mxu0
    %v569 = vrot.slane %v525, 6
    %v570 = vrot.slane %v545, 6
    %v573 = vadd.f32 %v504, %v569
    %v574 = vadd.f32 %v505, %v570
    %v575 = vxor.u32 %v573, 2147483648
    %v576 = vxor.u32 %v574, 2147483648
    %v577 = vmul.f32 %v575, 1.442695
    %v578 = vpow.pop %v577
    %v579 = vmul.f32 %v576, 1.442695
    %v580 = vpow.pop %v579
    %v581 = vadd.f32 %v578, 1.0
    %v582 = vadd.f32 %v580, 1.0
    %v583 = vrcp.pop %v581
    %v584 = vmul.f32 %v581, %v583
    %v585 = vsub.f32 1.0, %v584
    %v586 = vmul.f32 %v583, %v585
    %v587 = vadd.f32 %v583, %v586
    %vm588 = vweird.f32 %v581
    %vm589 = vweird.f32 %v583
    %vm590 = vmor %vm588, %vm589
    %v591 = vsel %vm590, %v583, %v587
    %v592 = vand.u32 2147483647, %v581
    %vm593 = vcmp.eq.f32.partialorder %v592, 8.507059e+37
    %v594 = vand.u32 %v581, 2147483648
    %v595 = vor.u32 1.1754944e-38, %v594
    %v596 = vsel %vm593, %v595, %v591
    %v597 = vmul.f32 1.0, %v596
    %v598 = vrcp.pop %v582
    %v599 = vmul.f32 %v582, %v598
    %v600 = vsub.f32 1.0, %v599
    %v601 = vmul.f32 %v598, %v600
    %v602 = vadd.f32 %v598, %v601
    %vm603 = vweird.f32 %v582
    %vm604 = vweird.f32 %v598
    %vm605 = vmor %vm603, %vm604
    %v606 = vsel %vm605, %v598, %v602
    %v607 = vand.u32 2147483647, %v582
    %vm608 = vcmp.eq.f32.partialorder %v607, 8.507059e+37
    %v609 = vand.u32 %v582, 2147483648
    %v610 = vor.u32 1.1754944e-38, %v609
    %v611 = vsel %vm608, %v610, %v606
    %v612 = vmul.f32 1.0, %v611
    %v614 = vrot.slane %v565, 6
    %v616 = vmul.f32 %v597, %v614
    %v617 = vadd.f32 %v506, %v616
    %v618 = vtanh.pop %v617
    %v619 = vsub.f32 1.0, %v612
    %v620 = vmul.f32 %v619, %v618
    %v622 = vrot.slane %v503, 6
    %v624 = vmul.f32 %v612, %v622
    %v625 = vadd.f32 %v620, %v624
    %v626 = vld [vmem:[#allocation2] sm:$0x30]
    %v627 = vld [vmem:[#allocation2 + $0x8] sm:$0x30]
    %v628 = vld [vmem:[#allocation2 + $0x10] sm:$0x30]
    %v630 = vrot.slane %v625, 2
    %632 = vmatpush.msra.mxu0 %v382
    %633 = vmatpush.msra.mxu0 %v379
    %634 = vmatpush.msra.mxu0 %v376
    %635 = vmatpush.msra.mxu0 %v373
    %636 = vmatpush.msra.mxu0 %v370
    %637 = vmatpush.msra.mxu0 %v367
    %638 = vmatpush.msra.mxu0 %v364
    %639 = vmatpush.msra.mxu0 %v361
    %640 = vmatpush.msra.mxu0 %v358
    %641 = vmatpush.msra.mxu0 %v355
    %642 = vmatpush.msra.mxu0 %v352
    %643 = vmatpush.msra.mxu0 %v349
    %644 = vmatpush.msra.mxu0 %v346
    %645 = vmatpush.msra.mxu0 %v343
    %646 = vmatpush.msra.mxu0 %v340
    %647 = vmatpush.msra.mxu0 %v337
    %648 = vmatmul.f32.gmra.mxu0 %v630
    %v649 = vpop.f32.mrf.mxu0
    %v650 = vadd.f32 %v388, %v649
    %651 = vdwg.mxu0
    %652 = vmatpush.msra.mxu0 %v383
    %653 = vmatpush.msra.mxu0 %v380
    %654 = vmatpush.msra.mxu0 %v377
    %655 = vmatpush.msra.mxu0 %v374
    %656 = vmatpush.msra.mxu0 %v371
    %657 = vmatpush.msra.mxu0 %v368
    %658 = vmatpush.msra.mxu0 %v365
    %659 = vmatpush.msra.mxu0 %v362
    %660 = vmatpush.msra.mxu0 %v359
    %661 = vmatpush.msra.mxu0 %v356
    %662 = vmatpush.msra.mxu0 %v353
    %663 = vmatpush.msra.mxu0 %v350
    %664 = vmatpush.msra.mxu0 %v347
    %665 = vmatpush.msra.mxu0 %v344
    %666 = vmatpush.msra.mxu0 %v341
    %667 = vmatpush.msra.mxu0 %v338
    %668 = vmatmul.f32.gmra.mxu0 %v630
    %v669 = vpop.f32.mrf.mxu0
    %v670 = vadd.f32 %v389, %v669
    %671 = vdwg.mxu0
    %672 = vmatpush.msra.mxu0 %v384
    %673 = vmatpush.msra.mxu0 %v381
    %674 = vmatpush.msra.mxu0 %v378
    %675 = vmatpush.msra.mxu0 %v375
    %676 = vmatpush.msra.mxu0 %v372
    %677 = vmatpush.msra.mxu0 %v369
    %678 = vmatpush.msra.mxu0 %v366
    %679 = vmatpush.msra.mxu0 %v363
    %680 = vmatpush.msra.mxu0 %v360
    %681 = vmatpush.msra.mxu0 %v357
    %682 = vmatpush.msra.mxu0 %v354
    %683 = vmatpush.msra.mxu0 %v351
    %684 = vmatpush.msra.mxu0 %v348
    %685 = vmatpush.msra.mxu0 %v345
    %686 = vmatpush.msra.mxu0 %v342
    %687 = vmatpush.msra.mxu0 %v339
    %688 = vmatmul.f32.gmra.mxu0 %v630
    %v689 = vpop.f32.mrf.mxu0
    %v690 = vadd.f32 %v390, %v689
    %691 = vdwg.mxu0
    %v694 = vrot.slane %v650, 4
    %v695 = vrot.slane %v670, 4
    %v698 = vadd.f32 %v626, %v694
    %v699 = vadd.f32 %v627, %v695
    %v700 = vxor.u32 %v698, 2147483648
    %v701 = vxor.u32 %v699, 2147483648
    %v702 = vmul.f32 %v700, 1.442695
    %v703 = vpow.pop %v702
    %v704 = vmul.f32 %v701, 1.442695
    %v705 = vpow.pop %v704
    %v706 = vadd.f32 %v703, 1.0
    %v707 = vadd.f32 %v705, 1.0
    %v708 = vrcp.pop %v706
    %v709 = vmul.f32 %v706, %v708
    %v710 = vsub.f32 1.0, %v709
    %v711 = vmul.f32 %v708, %v710
    %v712 = vadd.f32 %v708, %v711
    %vm713 = vweird.f32 %v706
    %vm714 = vweird.f32 %v708
    %vm715 = vmor %vm713, %vm714
    %v716 = vsel %vm715, %v708, %v712
    %v717 = vand.u32 2147483647, %v706
    %vm718 = vcmp.eq.f32.partialorder %v717, 8.507059e+37
    %v719 = vand.u32 %v706, 2147483648
    %v720 = vor.u32 1.1754944e-38, %v719
    %v721 = vsel %vm718, %v720, %v716
    %v722 = vmul.f32 1.0, %v721
    %v723 = vrcp.pop %v707
    %v724 = vmul.f32 %v707, %v723
    %v725 = vsub.f32 1.0, %v724
    %v726 = vmul.f32 %v723, %v725
    %v727 = vadd.f32 %v723, %v726
    %vm728 = vweird.f32 %v707
    %vm729 = vweird.f32 %v723
    %vm730 = vmor %vm728, %vm729
    %v731 = vsel %vm730, %v723, %v727
    %v732 = vand.u32 2147483647, %v707
    %vm733 = vcmp.eq.f32.partialorder %v732, 8.507059e+37
    %v734 = vand.u32 %v707, 2147483648
    %v735 = vor.u32 1.1754944e-38, %v734
    %v736 = vsel %vm733, %v735, %v731
    %v737 = vmul.f32 1.0, %v736
    %v739 = vrot.slane %v690, 4
    %v741 = vmul.f32 %v722, %v739
    %v742 = vadd.f32 %v628, %v741
    %v743 = vtanh.pop %v742
    %v744 = vsub.f32 1.0, %v737
    %v745 = vmul.f32 %v744, %v743
    %v746 = vrot.slane %v625, 6
    %v748 = vmul.f32 %v737, %v746
    %v749 = vadd.f32 %v745, %v748
    %v750 = vld [vmem:[#allocation2] sm:$0xc0]
    %v751 = vld [vmem:[#allocation2 + $0x8] sm:$0xc0]
    %v752 = vld [vmem:[#allocation2 + $0x10] sm:$0xc0]
    %v754 = vrot.slane %v749, 4
    %756 = vmatpush.msra.mxu0 %v382
    %757 = vmatpush.msra.mxu0 %v379
    %758 = vmatpush.msra.mxu0 %v376
    %759 = vmatpush.msra.mxu0 %v373
    %760 = vmatpush.msra.mxu0 %v370
    %761 = vmatpush.msra.mxu0 %v367
    %762 = vmatpush.msra.mxu0 %v364
    %763 = vmatpush.msra.mxu0 %v361
    %764 = vmatpush.msra.mxu0 %v358
    %765 = vmatpush.msra.mxu0 %v355
    %766 = vmatpush.msra.mxu0 %v352
    %767 = vmatpush.msra.mxu0 %v349
    %768 = vmatpush.msra.mxu0 %v346
    %769 = vmatpush.msra.mxu0 %v343
    %770 = vmatpush.msra.mxu0 %v340
    %771 = vmatpush.msra.mxu0 %v337
    %772 = vmatmul.f32.gmra.mxu0 %v754
    %v773 = vpop.f32.mrf.mxu0
    %v774 = vadd.f32 %v388, %v773
    %775 = vdwg.mxu0
    %776 = vmatpush.msra.mxu0 %v383
    %777 = vmatpush.msra.mxu0 %v380
    %778 = vmatpush.msra.mxu0 %v377
    %779 = vmatpush.msra.mxu0 %v374
    %780 = vmatpush.msra.mxu0 %v371
    %781 = vmatpush.msra.mxu0 %v368
    %782 = vmatpush.msra.mxu0 %v365
    %783 = vmatpush.msra.mxu0 %v362
    %784 = vmatpush.msra.mxu0 %v359
    %785 = vmatpush.msra.mxu0 %v356
    %786 = vmatpush.msra.mxu0 %v353
    %787 = vmatpush.msra.mxu0 %v350
    %788 = vmatpush.msra.mxu0 %v347
    %789 = vmatpush.msra.mxu0 %v344
    %790 = vmatpush.msra.mxu0 %v341
    %791 = vmatpush.msra.mxu0 %v338
    %792 = vmatmul.f32.gmra.mxu0 %v754
    %v793 = vpop.f32.mrf.mxu0
    %v794 = vadd.f32 %v389, %v793
    %795 = vdwg.mxu0
    %796 = vmatpush.msra.mxu0 %v384
    %797 = vmatpush.msra.mxu0 %v381
    %798 = vmatpush.msra.mxu0 %v378
    %799 = vmatpush.msra.mxu0 %v375
    %800 = vmatpush.msra.mxu0 %v372
    %801 = vmatpush.msra.mxu0 %v369
    %802 = vmatpush.msra.mxu0 %v366
    %803 = vmatpush.msra.mxu0 %v363
    %804 = vmatpush.msra.mxu0 %v360
    %805 = vmatpush.msra.mxu0 %v357
    %806 = vmatpush.msra.mxu0 %v354
    %807 = vmatpush.msra.mxu0 %v351
    %808 = vmatpush.msra.mxu0 %v348
    %809 = vmatpush.msra.mxu0 %v345
    %810 = vmatpush.msra.mxu0 %v342
    %811 = vmatpush.msra.mxu0 %v339
    %812 = vmatmul.f32.gmra.mxu0 %v754
    %v813 = vpop.f32.mrf.mxu0
    %v814 = vadd.f32 %v390, %v813
    %815 = vdwg.mxu0
    %v818 = vrot.slane %v774, 2
    %v819 = vrot.slane %v794, 2
    %v822 = vadd.f32 %v750, %v818
    %v823 = vadd.f32 %v751, %v819
    %v824 = vxor.u32 %v822, 2147483648
    %v825 = vxor.u32 %v823, 2147483648
    %v826 = vmul.f32 %v824, 1.442695
    %v827 = vpow.pop %v826
    %v828 = vmul.f32 %v825, 1.442695
    %v829 = vpow.pop %v828
    %v830 = vadd.f32 %v827, 1.0
    %v831 = vadd.f32 %v829, 1.0
    %v832 = vrcp.pop %v830
    %v833 = vmul.f32 %v830, %v832
    %v834 = vsub.f32 1.0, %v833
    %v835 = vmul.f32 %v832, %v834
    %v836 = vadd.f32 %v832, %v835
    %vm837 = vweird.f32 %v830
    %vm838 = vweird.f32 %v832
    %vm839 = vmor %vm837, %vm838
    %v840 = vsel %vm839, %v832, %v836
    %v841 = vand.u32 2147483647, %v830
    %vm842 = vcmp.eq.f32.partialorder %v841, 8.507059e+37
    %v843 = vand.u32 %v830, 2147483648
    %v844 = vor.u32 1.1754944e-38, %v843
    %v845 = vsel %vm842, %v844, %v840
    %v846 = vmul.f32 1.0, %v845
    %v847 = vrcp.pop %v831
    %v848 = vmul.f32 %v831, %v847
    %v849 = vsub.f32 1.0, %v848
    %v850 = vmul.f32 %v847, %v849
    %v851 = vadd.f32 %v847, %v850
    %vm852 = vweird.f32 %v831
    %vm853 = vweird.f32 %v847
    %vm854 = vmor %vm852, %vm853
    %v855 = vsel %vm854, %v847, %v851
    %v856 = vand.u32 2147483647, %v831
    %vm857 = vcmp.eq.f32.partialorder %v856, 8.507059e+37
    %v858 = vand.u32 %v831, 2147483648
    %v859 = vor.u32 1.1754944e-38, %v858
    %v860 = vsel %vm857, %v859, %v855
    %v861 = vmul.f32 1.0, %v860
    %v863 = vrot.slane %v814, 2
    %v865 = vmul.f32 %v846, %v863
    %v866 = vadd.f32 %v752, %v865
    %v867 = vtanh.pop %v866
    %v868 = vsub.f32 1.0, %v861
    %v869 = vmul.f32 %v868, %v867
    %v870 = vrot.slane %v749, 6
    %v872 = vmul.f32 %v861, %v870
    %v873 = vadd.f32 %v869, %v872
    %v874 = vld [vmem:[#allocation2 + $0x18] sm:$0x3]
    %v875 = vld [vmem:[#allocation2 + $0x20] sm:$0x3]
    %v876 = vld [vmem:[#allocation2 + $0x28] sm:$0x3]
    %v878 = vrot.slane %v873, 6
    %880 = vmatpush.msra.mxu0 %v382
    %881 = vmatpush.msra.mxu0 %v379
    %882 = vmatpush.msra.mxu0 %v376
    %883 = vmatpush.msra.mxu0 %v373
    %884 = vmatpush.msra.mxu0 %v370
    %885 = vmatpush.msra.mxu0 %v367
    %886 = vmatpush.msra.mxu0 %v364
    %887 = vmatpush.msra.mxu0 %v361
    %888 = vmatpush.msra.mxu0 %v358
    %889 = vmatpush.msra.mxu0 %v355
    %890 = vmatpush.msra.mxu0 %v352
    %891 = vmatpush.msra.mxu0 %v349
    %892 = vmatpush.msra.mxu0 %v346
    %893 = vmatpush.msra.mxu0 %v343
    %894 = vmatpush.msra.mxu0 %v340
    %895 = vmatpush.msra.mxu0 %v337
    %896 = vmatmul.f32.gmra.mxu0 %v878
    %v897 = vpop.f32.mrf.mxu0
    %v898 = vadd.f32 %v388, %v897
    %899 = vdwg.mxu0
    %900 = vmatpush.msra.mxu0 %v383
    %901 = vmatpush.msra.mxu0 %v380
    %902 = vmatpush.msra.mxu0 %v377
    %903 = vmatpush.msra.mxu0 %v374
    %904 = vmatpush.msra.mxu0 %v371
    %905 = vmatpush.msra.mxu0 %v368
    %906 = vmatpush.msra.mxu0 %v365
    %907 = vmatpush.msra.mxu0 %v362
    %908 = vmatpush.msra.mxu0 %v359
    %909 = vmatpush.msra.mxu0 %v356
    %910 = vmatpush.msra.mxu0 %v353
    %911 = vmatpush.msra.mxu0 %v350
    %912 = vmatpush.msra.mxu0 %v347
    %913 = vmatpush.msra.mxu0 %v344
    %914 = vmatpush.msra.mxu0 %v341
    %915 = vmatpush.msra.mxu0 %v338
    %916 = vmatmul.f32.gmra.mxu0 %v878
    %v917 = vpop.f32.mrf.mxu0
    %v918 = vadd.f32 %v389, %v917
    %919 = vdwg.mxu0
    %920 = vmatpush.msra.mxu0 %v384
    %921 = vmatpush.msra.mxu0 %v381
    %922 = vmatpush.msra.mxu0 %v378
    %923 = vmatpush.msra.mxu0 %v375
    %924 = vmatpush.msra.mxu0 %v372
    %925 = vmatpush.msra.mxu0 %v369
    %926 = vmatpush.msra.mxu0 %v366
    %927 = vmatpush.msra.mxu0 %v363
    %928 = vmatpush.msra.mxu0 %v360
    %929 = vmatpush.msra.mxu0 %v357
    %930 = vmatpush.msra.mxu0 %v354
    %931 = vmatpush.msra.mxu0 %v351
    %932 = vmatpush.msra.mxu0 %v348
    %933 = vmatpush.msra.mxu0 %v345
    %934 = vmatpush.msra.mxu0 %v342
    %935 = vmatpush.msra.mxu0 %v339
    %936 = vmatmul.f32.gmra.mxu0 %v878
    %v937 = vpop.f32.mrf.mxu0
    %v938 = vadd.f32 %v390, %v937
    %939 = vdwg.mxu0
    %v940 = vadd.f32 %v874, %v898
    %v941 = vadd.f32 %v875, %v918
    %v942 = vxor.u32 %v940, 2147483648
    %v943 = vxor.u32 %v941, 2147483648
    %v944 = vmul.f32 %v942, 1.442695
    %v945 = vpow.pop %v944
    %v946 = vmul.f32 %v943, 1.442695
    %v947 = vpow.pop %v946
    %v948 = vadd.f32 %v945, 1.0
    %v949 = vadd.f32 %v947, 1.0
    %v950 = vrcp.pop %v948
    %v951 = vmul.f32 %v948, %v950
    %v952 = vsub.f32 1.0, %v951
    %v953 = vmul.f32 %v950, %v952
    %v954 = vadd.f32 %v950, %v953
    %vm955 = vweird.f32 %v948
    %vm956 = vweird.f32 %v950
    %vm957 = vmor %vm955, %vm956
    %v958 = vsel %vm957, %v950, %v954
    %v959 = vand.u32 2147483647, %v948
    %vm960 = vcmp.eq.f32.partialorder %v959, 8.507059e+37
    %v961 = vand.u32 %v948, 2147483648
    %v962 = vor.u32 1.1754944e-38, %v961
    %v963 = vsel %vm960, %v962, %v958
    %v964 = vmul.f32 1.0, %v963
    %v965 = vrcp.pop %v949
    %v966 = vmul.f32 %v949, %v965
    %v967 = vsub.f32 1.0, %v966
    %v968 = vmul.f32 %v965, %v967
    %v969 = vadd.f32 %v965, %v968
    %vm970 = vweird.f32 %v949
    %vm971 = vweird.f32 %v965
    %vm972 = vmor %vm970, %vm971
    %v973 = vsel %vm972, %v965, %v969
    %v974 = vand.u32 2147483647, %v949
    %vm975 = vcmp.eq.f32.partialorder %v974, 8.507059e+37
    %v976 = vand.u32 %v949, 2147483648
    %v977 = vor.u32 1.1754944e-38, %v976
    %v978 = vsel %vm975, %v977, %v973
    %v979 = vmul.f32 1.0, %v978
    %v980 = vmul.f32 %v964, %v938
    %v981 = vadd.f32 %v876, %v980
    %v982 = vtanh.pop %v981
    %v983 = vsub.f32 1.0, %v979
    %v984 = vmul.f32 %v983, %v982
    %v985 = vmul.f32 %v979, %v878
    %v986 = vadd.f32 %v984, %v985
    %v987 = vld [vmem:[#allocation2 + $0x18] sm:$0xc]
    %v988 = vld [vmem:[#allocation2 + $0x20] sm:$0xc]
    %v989 = vld [vmem:[#allocation2 + $0x28] sm:$0xc]
    %990 = vmatpush.msra.mxu0 %v382
    %991 = vmatpush.msra.mxu0 %v379
    %992 = vmatpush.msra.mxu0 %v376
    %993 = vmatpush.msra.mxu0 %v373
    %994 = vmatpush.msra.mxu0 %v370
    %995 = vmatpush.msra.mxu0 %v367
    %996 = vmatpush.msra.mxu0 %v364
    %997 = vmatpush.msra.mxu0 %v361
    %998 = vmatpush.msra.mxu0 %v358
    %999 = vmatpush.msra.mxu0 %v355
    %1000 = vmatpush.msra.mxu0 %v352
    %1001 = vmatpush.msra.mxu0 %v349
    %1002 = vmatpush.msra.mxu0 %v346
    %1003 = vmatpush.msra.mxu0 %v343
    %1004 = vmatpush.msra.mxu0 %v340
    %1005 = vmatpush.msra.mxu0 %v337
    %1006 = vmatmul.f32.gmra.mxu0 %v986
    %v1007 = vpop.f32.mrf.mxu0
    %v1008 = vadd.f32 %v388, %v1007
    %1009 = vdwg.mxu0
    %1010 = vmatpush.msra.mxu0 %v383
    %1011 = vmatpush.msra.mxu0 %v380
    %1012 = vmatpush.msra.mxu0 %v377
    %1013 = vmatpush.msra.mxu0 %v374
    %1014 = vmatpush.msra.mxu0 %v371
    %1015 = vmatpush.msra.mxu0 %v368
    %1016 = vmatpush.msra.mxu0 %v365
    %1017 = vmatpush.msra.mxu0 %v362
    %1018 = vmatpush.msra.mxu0 %v359
    %1019 = vmatpush.msra.mxu0 %v356
    %1020 = vmatpush.msra.mxu0 %v353
    %1021 = vmatpush.msra.mxu0 %v350
    %1022 = vmatpush.msra.mxu0 %v347
    %1023 = vmatpush.msra.mxu0 %v344
    %1024 = vmatpush.msra.mxu0 %v341
    %1025 = vmatpush.msra.mxu0 %v338
    %1026 = vmatmul.f32.gmra.mxu0 %v986
    %v1027 = vpop.f32.mrf.mxu0
    %v1028 = vadd.f32 %v389, %v1027
    %1029 = vdwg.mxu0
    %1030 = vmatpush.msra.mxu0 %v384
    %1031 = vmatpush.msra.mxu0 %v381
    %1032 = vmatpush.msra.mxu0 %v378
    %1033 = vmatpush.msra.mxu0 %v375
    %1034 = vmatpush.msra.mxu0 %v372
    %1035 = vmatpush.msra.mxu0 %v369
    %1036 = vmatpush.msra.mxu0 %v366
    %1037 = vmatpush.msra.mxu0 %v363
    %1038 = vmatpush.msra.mxu0 %v360
    %1039 = vmatpush.msra.mxu0 %v357
    %1040 = vmatpush.msra.mxu0 %v354
    %1041 = vmatpush.msra.mxu0 %v351
    %1042 = vmatpush.msra.mxu0 %v348
    %1043 = vmatpush.msra.mxu0 %v345
    %1044 = vmatpush.msra.mxu0 %v342
    %1045 = vmatpush.msra.mxu0 %v339
    %1046 = vmatmul.f32.gmra.mxu0 %v986
    %v1047 = vpop.f32.mrf.mxu0
    %v1048 = vadd.f32 %v390, %v1047
    %1049 = vdwg.mxu0
    %v1052 = vrot.slane %v1008, 6
    %v1053 = vrot.slane %v1028, 6
    %v1056 = vadd.f32 %v987, %v1052
    %v1057 = vadd.f32 %v988, %v1053
    %v1058 = vxor.u32 %v1056, 2147483648
    %v1059 = vxor.u32 %v1057, 2147483648
    %v1060 = vmul.f32 %v1058, 1.442695
    %v1061 = vpow.pop %v1060
    %v1062 = vmul.f32 %v1059, 1.442695
    %v1063 = vpow.pop %v1062
    %v1064 = vadd.f32 %v1061, 1.0
    %v1065 = vadd.f32 %v1063, 1.0
    %v1066 = vrcp.pop %v1064
    %v1067 = vmul.f32 %v1064, %v1066
    %v1068 = vsub.f32 1.0, %v1067
    %v1069 = vmul.f32 %v1066, %v1068
    %v1070 = vadd.f32 %v1066, %v1069
    %vm1071 = vweird.f32 %v1064
    %vm1072 = vweird.f32 %v1066
    %vm1073 = vmor %vm1071, %vm1072
    %v1074 = vsel %vm1073, %v1066, %v1070
    %v1075 = vand.u32 2147483647, %v1064
    %vm1076 = vcmp.eq.f32.partialorder %v1075, 8.507059e+37
    %v1077 = vand.u32 %v1064, 2147483648
    %v1078 = vor.u32 1.1754944e-38, %v1077
    %v1079 = vsel %vm1076, %v1078, %v1074
    %v1080 = vmul.f32 1.0, %v1079
    %v1081 = vrcp.pop %v1065
    %v1082 = vmul.f32 %v1065, %v1081
    %v1083 = vsub.f32 1.0, %v1082
    %v1084 = vmul.f32 %v1081, %v1083
    %v1085 = vadd.f32 %v1081, %v1084
    %vm1086 = vweird.f32 %v1065
    %vm1087 = vweird.f32 %v1081
    %vm1088 = vmor %vm1086, %vm1087
    %v1089 = vsel %vm1088, %v1081, %v1085
    %v1090 = vand.u32 2147483647, %v1065
    %vm1091 = vcmp.eq.f32.partialorder %v1090, 8.507059e+37
    %v1092 = vand.u32 %v1065, 2147483648
    %v1093 = vor.u32 1.1754944e-38, %v1092
    %v1094 = vsel %vm1091, %v1093, %v1089
    %v1095 = vmul.f32 1.0, %v1094
    %v1097 = vrot.slane %v1048, 6
    %v1099 = vmul.f32 %v1080, %v1097
    %v1100 = vadd.f32 %v989, %v1099
    %v1101 = vtanh.pop %v1100
    %v1102 = vsub.f32 1.0, %v1095
    %v1103 = vmul.f32 %v1102, %v1101
    %v1105 = vrot.slane %v986, 6
    %v1107 = vmul.f32 %v1095, %v1105
    %v1108 = vadd.f32 %v1103, %v1107
    %v1109 = vld [vmem:[#allocation2 + $0x18] sm:$0x30]
    %v1110 = vld [vmem:[#allocation2 + $0x20] sm:$0x30]
    %v1111 = vld [vmem:[#allocation2 + $0x28] sm:$0x30]
    %v1113 = vrot.slane %v1108, 2
    %1115 = vmatpush.msra.mxu0 %v382
    %1116 = vmatpush.msra.mxu0 %v379
    %1117 = vmatpush.msra.mxu0 %v376
    %1118 = vmatpush.msra.mxu0 %v373
    %1119 = vmatpush.msra.mxu0 %v370
    %1120 = vmatpush.msra.mxu0 %v367
    %1121 = vmatpush.msra.mxu0 %v364
    %1122 = vmatpush.msra.mxu0 %v361
    %1123 = vmatpush.msra.mxu0 %v358
    %1124 = vmatpush.msra.mxu0 %v355
    %1125 = vmatpush.msra.mxu0 %v352
    %1126 = vmatpush.msra.mxu0 %v349
    %1127 = vmatpush.msra.mxu0 %v346
    %1128 = vmatpush.msra.mxu0 %v343
    %1129 = vmatpush.msra.mxu0 %v340
    %1130 = vmatpush.msra.mxu0 %v337
    %1131 = vmatmul.f32.gmra.mxu0 %v1113
    %v1132 = vpop.f32.mrf.mxu0
    %v1133 = vadd.f32 %v388, %v1132
    %1134 = vdwg.mxu0
    %1135 = vmatpush.msra.mxu0 %v383
    %1136 = vmatpush.msra.mxu0 %v380
    %1137 = vmatpush.msra.mxu0 %v377
    %1138 = vmatpush.msra.mxu0 %v374
    %1139 = vmatpush.msra.mxu0 %v371
    %1140 = vmatpush.msra.mxu0 %v368
    %1141 = vmatpush.msra.mxu0 %v365
    %1142 = vmatpush.msra.mxu0 %v362
    %1143 = vmatpush.msra.mxu0 %v359
    %1144 = vmatpush.msra.mxu0 %v356
    %1145 = vmatpush.msra.mxu0 %v353
    %1146 = vmatpush.msra.mxu0 %v350
    %1147 = vmatpush.msra.mxu0 %v347
    %1148 = vmatpush.msra.mxu0 %v344
    %1149 = vmatpush.msra.mxu0 %v341
    %1150 = vmatpush.msra.mxu0 %v338
    %1151 = vmatmul.f32.gmra.mxu0 %v1113
    %v1152 = vpop.f32.mrf.mxu0
    %v1153 = vadd.f32 %v389, %v1152
    %1154 = vdwg.mxu0
    %1155 = vmatpush.msra.mxu0 %v384
    %1156 = vmatpush.msra.mxu0 %v381
    %1157 = vmatpush.msra.mxu0 %v378
    %1158 = vmatpush.msra.mxu0 %v375
    %1159 = vmatpush.msra.mxu0 %v372
    %1160 = vmatpush.msra.mxu0 %v369
    %1161 = vmatpush.msra.mxu0 %v366
    %1162 = vmatpush.msra.mxu0 %v363
    %1163 = vmatpush.msra.mxu0 %v360
    %1164 = vmatpush.msra.mxu0 %v357
    %1165 = vmatpush.msra.mxu0 %v354
    %1166 = vmatpush.msra.mxu0 %v351
    %1167 = vmatpush.msra.mxu0 %v348
    %1168 = vmatpush.msra.mxu0 %v345
    %1169 = vmatpush.msra.mxu0 %v342
    %1170 = vmatpush.msra.mxu0 %v339
    %1171 = vmatmul.f32.gmra.mxu0 %v1113
    %v1172 = vpop.f32.mrf.mxu0
    %v1173 = vadd.f32 %v390, %v1172
    %1174 = vdwg.mxu0
    %v1177 = vrot.slane %v1133, 4
    %v1178 = vrot.slane %v1153, 4
    %v1181 = vadd.f32 %v1109, %v1177
    %v1182 = vadd.f32 %v1110, %v1178
    %v1183 = vxor.u32 %v1181, 2147483648
    %v1184 = vxor.u32 %v1182, 2147483648
    %v1185 = vmul.f32 %v1183, 1.442695
    %v1186 = vpow.pop %v1185
    %v1187 = vmul.f32 %v1184, 1.442695
    %v1188 = vpow.pop %v1187
    %v1189 = vadd.f32 %v1186, 1.0
    %v1190 = vadd.f32 %v1188, 1.0
    %v1191 = vrcp.pop %v1189
    %v1192 = vmul.f32 %v1189, %v1191
    %v1193 = vsub.f32 1.0, %v1192
    %v1194 = vmul.f32 %v1191, %v1193
    %v1195 = vadd.f32 %v1191, %v1194
    %vm1196 = vweird.f32 %v1189
    %vm1197 = vweird.f32 %v1191
    %vm1198 = vmor %vm1196, %vm1197
    %v1199 = vsel %vm1198, %v1191, %v1195
    %v1200 = vand.u32 2147483647, %v1189
    %vm1201 = vcmp.eq.f32.partialorder %v1200, 8.507059e+37
    %v1202 = vand.u32 %v1189, 2147483648
    %v1203 = vor.u32 1.1754944e-38, %v1202
    %v1204 = vsel %vm1201, %v1203, %v1199
    %v1205 = vmul.f32 1.0, %v1204
    %v1206 = vrcp.pop %v1190
    %v1207 = vmul.f32 %v1190, %v1206
    %v1208 = vsub.f32 1.0, %v1207
    %v1209 = vmul.f32 %v1206, %v1208
    %v1210 = vadd.f32 %v1206, %v1209
    %vm1211 = vweird.f32 %v1190
    %vm1212 = vweird.f32 %v1206
    %vm1213 = vmor %vm1211, %vm1212
    %v1214 = vsel %vm1213, %v1206, %v1210
    %v1215 = vand.u32 2147483647, %v1190
    %vm1216 = vcmp.eq.f32.partialorder %v1215, 8.507059e+37
    %v1217 = vand.u32 %v1190, 2147483648
    %v1218 = vor.u32 1.1754944e-38, %v1217
    %v1219 = vsel %vm1216, %v1218, %v1214
    %v1220 = vmul.f32 1.0, %v1219
    %v1222 = vrot.slane %v1173, 4
    %v1224 = vmul.f32 %v1205, %v1222
    %v1225 = vadd.f32 %v1111, %v1224
    %v1226 = vtanh.pop %v1225
    %v1227 = vsub.f32 1.0, %v1220
    %v1228 = vmul.f32 %v1227, %v1226
    %v1229 = vrot.slane %v1108, 6
    %v1231 = vmul.f32 %v1220, %v1229
    %v1232 = vadd.f32 %v1228, %v1231
    %v1233 = vld [vmem:[#allocation2 + $0x18] sm:$0xc0]
    %v1234 = vld [vmem:[#allocation2 + $0x20] sm:$0xc0]
    %v1235 = vld [vmem:[#allocation2 + $0x28] sm:$0xc0]
    %v1237 = vrot.slane %v1232, 4
    %1239 = vmatpush.msra.mxu0 %v382
    %1240 = vmatpush.msra.mxu0 %v379
    %1241 = vmatpush.msra.mxu0 %v376
    %1242 = vmatpush.msra.mxu0 %v373
    %1243 = vmatpush.msra.mxu0 %v370
    %1244 = vmatpush.msra.mxu0 %v367
    %1245 = vmatpush.msra.mxu0 %v364
    %1246 = vmatpush.msra.mxu0 %v361
    %1247 = vmatpush.msra.mxu0 %v358
    %1248 = vmatpush.msra.mxu0 %v355
    %1249 = vmatpush.msra.mxu0 %v352
    %1250 = vmatpush.msra.mxu0 %v349
    %1251 = vmatpush.msra.mxu0 %v346
    %1252 = vmatpush.msra.mxu0 %v343
    %1253 = vmatpush.msra.mxu0 %v340
    %1254 = vmatpush.msra.mxu0 %v337
    %1255 = vmatmul.f32.gmra.mxu0 %v1237
    %v1256 = vpop.f32.mrf.mxu0
    %v1257 = vadd.f32 %v388, %v1256
    %1258 = vdwg.mxu0
    %1259 = vmatpush.msra.mxu0 %v383
    %1260 = vmatpush.msra.mxu0 %v380
    %1261 = vmatpush.msra.mxu0 %v377
    %1262 = vmatpush.msra.mxu0 %v374
    %1263 = vmatpush.msra.mxu0 %v371
    %1264 = vmatpush.msra.mxu0 %v368
    %1265 = vmatpush.msra.mxu0 %v365
    %1266 = vmatpush.msra.mxu0 %v362
    %1267 = vmatpush.msra.mxu0 %v359
    %1268 = vmatpush.msra.mxu0 %v356
    %1269 = vmatpush.msra.mxu0 %v353
    %1270 = vmatpush.msra.mxu0 %v350
    %1271 = vmatpush.msra.mxu0 %v347
    %1272 = vmatpush.msra.mxu0 %v344
    %1273 = vmatpush.msra.mxu0 %v341
    %1274 = vmatpush.msra.mxu0 %v338
    %1275 = vmatmul.f32.gmra.mxu0 %v1237
    %v1276 = vpop.f32.mrf.mxu0
    %v1277 = vadd.f32 %v389, %v1276
    %1278 = vdwg.mxu0
    %1279 = vmatpush.msra.mxu0 %v384
    %1280 = vmatpush.msra.mxu0 %v381
    %1281 = vmatpush.msra.mxu0 %v378
    %1282 = vmatpush.msra.mxu0 %v375
    %1283 = vmatpush.msra.mxu0 %v372
    %1284 = vmatpush.msra.mxu0 %v369
    %1285 = vmatpush.msra.mxu0 %v366
    %1286 = vmatpush.msra.mxu0 %v363
    %1287 = vmatpush.msra.mxu0 %v360
    %1288 = vmatpush.msra.mxu0 %v357
    %1289 = vmatpush.msra.mxu0 %v354
    %1290 = vmatpush.msra.mxu0 %v351
    %1291 = vmatpush.msra.mxu0 %v348
    %1292 = vmatpush.msra.mxu0 %v345
    %1293 = vmatpush.msra.mxu0 %v342
    %1294 = vmatpush.msra.mxu0 %v339
    %1295 = vmatmul.f32.gmra.mxu0 %v1237
    %v1296 = vpop.f32.mrf.mxu0
    %v1297 = vadd.f32 %v390, %v1296
    %1298 = vdwg.mxu0
    %v1301 = vrot.slane %v1257, 2
    %v1302 = vrot.slane %v1277, 2
    %v1305 = vadd.f32 %v1233, %v1301
    %v1306 = vadd.f32 %v1234, %v1302
    %v1307 = vxor.u32 %v1305, 2147483648
    %v1308 = vxor.u32 %v1306, 2147483648
    %v1309 = vmul.f32 %v1307, 1.442695
    %v1310 = vpow.pop %v1309
    %v1311 = vmul.f32 %v1308, 1.442695
    %v1312 = vpow.pop %v1311
    %v1313 = vadd.f32 %v1310, 1.0
    %v1314 = vadd.f32 %v1312, 1.0
    %v1315 = vrcp.pop %v1313
    %v1316 = vmul.f32 %v1313, %v1315
    %v1317 = vsub.f32 1.0, %v1316
    %v1318 = vmul.f32 %v1315, %v1317
    %v1319 = vadd.f32 %v1315, %v1318
    %vm1320 = vweird.f32 %v1313
    %vm1321 = vweird.f32 %v1315
    %vm1322 = vmor %vm1320, %vm1321
    %v1323 = vsel %vm1322, %v1315, %v1319
    %v1324 = vand.u32 2147483647, %v1313
    %vm1325 = vcmp.eq.f32.partialorder %v1324, 8.507059e+37
    %v1326 = vand.u32 %v1313, 2147483648
    %v1327 = vor.u32 1.1754944e-38, %v1326
    %v1328 = vsel %vm1325, %v1327, %v1323
    %v1329 = vmul.f32 1.0, %v1328
    %v1330 = vrcp.pop %v1314
    %v1331 = vmul.f32 %v1314, %v1330
    %v1332 = vsub.f32 1.0, %v1331
    %v1333 = vmul.f32 %v1330, %v1332
    %v1334 = vadd.f32 %v1330, %v1333
    %vm1335 = vweird.f32 %v1314
    %vm1336 = vweird.f32 %v1330
    %vm1337 = vmor %vm1335, %vm1336
    %v1338 = vsel %vm1337, %v1330, %v1334
    %v1339 = vand.u32 2147483647, %v1314
    %vm1340 = vcmp.eq.f32.partialorder %v1339, 8.507059e+37
    %v1341 = vand.u32 %v1314, 2147483648
    %v1342 = vor.u32 1.1754944e-38, %v1341
    %v1343 = vsel %vm1340, %v1342, %v1338
    %v1344 = vmul.f32 1.0, %v1343
    %v1346 = vrot.slane %v1297, 2
    %v1348 = vmul.f32 %v1329, %v1346
    %v1349 = vadd.f32 %v1235, %v1348
    %v1350 = vtanh.pop %v1349
    %v1351 = vsub.f32 1.0, %v1344
    %v1352 = vmul.f32 %v1351, %v1350
    %v1353 = vrot.slane %v1232, 6
    %v1355 = vmul.f32 %v1344, %v1353
    %v1356 = vadd.f32 %v1352, %v1355
    %v1357 = vld [vmem:[%s1] sm:$0xff]
    %v1358 = vld [vmem:[%s1 + $0x8] sm:$0xff]
    %v1359 = vld [vmem:[#allocation9] sm:$0xff]
    %v1360 = vld [vmem:[#allocation9 + $0x8] sm:$0xff]
    %v1361 = vld [vmem:[#allocation9 + $0x10] sm:$0xff]
    %v1362 = vld [vmem:[#allocation9 + $0x18] sm:$0xff]
    %vm1363 = vcmask 261120
    %v1365 = vsel %vm1363, %v1357, 0
    %v1368 = vsel %vm1363, %v1358, 0
    %1370 = vmatpush.msra.mxu0 0.0
    %1371 = vmatpush.msra.mxu0 0.0
    %1372 = vmatpush.msra.mxu0 0.0
    %1373 = vmatpush.msra.mxu0 0.0
    %1374 = vmatpush.msra.mxu0 0.0
    %1375 = vmatpush.msra.mxu0 0.0
    %1376 = vmatpush.msra.mxu0 0.0
    %1377 = vmatpush.msra.mxu0 0.0
    %1378 = vmatpush.msra.mxu0 0.0
    %1379 = vmatpush.msra.mxu0 0.0
    %1380 = vmatpush.msra.mxu0 0.0
    %1381 = vmatpush.msra.mxu0 0.0
    %1382 = vmatpush.msra.mxu0 %v1362
    %1383 = vmatpush.msra.mxu0 %v1361
    %1384 = vmatpush.msra.mxu0 %v1360
    %1385 = vmatpush.msra.mxu0 %v1359
    %1386 = vmatmul.f32.gmra.mxu0 %v1365
    %v1387 = vpop.f32.mrf.mxu0
    %v1388 = vadd.f32 0.0, %v1387
    %1389 = vmatmul.f32.gmra.mxu0 %v1368
    %v1390 = vpop.f32.mrf.mxu0
    %v1391 = vadd.f32 0.0, %v1390
    %1392 = vdwg.mxu0
    %v1393 = vmax.f32 %v1388, 0.0
    %v1394 = vmax.f32 %v1391, 0.0
    %v1395 = vld [vmem:[#allocation9 + $0x20] sm:$0xff]
    %v1396 = vld [vmem:[#allocation9 + $0x28] sm:$0xff]
    %v1397 = vld [vmem:[#allocation9 + $0x30] sm:$0xff]
    %v1398 = vld [vmem:[#allocation9 + $0x38] sm:$0xff]
    %v1399 = vld [vmem:[#allocation9 + $0x40] sm:$0xff]
    %v1400 = vld [vmem:[#allocation9 + $0x48] sm:$0xff]
    %v1401 = vld [vmem:[#allocation9 + $0x50] sm:$0xff]
    %v1402 = vld [vmem:[#allocation9 + $0x58] sm:$0xff]
    %v1403 = vld [vmem:[#allocation9 + $0x60] sm:$0xff]
    %v1404 = vld [vmem:[#allocation9 + $0x68] sm:$0xff]
    %v1405 = vld [vmem:[#allocation9 + $0x70] sm:$0xff]
    %v1406 = vld [vmem:[#allocation9 + $0x78] sm:$0xff]
    %v1407 = vld [vmem:[#allocation9 + $0x80] sm:$0xff]
    %v1408 = vld [vmem:[#allocation9 + $0x88] sm:$0xff]
    %v1409 = vld [vmem:[#allocation9 + $0x90] sm:$0xff]
    %v1410 = vld [vmem:[#allocation9 + $0x98] sm:$0xff]
    %v1412 = vrot.slane %v1356, 6
    %1414 = vmatpush.msra.mxu0 %v1410
    %1415 = vmatpush.msra.mxu0 %v1409
    %1416 = vmatpush.msra.mxu0 %v1408
    %1417 = vmatpush.msra.mxu0 %v1407
    %1418 = vmatpush.msra.mxu0 %v1406
    %1419 = vmatpush.msra.mxu0 %v1405
    %1420 = vmatpush.msra.mxu0 %v1404
    %1421 = vmatpush.msra.mxu0 %v1403
    %1422 = vmatpush.msra.mxu0 %v1402
    %1423 = vmatpush.msra.mxu0 %v1401
    %1424 = vmatpush.msra.mxu0 %v1400
    %1425 = vmatpush.msra.mxu0 %v1399
    %1426 = vmatpush.msra.mxu0 %v1398
    %1427 = vmatpush.msra.mxu0 %v1397
    %1428 = vmatpush.msra.mxu0 %v1396
    %1429 = vmatpush.msra.mxu0 %v1395
    %1430 = vmatmul.f32.gmra.mxu0 %v1412
    %v1431 = vpop.f32.mrf.mxu0
    %v1432 = vadd.f32 0.0, %v1431
    %1433 = vdwg.mxu0
    %v1434 = vmax.f32 %v1432, 0.0
    %v1435 = vld [vmem:[#allocation9 + $0xa0] sm:$0x1]
    %v1437 = vrot.slane %v1434, 1
    %v1438 = vperm.slane %v1434, 0
    %v1439 = vperm.slane %v1437, 0
    %v1442 = vmul.f32 %v1393, %v1438
    %v1443 = vmul.f32 %v1394, %v1439
    %v1444 = vperm.slane %v1435, 0
    %v1445 = vmul.f32 %v1442, %v1444
    %v1446 = vmul.f32 %v1443, %v1444
    %1447 = vadd.xlane.f32.xlu0 %v1445
    %v1448 = vpop.xlane.xlu0 %1447
    %1449 = vadd.xlane.f32.xlu0 %v1446
    %v1450 = vpop.xlane.xlu0 %1449
    %v1453 = vperm.slane %v1448, %v72
    %v1454 = vperm.slane %v1450, %v72
    %vm1455 = vcmask 1041409
    %v1456 = vsel %vm1455, %v1454, %v1453
    %vm1458 = vcmask 58368
    %v1459 = vsel %vm1458, %v1456, -inf
    %1460 = vmax.xlane.f32.xlu0 %v1459
    %v1461 = vpop.xlane.xlu0 %1460
    %v1463 = vperm.slane %v1461, 0
    %v1464 = vperm.slane %v1461, 1
    %v1467 = vsub.f32 %v1448, %v1463
    %v1468 = vsub.f32 %v1450, %v1464
    %v1469 = vmul.f32 %v1467, 1.442695
    %v1470 = vpow.pop %v1469
    %v1471 = vmul.f32 %v1468, 1.442695
    %v1472 = vpow.pop %v1471
    %1475 = vset.pattern.permute.xlu0 0
    %1476 = vperm.xlu0 %1475, %v1470
    %v1477 = vpop.permute.xlu0 %1476
    %1478 = vset.pattern.permute.xlu0 0
    %1479 = vperm.xlu0 %1478, %v1472
    %v1480 = vpop.permute.xlu0 %1479
    %v1481 = vperm.slane %v1477, %v72
    %v1482 = vperm.slane %v1480, %v72
    %v1483 = vsel %vm1455, %v1482, %v1481
    %v1485 = vsel %vm1458, %v1483, 0.0
    %1486 = vadd.xlane.f32.xlu0 %v1485
    %v1487 = vpop.xlane.xlu0 %1486
    %v1489 = vperm.slane %v1487, 0
    %v1490 = vperm.slane %v1487, 1
    %v1493 = vrcp.pop %v1489
    %v1494 = vmul.f32 %v1489, %v1493
    %v1495 = vsub.f32 1.0, %v1494
    %v1496 = vmul.f32 %v1493, %v1495
    %v1497 = vadd.f32 %v1493, %v1496
    %vm1498 = vweird.f32 %v1489
    %vm1499 = vweird.f32 %v1493
    %vm1500 = vmor %vm1498, %vm1499
    %v1501 = vsel %vm1500, %v1493, %v1497
    %v1502 = vand.u32 2147483647, %v1489
    %vm1503 = vcmp.eq.f32.partialorder %v1502, 8.507059e+37
    %v1504 = vand.u32 %v1489, 2147483648
    %v1505 = vor.u32 1.1754944e-38, %v1504
    %v1506 = vsel %vm1503, %v1505, %v1501
    %v1507 = vmul.f32 %v1470, %v1506
    %v1508 = vrcp.pop %v1490
    %v1509 = vmul.f32 %v1490, %v1508
    %v1510 = vsub.f32 1.0, %v1509
    %v1511 = vmul.f32 %v1508, %v1510
    %v1512 = vadd.f32 %v1508, %v1511
    %vm1513 = vweird.f32 %v1490
    %vm1514 = vweird.f32 %v1508
    %vm1515 = vmor %vm1513, %vm1514
    %v1516 = vsel %vm1515, %v1508, %v1512
    %v1517 = vand.u32 2147483647, %v1490
    %vm1518 = vcmp.eq.f32.partialorder %v1517, 8.507059e+37
    %v1519 = vand.u32 %v1490, 2147483648
    %v1520 = vor.u32 1.1754944e-38, %v1519
    %v1521 = vsel %vm1518, %v1520, %v1516
    %v1522 = vmul.f32 %v1472, %v1521
    %1524 = vset.pattern.permute.xlu0 0
    %1525 = vperm.xlu0 %1524, %v1507
    %v1526 = vpop.permute.xlu0 %1525
    %1529 = vset.pattern.permute.xlu0 0
    %1530 = vperm.xlu0 %1529, %v1522
    %v1531 = vpop.permute.xlu0 %1530
    %v1533 = vmul.f32 %v1526, %v1357
    %v1534 = vmul.f32 %v1531, %v1358
    %v1535 = vsel %vm1363, %v1533, 0.0
    %v1536 = vrot.slane %v1535, 4
    %v1537 = vadd.f32 %v1535, %v1536
    %v1538 = vrot.slane %v1537, 2
    %v1539 = vadd.f32 %v1537, %v1538
    %v1540 = vrot.slane %v1539, 1
    %v1541 = vadd.f32 %v1539, %v1540
    %v1542 = vsel %vm1363, %v1534, 0.0
    %v1543 = vrot.slane %v1542, 4
    %v1544 = vadd.f32 %v1542, %v1543
    %v1545 = vrot.slane %v1544, 2
    %v1546 = vadd.f32 %v1544, %v1545
    %v1547 = vrot.slane %v1546, 1
    %v1548 = vadd.f32 %v1546, %v1547
    %v1549 = vld [vmem:[#allocation9 + $0xa8] sm:$0xff]
    %v1550 = vld [vmem:[#allocation9 + $0xb0] sm:$0xff]
    %v1551 = vld [vmem:[#allocation9 + $0xb8] sm:$0xff]
    %v1552 = vld [vmem:[#allocation9 + $0xc0] sm:$0xff]
    %v1553 = vld [vmem:[#allocation9 + $0xc8] sm:$0xff]
    %v1554 = vld [vmem:[#allocation9 + $0xd0] sm:$0xff]
    %v1555 = vld [vmem:[#allocation9 + $0xd8] sm:$0xff]
    %v1556 = vld [vmem:[#allocation9 + $0xe0] sm:$0xff]
    %v1557 = vld [vmem:[#allocation9 + $0xe8] sm:$0xff]
    %v1558 = vld [vmem:[#allocation9 + $0xf0] sm:$0xff]
    %v1559 = vld [vmem:[#allocation9 + $0xf8] sm:$0xff]
    %v1560 = vld [vmem:[#allocation9 + $0x100] sm:$0xff]
    %v1561 = vld [vmem:[#allocation9 + $0x108] sm:$0xff]
    %v1562 = vld [vmem:[#allocation9 + $0x110] sm:$0xff]
    %v1563 = vld [vmem:[#allocation9 + $0x118] sm:$0xff]
    %v1564 = vld [vmem:[#allocation9 + $0x120] sm:$0xff]
    %v1565 = vld [vmem:[#allocation9 + $0x128] sm:$0x1]
    %v1566 = vperm.slane %v1565, 0
    %1567 = vmatpush.msra.mxu0 %v1564
    %1568 = vmatpush.msra.mxu0 %v1563
    %1569 = vmatpush.msra.mxu0 %v1562
    %1570 = vmatpush.msra.mxu0 %v1561
    %1571 = vmatpush.msra.mxu0 %v1560
    %1572 = vmatpush.msra.mxu0 %v1559
    %1573 = vmatpush.msra.mxu0 %v1558
    %1574 = vmatpush.msra.mxu0 %v1557
    %1575 = vmatpush.msra.mxu0 %v1556
    %1576 = vmatpush.msra.mxu0 %v1555
    %1577 = vmatpush.msra.mxu0 %v1554
    %1578 = vmatpush.msra.mxu0 %v1553
    %1579 = vmatpush.msra.mxu0 %v1552
    %1580 = vmatpush.msra.mxu0 %v1551
    %1581 = vmatpush.msra.mxu0 %v1550
    %1582 = vmatpush.msra.mxu0 %v1549
    %1583 = vmatmul.f32.gmra.mxu0 %v1412
    %v1584 = vpop.f32.mrf.mxu0
    %v1585 = vadd.f32 %v1566, %v1584
    %1586 = vdwg.mxu0
    %v1587 = vmax.f32 %v1585, 0.0
    %v1588 = vld [vmem:[#allocation9 + $0x130] sm:$0xff]
    %v1589 = vld [vmem:[#allocation9 + $0x138] sm:$0xff]
    %v1590 = vld [vmem:[#allocation9 + $0x140] sm:$0xff]
    %v1591 = vld [vmem:[#allocation9 + $0x148] sm:$0xff]
    %v1592 = vld [vmem:[#allocation9 + $0x150] sm:$0x1]
    %v1593 = vperm.slane %v1592, 0
    %v1596 = vsel %vm1455, %v1548, %v1541
    %v1597 = vsel %vm1363, %v1596, 0
    %1599 = vmatpush.msra.mxu0 0.0
    %1600 = vmatpush.msra.mxu0 0.0
    %1601 = vmatpush.msra.mxu0 0.0
    %1602 = vmatpush.msra.mxu0 0.0
    %1603 = vmatpush.msra.mxu0 0.0
    %1604 = vmatpush.msra.mxu0 0.0
    %1605 = vmatpush.msra.mxu0 0.0
    %1606 = vmatpush.msra.mxu0 0.0
    %1607 = vmatpush.msra.mxu0 0.0
    %1608 = vmatpush.msra.mxu0 0.0
    %1609 = vmatpush.msra.mxu0 0.0
    %1610 = vmatpush.msra.mxu0 0.0
    %1611 = vmatpush.msra.mxu0 %v1591
    %1612 = vmatpush.msra.mxu0 %v1590
    %1613 = vmatpush.msra.mxu0 %v1589
    %1614 = vmatpush.msra.mxu0 %v1588
    %1615 = vmatmul.f32.gmra.mxu0 %v1597
    %v1616 = vpop.f32.mrf.mxu0
    %v1617 = vadd.f32 %v1593, %v1616
    %1618 = vdwg.mxu0
    %v1619 = vmax.f32 %v1617, 0.0
    %v1620 = vmul.f32 %v1587, %v1619
    %v1621 = vld [vmem:[#allocation9 + $0x158] sm:$0xff]
    %v1622 = vld [vmem:[#allocation9 + $0x160] sm:$0xff]
    %v1623 = vld [vmem:[#allocation9 + $0x168] sm:$0xff]
    %v1624 = vld [vmem:[#allocation9 + $0x170] sm:$0xff]
    %v1625 = vld [vmem:[#allocation9 + $0x178] sm:$0xff]
    %v1626 = vld [vmem:[#allocation9 + $0x180] sm:$0xff]
    %v1627 = vld [vmem:[#allocation9 + $0x188] sm:$0xff]
    %v1628 = vld [vmem:[#allocation9 + $0x190] sm:$0xff]
    %v1629 = vld [vmem:[#allocation9 + $0x198] sm:$0xff]
    %v1630 = vld [vmem:[#allocation9 + $0x1a0] sm:$0xff]
    %v1631 = vld [vmem:[#allocation9 + $0x1a8] sm:$0xff]
    %v1632 = vld [vmem:[#allocation9 + $0x1b0] sm:$0xff]
    %v1633 = vld [vmem:[#allocation9 + $0x1b8] sm:$0xff]
    %v1634 = vld [vmem:[#allocation9 + $0x1c0] sm:$0xff]
    %v1635 = vld [vmem:[#allocation9 + $0x1c8] sm:$0xff]
    %v1636 = vld [vmem:[#allocation9 + $0x1d0] sm:$0xff]
    %v1637 = vld [vmem:[#allocation9 + $0x1d8] sm:$0x1]
    %v1638 = vperm.slane %v1637, 0
    %1639 = vmatpush.msra.mxu0 %v1636
    %1640 = vmatpush.msra.mxu0 %v1635
    %1641 = vmatpush.msra.mxu0 %v1634
    %1642 = vmatpush.msra.mxu0 %v1633
    %1643 = vmatpush.msra.mxu0 %v1632
    %1644 = vmatpush.msra.mxu0 %v1631
    %1645 = vmatpush.msra.mxu0 %v1630
    %1646 = vmatpush.msra.mxu0 %v1629
    %1647 = vmatpush.msra.mxu0 %v1628
    %1648 = vmatpush.msra.mxu0 %v1627
    %1649 = vmatpush.msra.mxu0 %v1626
    %1650 = vmatpush.msra.mxu0 %v1625
    %1651 = vmatpush.msra.mxu0 %v1624
    %1652 = vmatpush.msra.mxu0 %v1623
    %1653 = vmatpush.msra.mxu0 %v1622
    %1654 = vmatpush.msra.mxu0 %v1621
    %1655 = vmatmul.f32.gmra.mxu0 %v1620
    %v1656 = vpop.f32.mrf.mxu0
    %v1657 = vadd.f32 %v1638, %v1656
    %1658 = vdwg.mxu0
    %v1659 = vmax.f32 %v1657, 0.0
    %v1660 = vld [vmem:[#allocation9 + $0x1e0] sm:$0xff]
    %v1661 = vld [vmem:[#allocation9 + $0x1e8] sm:$0xff]
    %v1662 = vld [vmem:[#allocation9 + $0x1f0] sm:$0xff]
    %v1663 = vld [vmem:[#allocation9 + $0x1f8] sm:$0xff]
    %v1664 = vld [vmem:[#allocation9 + $0x200] sm:$0xff]
    %v1665 = vld [vmem:[#allocation9 + $0x208] sm:$0xff]
    %v1666 = vld [vmem:[#allocation9 + $0x210] sm:$0xff]
    %v1667 = vld [vmem:[#allocation9 + $0x218] sm:$0xff]
    %v1668 = vld [vmem:[#allocation9 + $0x220] sm:$0xff]
    %v1669 = vld [vmem:[#allocation9 + $0x228] sm:$0xff]
    %v1670 = vld [vmem:[#allocation9 + $0x230] sm:$0xff]
    %v1671 = vld [vmem:[#allocation9 + $0x238] sm:$0xff]
    %v1672 = vld [vmem:[#allocation9 + $0x240] sm:$0xff]
    %v1673 = vld [vmem:[#allocation9 + $0x248] sm:$0xff]
    %v1674 = vld [vmem:[#allocation9 + $0x250] sm:$0xff]
    %v1675 = vld [vmem:[#allocation9 + $0x258] sm:$0xff]
    %v1676 = vld [vmem:[#allocation9 + $0x260] sm:$0x1]
    %v1677 = vperm.slane %v1676, 0
    %1678 = vmatpush.msra.mxu0 %v1675
    %1679 = vmatpush.msra.mxu0 %v1674
    %1680 = vmatpush.msra.mxu0 %v1673
    %1681 = vmatpush.msra.mxu0 %v1672
    %1682 = vmatpush.msra.mxu0 %v1671
    %1683 = vmatpush.msra.mxu0 %v1670
    %1684 = vmatpush.msra.mxu0 %v1669
    %1685 = vmatpush.msra.mxu0 %v1668
    %1686 = vmatpush.msra.mxu0 %v1667
    %1687 = vmatpush.msra.mxu0 %v1666
    %1688 = vmatpush.msra.mxu0 %v1665
    %1689 = vmatpush.msra.mxu0 %v1664
    %1690 = vmatpush.msra.mxu0 %v1663
    %1691 = vmatpush.msra.mxu0 %v1662
    %1692 = vmatpush.msra.mxu0 %v1661
    %1693 = vmatpush.msra.mxu0 %v1660
    %1694 = vmatmul.f32.gmra.mxu0 %v1659
    %v1695 = vpop.f32.mrf.mxu0
    %v1696 = vadd.f32 %v1677, %v1695
    %1697 = vdwg.mxu0
    %v1698 = vld [vmem:[#allocation7 + $0x100] sm:$0xff]
    %v1699 = vld [vmem:[#allocation7 + $0x108] sm:$0xff]
    %v1700 = vld [vmem:[#allocation7 + $0x110] sm:$0xff]
    %v1701 = vld [vmem:[#allocation7 + $0x118] sm:$0xff]
    %v1702 = vld [vmem:[#allocation7 + $0x120] sm:$0xff]
    %v1703 = vld [vmem:[#allocation7 + $0x128] sm:$0xff]
    %v1704 = vld [vmem:[#allocation7 + $0x130] sm:$0xff]
    %v1705 = vld [vmem:[#allocation7 + $0x138] sm:$0xff]
    %v1706 = vld [vmem:[#allocation7 + $0x140] sm:$0xff]
    %v1707 = vld [vmem:[#allocation7 + $0x148] sm:$0xff]
    %v1708 = vld [vmem:[#allocation7 + $0x150] sm:$0xff]
    %v1709 = vld [vmem:[#allocation7 + $0x158] sm:$0xff]
    %v1710 = vld [vmem:[#allocation7 + $0x160] sm:$0xff]
    %v1711 = vld [vmem:[#allocation7 + $0x168] sm:$0xff]
    %v1712 = vld [vmem:[#allocation7 + $0x170] sm:$0xff]
    %v1713 = vld [vmem:[#allocation7 + $0x178] sm:$0xff]
    %v1714 = vld [vmem:[#allocation7 + $0x180] sm:$0xff]
    %v1715 = vld [vmem:[#allocation7 + $0x188] sm:$0xff]
    %v1716 = vld [vmem:[#allocation7 + $0x190] sm:$0xff]
    %v1717 = vld [vmem:[#allocation7 + $0x198] sm:$0xff]
    %v1718 = vld [vmem:[#allocation7 + $0x1a0] sm:$0xff]
    %v1719 = vld [vmem:[#allocation7 + $0x1a8] sm:$0xff]
    %v1720 = vld [vmem:[#allocation7 + $0x1b0] sm:$0xff]
    %v1721 = vld [vmem:[#allocation7 + $0x1b8] sm:$0xff]
    %v1722 = vld [vmem:[#allocation7 + $0x1c0] sm:$0xff]
    %v1723 = vld [vmem:[#allocation7 + $0x1c8] sm:$0xff]
    %v1724 = vld [vmem:[#allocation7 + $0x1d0] sm:$0xff]
    %v1725 = vld [vmem:[#allocation7 + $0x1d8] sm:$0xff]
    %v1726 = vld [vmem:[#allocation7 + $0x1e0] sm:$0xff]
    %v1727 = vld [vmem:[#allocation7 + $0x1e8] sm:$0xff]
    %v1728 = vld [vmem:[#allocation7 + $0x1f0] sm:$0xff]
    %v1729 = vld [vmem:[#allocation7 + $0x1f8] sm:$0xff]
    %v1730 = vld [vmem:[#allocation7 + $0x200] sm:$0xff]
    %v1731 = vld [vmem:[#allocation7 + $0x208] sm:$0xff]
    %v1732 = vld [vmem:[#allocation7 + $0x210] sm:$0xff]
    %v1733 = vld [vmem:[#allocation7 + $0x218] sm:$0xff]
    %v1734 = vld [vmem:[#allocation7 + $0x220] sm:$0xff]
    %v1735 = vld [vmem:[#allocation7 + $0x228] sm:$0xff]
    %v1736 = vld [vmem:[#allocation7 + $0x230] sm:$0xff]
    %v1737 = vld [vmem:[#allocation7 + $0x238] sm:$0xff]
    %v1738 = vld [vmem:[#allocation7 + $0x240] sm:$0xff]
    %v1739 = vld [vmem:[#allocation7 + $0x248] sm:$0xff]
    %v1740 = vld [vmem:[#allocation7 + $0x250] sm:$0xff]
    %v1741 = vld [vmem:[#allocation7 + $0x258] sm:$0xff]
    %v1742 = vld [vmem:[#allocation7 + $0x260] sm:$0xff]
    %v1743 = vld [vmem:[#allocation7 + $0x268] sm:$0xff]
    %v1744 = vld [vmem:[#allocation7 + $0x270] sm:$0xff]
    %v1745 = vld [vmem:[#allocation7 + $0x278] sm:$0xff]
    %v1746 = vld [vmem:[#allocation7 + $0x280] sm:$0xff]
    %v1747 = vld [vmem:[#allocation7 + $0x288] sm:$0xff]
    %v1748 = vld [vmem:[#allocation7 + $0x290] sm:$0xff]
    %v1749 = vld [vmem:[#allocation7 + $0x298] sm:$0xff]
    %v1750 = vld [vmem:[#allocation7 + $0x2a0] sm:$0xff]
    %v1751 = vld [vmem:[#allocation7 + $0x2a8] sm:$0xff]
    %v1752 = vld [vmem:[#allocation7 + $0x2b0] sm:$0xff]
    %v1753 = vld [vmem:[#allocation7 + $0x2b8] sm:$0xff]
    %v1754 = vld [vmem:[#allocation7 + $0x2c0] sm:$0xff]
    %v1755 = vld [vmem:[#allocation7 + $0x2c8] sm:$0xff]
    %v1756 = vld [vmem:[#allocation7 + $0x2d0] sm:$0xff]
    %v1757 = vld [vmem:[#allocation7 + $0x2d8] sm:$0xff]
    %v1758 = vld [vmem:[#allocation7 + $0x2e0] sm:$0xff]
    %v1759 = vld [vmem:[#allocation7 + $0x2e8] sm:$0xff]
    %v1760 = vld [vmem:[#allocation7 + $0x2f0] sm:$0xff]
    %v1761 = vld [vmem:[#allocation7 + $0x2f8] sm:$0xff]
    %s1762 = scalar_lea.vmem [#allocation7], 768
    %v1763 = vld [vmem:[%s1762] ss:$8 sm:$0xf]
    %v1765 = vperm.slane %v1763, 0
    %v1766 = vperm.slane %v1763, 1
    %v1767 = vperm.slane %v1763, 2
    %v1768 = vperm.slane %v1763, 3
    %v1773 = vld [vmem:[#allocation3] sm:$0x3]
    %v1774 = vld [vmem:[#allocation3 + $0x8] sm:$0x3]
    %v1775 = vld [vmem:[#allocation3 + $0x10] sm:$0x3]
    %v1776 = vld [vmem:[#allocation3 + $0x18] sm:$0x3]
    %1777 = vmatpush.msra.mxu0 %v1758
    %1778 = vmatpush.msra.mxu0 %v1754
    %1779 = vmatpush.msra.mxu0 %v1750
    %1780 = vmatpush.msra.mxu0 %v1746
    %1781 = vmatpush.msra.mxu0 %v1742
    %1782 = vmatpush.msra.mxu0 %v1738
    %1783 = vmatpush.msra.mxu0 %v1734
    %1784 = vmatpush.msra.mxu0 %v1730
    %1785 = vmatpush.msra.mxu0 %v1726
    %1786 = vmatpush.msra.mxu0 %v1722
    %1787 = vmatpush.msra.mxu0 %v1718
    %1788 = vmatpush.msra.mxu0 %v1714
    %1789 = vmatpush.msra.mxu0 %v1710
    %1790 = vmatpush.msra.mxu0 %v1706
    %1791 = vmatpush.msra.mxu0 %v1702
    %1792 = vmatpush.msra.mxu0 %v1698
    %1793 = vmatmul.f32.gmra.mxu0 %v1620
    %v1794 = vpop.f32.mrf.mxu0
    %v1795 = vadd.f32 0.0, %v1794
    %1796 = vdwg.mxu0
    %1797 = vmatpush.msra.mxu0 %v1759
    %1798 = vmatpush.msra.mxu0 %v1755
    %1799 = vmatpush.msra.mxu0 %v1751
    %1800 = vmatpush.msra.mxu0 %v1747
    %1801 = vmatpush.msra.mxu0 %v1743
    %1802 = vmatpush.msra.mxu0 %v1739
    %1803 = vmatpush.msra.mxu0 %v1735
    %1804 = vmatpush.msra.mxu0 %v1731
    %1805 = vmatpush.msra.mxu0 %v1727
    %1806 = vmatpush.msra.mxu0 %v1723
    %1807 = vmatpush.msra.mxu0 %v1719
    %1808 = vmatpush.msra.mxu0 %v1715
    %1809 = vmatpush.msra.mxu0 %v1711
    %1810 = vmatpush.msra.mxu0 %v1707
    %1811 = vmatpush.msra.mxu0 %v1703
    %1812 = vmatpush.msra.mxu0 %v1699
    %1813 = vmatmul.f32.gmra.mxu0 %v1620
    %v1814 = vpop.f32.mrf.mxu0
    %v1815 = vadd.f32 0.0, %v1814
    %1816 = vdwg.mxu0
    %1817 = vmatpush.msra.mxu0 %v1760
    %1818 = vmatpush.msra.mxu0 %v1756
    %1819 = vmatpush.msra.mxu0 %v1752
    %1820 = vmatpush.msra.mxu0 %v1748
    %1821 = vmatpush.msra.mxu0 %v1744
    %1822 = vmatpush.msra.mxu0 %v1740
    %1823 = vmatpush.msra.mxu0 %v1736
    %1824 = vmatpush.msra.mxu0 %v1732
    %1825 = vmatpush.msra.mxu0 %v1728
    %1826 = vmatpush.msra.mxu0 %v1724
    %1827 = vmatpush.msra.mxu0 %v1720
    %1828 = vmatpush.msra.mxu0 %v1716
    %1829 = vmatpush.msra.mxu0 %v1712
    %1830 = vmatpush.msra.mxu0 %v1708
    %1831 = vmatpush.msra.mxu0 %v1704
    %1832 = vmatpush.msra.mxu0 %v1700
    %1833 = vmatmul.f32.gmra.mxu0 %v1620
    %v1834 = vpop.f32.mrf.mxu0
    %v1835 = vadd.f32 0.0, %v1834
    %1836 = vdwg.mxu0
    %1837 = vmatpush.msra.mxu0 %v1761
    %1838 = vmatpush.msra.mxu0 %v1757
    %1839 = vmatpush.msra.mxu0 %v1753
    %1840 = vmatpush.msra.mxu0 %v1749
    %1841 = vmatpush.msra.mxu0 %v1745
    %1842 = vmatpush.msra.mxu0 %v1741
    %1843 = vmatpush.msra.mxu0 %v1737
    %1844 = vmatpush.msra.mxu0 %v1733
    %1845 = vmatpush.msra.mxu0 %v1729
    %1846 = vmatpush.msra.mxu0 %v1725
    %1847 = vmatpush.msra.mxu0 %v1721
    %1848 = vmatpush.msra.mxu0 %v1717
    %1849 = vmatpush.msra.mxu0 %v1713
    %1850 = vmatpush.msra.mxu0 %v1709
    %1851 = vmatpush.msra.mxu0 %v1705
    %1852 = vmatpush.msra.mxu0 %v1701
    %1853 = vmatmul.f32.gmra.mxu0 %v1620
    %v1854 = vpop.f32.mrf.mxu0
    %v1855 = vadd.f32 0.0, %v1854
    %1856 = vdwg.mxu0
    %v1857 = vadd.f32 %v1773, %v1795
    %v1858 = vadd.f32 %v1774, %v1815
    %v1859 = vadd.f32 %v1775, %v1835
    %v1860 = vadd.f32 %v1776, %v1855
    %v1861 = vadd.f32 %v1857, %v1765
    %v1862 = vadd.f32 %v1858, %v1766
    %v1863 = vadd.f32 %v1859, %v1767
    %v1864 = vadd.f32 %v1860, %v1768
    %v1865 = vxor.u32 %v1861, 2147483648
    %v1866 = vxor.u32 %v1862, 2147483648
    %v1867 = vmul.f32 %v1865, 1.442695
    %v1868 = vpow.pop %v1867
    %v1869 = vmul.f32 %v1866, 1.442695
    %v1870 = vpow.pop %v1869
    %v1871 = vadd.f32 %v1868, 1.0
    %v1872 = vadd.f32 %v1870, 1.0
    %v1873 = vrcp.pop %v1871
    %v1874 = vmul.f32 %v1871, %v1873
    %v1875 = vsub.f32 1.0, %v1874
    %v1876 = vmul.f32 %v1873, %v1875
    %v1877 = vadd.f32 %v1873, %v1876
    %vm1878 = vweird.f32 %v1871
    %vm1879 = vweird.f32 %v1873
    %vm1880 = vmor %vm1878, %vm1879
    %v1881 = vsel %vm1880, %v1873, %v1877
    %v1882 = vand.u32 2147483647, %v1871
    %vm1883 = vcmp.eq.f32.partialorder %v1882, 8.507059e+37
    %v1884 = vand.u32 %v1871, 2147483648
    %v1885 = vor.u32 1.1754944e-38, %v1884
    %v1886 = vsel %vm1883, %v1885, %v1881
    %v1887 = vmul.f32 1.0, %v1886
    %v1888 = vrcp.pop %v1872
    %v1889 = vmul.f32 %v1872, %v1888
    %v1890 = vsub.f32 1.0, %v1889
    %v1891 = vmul.f32 %v1888, %v1890
    %v1892 = vadd.f32 %v1888, %v1891
    %vm1893 = vweird.f32 %v1872
    %vm1894 = vweird.f32 %v1888
    %vm1895 = vmor %vm1893, %vm1894
    %v1896 = vsel %vm1895, %v1888, %v1892
    %v1897 = vand.u32 2147483647, %v1872
    %vm1898 = vcmp.eq.f32.partialorder %v1897, 8.507059e+37
    %v1899 = vand.u32 %v1872, 2147483648
    %v1900 = vor.u32 1.1754944e-38, %v1899
    %v1901 = vsel %vm1898, %v1900, %v1896
    %v1902 = vmul.f32 1.0, %v1901
    %v1903 = vtanh.pop %v1863
    %v1904 = vxor.u32 %v1864, 2147483648
    %v1905 = vmul.f32 %v1904, 1.442695
    %v1906 = vpow.pop %v1905
    %v1907 = vadd.f32 %v1906, 1.0
    %v1908 = vrcp.pop %v1907
    %v1909 = vmul.f32 %v1907, %v1908
    %v1910 = vsub.f32 1.0, %v1909
    %v1911 = vmul.f32 %v1908, %v1910
    %v1912 = vadd.f32 %v1908, %v1911
    %vm1913 = vweird.f32 %v1907
    %vm1914 = vweird.f32 %v1908
    %vm1915 = vmor %vm1913, %vm1914
    %v1916 = vsel %vm1915, %v1908, %v1912
    %v1917 = vand.u32 2147483647, %v1907
    %vm1918 = vcmp.eq.f32.partialorder %v1917, 8.507059e+37
    %v1919 = vand.u32 %v1907, 2147483648
    %v1920 = vor.u32 1.1754944e-38, %v1919
    %v1921 = vsel %vm1918, %v1920, %v1916
    %v1922 = vmul.f32 1.0, %v1921
    %v1923 = vmul.f32 %v1902, 0.0
    %v1924 = vmul.f32 %v1887, %v1903
    %v1925 = vadd.f32 %v1923, %v1924
    %v1926 = vtanh.pop %v1925
    %v1927 = vmul.f32 %v1922, %v1926
    %1928 = vst [vmem:[#allocation4] sm:$0x3] %v1927
    %v1929 = vld [vmem:[#allocation3] sm:$0xc]
    %v1930 = vld [vmem:[#allocation3 + $0x8] sm:$0xc]
    %v1931 = vld [vmem:[#allocation3 + $0x10] sm:$0xc]
    %v1932 = vld [vmem:[#allocation3 + $0x18] sm:$0xc]
    %1933 = vmatpush.msra.mxu0 %v1758
    %1934 = vmatpush.msra.mxu0 %v1754
    %1935 = vmatpush.msra.mxu0 %v1750
    %1936 = vmatpush.msra.mxu0 %v1746
    %1937 = vmatpush.msra.mxu0 %v1742
    %1938 = vmatpush.msra.mxu0 %v1738
    %1939 = vmatpush.msra.mxu0 %v1734
    %1940 = vmatpush.msra.mxu0 %v1730
    %1941 = vmatpush.msra.mxu0 %v1726
    %1942 = vmatpush.msra.mxu0 %v1722
    %1943 = vmatpush.msra.mxu0 %v1718
    %1944 = vmatpush.msra.mxu0 %v1714
    %1945 = vmatpush.msra.mxu0 %v1710
    %1946 = vmatpush.msra.mxu0 %v1706
    %1947 = vmatpush.msra.mxu0 %v1702
    %1948 = vmatpush.msra.mxu0 %v1698
    %1949 = vmatmul.f32.gmra.mxu0 %v1927
    %v1950 = vpop.f32.mrf.mxu0
    %v1951 = vadd.f32 0.0, %v1950
    %1952 = vdwg.mxu0
    %1953 = vmatpush.msra.mxu0 %v1759
    %1954 = vmatpush.msra.mxu0 %v1755
    %1955 = vmatpush.msra.mxu0 %v1751
    %1956 = vmatpush.msra.mxu0 %v1747
    %1957 = vmatpush.msra.mxu0 %v1743
    %1958 = vmatpush.msra.mxu0 %v1739
    %1959 = vmatpush.msra.mxu0 %v1735
    %1960 = vmatpush.msra.mxu0 %v1731
    %1961 = vmatpush.msra.mxu0 %v1727
    %1962 = vmatpush.msra.mxu0 %v1723
    %1963 = vmatpush.msra.mxu0 %v1719
    %1964 = vmatpush.msra.mxu0 %v1715
    %1965 = vmatpush.msra.mxu0 %v1711
    %1966 = vmatpush.msra.mxu0 %v1707
    %1967 = vmatpush.msra.mxu0 %v1703
    %1968 = vmatpush.msra.mxu0 %v1699
    %1969 = vmatmul.f32.gmra.mxu0 %v1927
    %v1970 = vpop.f32.mrf.mxu0
    %v1971 = vadd.f32 0.0, %v1970
    %1972 = vdwg.mxu0
    %1973 = vmatpush.msra.mxu0 %v1760
    %1974 = vmatpush.msra.mxu0 %v1756
    %1975 = vmatpush.msra.mxu0 %v1752
    %1976 = vmatpush.msra.mxu0 %v1748
    %1977 = vmatpush.msra.mxu0 %v1744
    %1978 = vmatpush.msra.mxu0 %v1740
    %1979 = vmatpush.msra.mxu0 %v1736
    %1980 = vmatpush.msra.mxu0 %v1732
    %1981 = vmatpush.msra.mxu0 %v1728
    %1982 = vmatpush.msra.mxu0 %v1724
    %1983 = vmatpush.msra.mxu0 %v1720
    %1984 = vmatpush.msra.mxu0 %v1716
    %1985 = vmatpush.msra.mxu0 %v1712
    %1986 = vmatpush.msra.mxu0 %v1708
    %1987 = vmatpush.msra.mxu0 %v1704
    %1988 = vmatpush.msra.mxu0 %v1700
    %1989 = vmatmul.f32.gmra.mxu0 %v1927
    %v1990 = vpop.f32.mrf.mxu0
    %v1991 = vadd.f32 0.0, %v1990
    %1992 = vdwg.mxu0
    %1993 = vmatpush.msra.mxu0 %v1761
    %1994 = vmatpush.msra.mxu0 %v1757
    %1995 = vmatpush.msra.mxu0 %v1753
    %1996 = vmatpush.msra.mxu0 %v1749
    %1997 = vmatpush.msra.mxu0 %v1745
    %1998 = vmatpush.msra.mxu0 %v1741
    %1999 = vmatpush.msra.mxu0 %v1737
    %2000 = vmatpush.msra.mxu0 %v1733
    %2001 = vmatpush.msra.mxu0 %v1729
    %2002 = vmatpush.msra.mxu0 %v1725
    %2003 = vmatpush.msra.mxu0 %v1721
    %2004 = vmatpush.msra.mxu0 %v1717
    %2005 = vmatpush.msra.mxu0 %v1713
    %2006 = vmatpush.msra.mxu0 %v1709
    %2007 = vmatpush.msra.mxu0 %v1705
    %2008 = vmatpush.msra.mxu0 %v1701
    %2009 = vmatmul.f32.gmra.mxu0 %v1927
    %v2010 = vpop.f32.mrf.mxu0
    %v2011 = vadd.f32 0.0, %v2010
    %2012 = vdwg.mxu0
    %v2017 = vrot.slane %v1951, 6
    %v2018 = vrot.slane %v1971, 6
    %v2019 = vrot.slane %v1991, 6
    %v2020 = vrot.slane %v2011, 6
    %v2025 = vadd.f32 %v1929, %v2017
    %v2026 = vadd.f32 %v1930, %v2018
    %v2027 = vadd.f32 %v1931, %v2019
    %v2028 = vadd.f32 %v1932, %v2020
    %v2029 = vadd.f32 %v2025, %v1765
    %v2030 = vadd.f32 %v2026, %v1766
    %v2031 = vadd.f32 %v2027, %v1767
    %v2032 = vadd.f32 %v2028, %v1768
    %v2033 = vxor.u32 %v2029, 2147483648
    %v2034 = vxor.u32 %v2030, 2147483648
    %v2035 = vmul.f32 %v2033, 1.442695
    %v2036 = vpow.pop %v2035
    %v2037 = vmul.f32 %v2034, 1.442695
    %v2038 = vpow.pop %v2037
    %v2039 = vadd.f32 %v2036, 1.0
    %v2040 = vadd.f32 %v2038, 1.0
    %v2041 = vrcp.pop %v2039
    %v2042 = vmul.f32 %v2039, %v2041
    %v2043 = vsub.f32 1.0, %v2042
    %v2044 = vmul.f32 %v2041, %v2043
    %v2045 = vadd.f32 %v2041, %v2044
    %vm2046 = vweird.f32 %v2039
    %vm2047 = vweird.f32 %v2041
    %vm2048 = vmor %vm2046, %vm2047
    %v2049 = vsel %vm2048, %v2041, %v2045
    %v2050 = vand.u32 2147483647, %v2039
    %vm2051 = vcmp.eq.f32.partialorder %v2050, 8.507059e+37
    %v2052 = vand.u32 %v2039, 2147483648
    %v2053 = vor.u32 1.1754944e-38, %v2052
    %v2054 = vsel %vm2051, %v2053, %v2049
    %v2055 = vmul.f32 1.0, %v2054
    %v2056 = vrcp.pop %v2040
    %v2057 = vmul.f32 %v2040, %v2056
    %v2058 = vsub.f32 1.0, %v2057
    %v2059 = vmul.f32 %v2056, %v2058
    %v2060 = vadd.f32 %v2056, %v2059
    %vm2061 = vweird.f32 %v2040
    %vm2062 = vweird.f32 %v2056
    %vm2063 = vmor %vm2061, %vm2062
    %v2064 = vsel %vm2063, %v2056, %v2060
    %v2065 = vand.u32 2147483647, %v2040
    %vm2066 = vcmp.eq.f32.partialorder %v2065, 8.507059e+37
    %v2067 = vand.u32 %v2040, 2147483648
    %v2068 = vor.u32 1.1754944e-38, %v2067
    %v2069 = vsel %vm2066, %v2068, %v2064
    %v2070 = vmul.f32 1.0, %v2069
    %v2071 = vtanh.pop %v2031
    %v2072 = vxor.u32 %v2032, 2147483648
    %v2073 = vmul.f32 %v2072, 1.442695
    %v2074 = vpow.pop %v2073
    %v2075 = vadd.f32 %v2074, 1.0
    %v2076 = vrcp.pop %v2075
    %v2077 = vmul.f32 %v2075, %v2076
    %v2078 = vsub.f32 1.0, %v2077
    %v2079 = vmul.f32 %v2076, %v2078
    %v2080 = vadd.f32 %v2076, %v2079
    %vm2081 = vweird.f32 %v2075
    %vm2082 = vweird.f32 %v2076
    %vm2083 = vmor %vm2081, %vm2082
    %v2084 = vsel %vm2083, %v2076, %v2080
    %v2085 = vand.u32 2147483647, %v2075
    %vm2086 = vcmp.eq.f32.partialorder %v2085, 8.507059e+37
    %v2087 = vand.u32 %v2075, 2147483648
    %v2088 = vor.u32 1.1754944e-38, %v2087
    %v2089 = vsel %vm2086, %v2088, %v2084
    %v2090 = vmul.f32 1.0, %v2089
    %v2092 = vrot.slane %v1925, 6
    %v2094 = vmul.f32 %v2070, %v2092
    %v2095 = vmul.f32 %v2055, %v2071
    %v2096 = vadd.f32 %v2094, %v2095
    %v2097 = vtanh.pop %v2096
    %v2098 = vmul.f32 %v2090, %v2097
    %2099 = vst [vmem:[#allocation4] sm:$0xc] %v2098
    %v2100 = vld [vmem:[#allocation3] sm:$0x30]
    %v2101 = vld [vmem:[#allocation3 + $0x8] sm:$0x30]
    %v2102 = vld [vmem:[#allocation3 + $0x10] sm:$0x30]
    %v2103 = vld [vmem:[#allocation3 + $0x18] sm:$0x30]
    %v2105 = vrot.slane %v2098, 2
    %2107 = vmatpush.msra.mxu0 %v1758
    %2108 = vmatpush.msra.mxu0 %v1754
    %2109 = vmatpush.msra.mxu0 %v1750
    %2110 = vmatpush.msra.mxu0 %v1746
    %2111 = vmatpush.msra.mxu0 %v1742
    %2112 = vmatpush.msra.mxu0 %v1738
    %2113 = vmatpush.msra.mxu0 %v1734
    %2114 = vmatpush.msra.mxu0 %v1730
    %2115 = vmatpush.msra.mxu0 %v1726
    %2116 = vmatpush.msra.mxu0 %v1722
    %2117 = vmatpush.msra.mxu0 %v1718
    %2118 = vmatpush.msra.mxu0 %v1714
    %2119 = vmatpush.msra.mxu0 %v1710
    %2120 = vmatpush.msra.mxu0 %v1706
    %2121 = vmatpush.msra.mxu0 %v1702
    %2122 = vmatpush.msra.mxu0 %v1698
    %2123 = vmatmul.f32.gmra.mxu0 %v2105
    %v2124 = vpop.f32.mrf.mxu0
    %v2125 = vadd.f32 0.0, %v2124
    %2126 = vdwg.mxu0
    %2127 = vmatpush.msra.mxu0 %v1759
    %2128 = vmatpush.msra.mxu0 %v1755
    %2129 = vmatpush.msra.mxu0 %v1751
    %2130 = vmatpush.msra.mxu0 %v1747
    %2131 = vmatpush.msra.mxu0 %v1743
    %2132 = vmatpush.msra.mxu0 %v1739
    %2133 = vmatpush.msra.mxu0 %v1735
    %2134 = vmatpush.msra.mxu0 %v1731
    %2135 = vmatpush.msra.mxu0 %v1727
    %2136 = vmatpush.msra.mxu0 %v1723
    %2137 = vmatpush.msra.mxu0 %v1719
    %2138 = vmatpush.msra.mxu0 %v1715
    %2139 = vmatpush.msra.mxu0 %v1711
    %2140 = vmatpush.msra.mxu0 %v1707
    %2141 = vmatpush.msra.mxu0 %v1703
    %2142 = vmatpush.msra.mxu0 %v1699
    %2143 = vmatmul.f32.gmra.mxu0 %v2105
    %v2144 = vpop.f32.mrf.mxu0
    %v2145 = vadd.f32 0.0, %v2144
    %2146 = vdwg.mxu0
    %2147 = vmatpush.msra.mxu0 %v1760
    %2148 = vmatpush.msra.mxu0 %v1756
    %2149 = vmatpush.msra.mxu0 %v1752
    %2150 = vmatpush.msra.mxu0 %v1748
    %2151 = vmatpush.msra.mxu0 %v1744
    %2152 = vmatpush.msra.mxu0 %v1740
    %2153 = vmatpush.msra.mxu0 %v1736
    %2154 = vmatpush.msra.mxu0 %v1732
    %2155 = vmatpush.msra.mxu0 %v1728
    %2156 = vmatpush.msra.mxu0 %v1724
    %2157 = vmatpush.msra.mxu0 %v1720
    %2158 = vmatpush.msra.mxu0 %v1716
    %2159 = vmatpush.msra.mxu0 %v1712
    %2160 = vmatpush.msra.mxu0 %v1708
    %2161 = vmatpush.msra.mxu0 %v1704
    %2162 = vmatpush.msra.mxu0 %v1700
    %2163 = vmatmul.f32.gmra.mxu0 %v2105
    %v2164 = vpop.f32.mrf.mxu0
    %v2165 = vadd.f32 0.0, %v2164
    %2166 = vdwg.mxu0
    %2167 = vmatpush.msra.mxu0 %v1761
    %2168 = vmatpush.msra.mxu0 %v1757
    %2169 = vmatpush.msra.mxu0 %v1753
    %2170 = vmatpush.msra.mxu0 %v1749
    %2171 = vmatpush.msra.mxu0 %v1745
    %2172 = vmatpush.msra.mxu0 %v1741
    %2173 = vmatpush.msra.mxu0 %v1737
    %2174 = vmatpush.msra.mxu0 %v1733
    %2175 = vmatpush.msra.mxu0 %v1729
    %2176 = vmatpush.msra.mxu0 %v1725
    %2177 = vmatpush.msra.mxu0 %v1721
    %2178 = vmatpush.msra.mxu0 %v1717
    %2179 = vmatpush.msra.mxu0 %v1713
    %2180 = vmatpush.msra.mxu0 %v1709
    %2181 = vmatpush.msra.mxu0 %v1705
    %2182 = vmatpush.msra.mxu0 %v1701
    %2183 = vmatmul.f32.gmra.mxu0 %v2105
    %v2184 = vpop.f32.mrf.mxu0
    %v2185 = vadd.f32 0.0, %v2184
    %2186 = vdwg.mxu0
    %v2191 = vrot.slane %v2125, 4
    %v2192 = vrot.slane %v2145, 4
    %v2193 = vrot.slane %v2165, 4
    %v2194 = vrot.slane %v2185, 4
    %v2199 = vadd.f32 %v2100, %v2191
    %v2200 = vadd.f32 %v2101, %v2192
    %v2201 = vadd.f32 %v2102, %v2193
    %v2202 = vadd.f32 %v2103, %v2194
    %v2203 = vadd.f32 %v2199, %v1765
    %v2204 = vadd.f32 %v2200, %v1766
    %v2205 = vadd.f32 %v2201, %v1767
    %v2206 = vadd.f32 %v2202, %v1768
    %v2207 = vxor.u32 %v2203, 2147483648
    %v2208 = vxor.u32 %v2204, 2147483648
    %v2209 = vmul.f32 %v2207, 1.442695
    %v2210 = vpow.pop %v2209
    %v2211 = vmul.f32 %v2208, 1.442695
    %v2212 = vpow.pop %v2211
    %v2213 = vadd.f32 %v2210, 1.0
    %v2214 = vadd.f32 %v2212, 1.0
    %v2215 = vrcp.pop %v2213
    %v2216 = vmul.f32 %v2213, %v2215
    %v2217 = vsub.f32 1.0, %v2216
    %v2218 = vmul.f32 %v2215, %v2217
    %v2219 = vadd.f32 %v2215, %v2218
    %vm2220 = vweird.f32 %v2213
    %vm2221 = vweird.f32 %v2215
    %vm2222 = vmor %vm2220, %vm2221
    %v2223 = vsel %vm2222, %v2215, %v2219
    %v2224 = vand.u32 2147483647, %v2213
    %vm2225 = vcmp.eq.f32.partialorder %v2224, 8.507059e+37
    %v2226 = vand.u32 %v2213, 2147483648
    %v2227 = vor.u32 1.1754944e-38, %v2226
    %v2228 = vsel %vm2225, %v2227, %v2223
    %v2229 = vmul.f32 1.0, %v2228
    %v2230 = vrcp.pop %v2214
    %v2231 = vmul.f32 %v2214, %v2230
    %v2232 = vsub.f32 1.0, %v2231
    %v2233 = vmul.f32 %v2230, %v2232
    %v2234 = vadd.f32 %v2230, %v2233
    %vm2235 = vweird.f32 %v2214
    %vm2236 = vweird.f32 %v2230
    %vm2237 = vmor %vm2235, %vm2236
    %v2238 = vsel %vm2237, %v2230, %v2234
    %v2239 = vand.u32 2147483647, %v2214
    %vm2240 = vcmp.eq.f32.partialorder %v2239, 8.507059e+37
    %v2241 = vand.u32 %v2214, 2147483648
    %v2242 = vor.u32 1.1754944e-38, %v2241
    %v2243 = vsel %vm2240, %v2242, %v2238
    %v2244 = vmul.f32 1.0, %v2243
    %v2245 = vtanh.pop %v2205
    %v2246 = vxor.u32 %v2206, 2147483648
    %v2247 = vmul.f32 %v2246, 1.442695
    %v2248 = vpow.pop %v2247
    %v2249 = vadd.f32 %v2248, 1.0
    %v2250 = vrcp.pop %v2249
    %v2251 = vmul.f32 %v2249, %v2250
    %v2252 = vsub.f32 1.0, %v2251
    %v2253 = vmul.f32 %v2250, %v2252
    %v2254 = vadd.f32 %v2250, %v2253
    %vm2255 = vweird.f32 %v2249
    %vm2256 = vweird.f32 %v2250
    %vm2257 = vmor %vm2255, %vm2256
    %v2258 = vsel %vm2257, %v2250, %v2254
    %v2259 = vand.u32 2147483647, %v2249
    %vm2260 = vcmp.eq.f32.partialorder %v2259, 8.507059e+37
    %v2261 = vand.u32 %v2249, 2147483648
    %v2262 = vor.u32 1.1754944e-38, %v2261
    %v2263 = vsel %vm2260, %v2262, %v2258
    %v2264 = vmul.f32 1.0, %v2263
    %v2266 = vrot.slane %v2096, 6
    %v2268 = vmul.f32 %v2244, %v2266
    %v2269 = vmul.f32 %v2229, %v2245
    %v2270 = vadd.f32 %v2268, %v2269
    %v2271 = vtanh.pop %v2270
    %v2272 = vmul.f32 %v2264, %v2271
    %2273 = vst [vmem:[#allocation4] sm:$0x30] %v2272
    %v2274 = vld [vmem:[#allocation3] sm:$0xc0]
    %v2275 = vld [vmem:[#allocation3 + $0x8] sm:$0xc0]
    %v2276 = vld [vmem:[#allocation3 + $0x10] sm:$0xc0]
    %v2277 = vld [vmem:[#allocation3 + $0x18] sm:$0xc0]
    %v2279 = vrot.slane %v2272, 4
    %2281 = vmatpush.msra.mxu0 %v1758
    %2282 = vmatpush.msra.mxu0 %v1754
    %2283 = vmatpush.msra.mxu0 %v1750
    %2284 = vmatpush.msra.mxu0 %v1746
    %2285 = vmatpush.msra.mxu0 %v1742
    %2286 = vmatpush.msra.mxu0 %v1738
    %2287 = vmatpush.msra.mxu0 %v1734
    %2288 = vmatpush.msra.mxu0 %v1730
    %2289 = vmatpush.msra.mxu0 %v1726
    %2290 = vmatpush.msra.mxu0 %v1722
    %2291 = vmatpush.msra.mxu0 %v1718
    %2292 = vmatpush.msra.mxu0 %v1714
    %2293 = vmatpush.msra.mxu0 %v1710
    %2294 = vmatpush.msra.mxu0 %v1706
    %2295 = vmatpush.msra.mxu0 %v1702
    %2296 = vmatpush.msra.mxu0 %v1698
    %2297 = vmatmul.f32.gmra.mxu0 %v2279
    %v2298 = vpop.f32.mrf.mxu0
    %v2299 = vadd.f32 0.0, %v2298
    %2300 = vdwg.mxu0
    %2301 = vmatpush.msra.mxu0 %v1759
    %2302 = vmatpush.msra.mxu0 %v1755
    %2303 = vmatpush.msra.mxu0 %v1751
    %2304 = vmatpush.msra.mxu0 %v1747
    %2305 = vmatpush.msra.mxu0 %v1743
    %2306 = vmatpush.msra.mxu0 %v1739
    %2307 = vmatpush.msra.mxu0 %v1735
    %2308 = vmatpush.msra.mxu0 %v1731
    %2309 = vmatpush.msra.mxu0 %v1727
    %2310 = vmatpush.msra.mxu0 %v1723
    %2311 = vmatpush.msra.mxu0 %v1719
    %2312 = vmatpush.msra.mxu0 %v1715
    %2313 = vmatpush.msra.mxu0 %v1711
    %2314 = vmatpush.msra.mxu0 %v1707
    %2315 = vmatpush.msra.mxu0 %v1703
    %2316 = vmatpush.msra.mxu0 %v1699
    %2317 = vmatmul.f32.gmra.mxu0 %v2279
    %v2318 = vpop.f32.mrf.mxu0
    %v2319 = vadd.f32 0.0, %v2318
    %2320 = vdwg.mxu0
    %2321 = vmatpush.msra.mxu0 %v1760
    %2322 = vmatpush.msra.mxu0 %v1756
    %2323 = vmatpush.msra.mxu0 %v1752
    %2324 = vmatpush.msra.mxu0 %v1748
    %2325 = vmatpush.msra.mxu0 %v1744
    %2326 = vmatpush.msra.mxu0 %v1740
    %2327 = vmatpush.msra.mxu0 %v1736
    %2328 = vmatpush.msra.mxu0 %v1732
    %2329 = vmatpush.msra.mxu0 %v1728
    %2330 = vmatpush.msra.mxu0 %v1724
    %2331 = vmatpush.msra.mxu0 %v1720
    %2332 = vmatpush.msra.mxu0 %v1716
    %2333 = vmatpush.msra.mxu0 %v1712
    %2334 = vmatpush.msra.mxu0 %v1708
    %2335 = vmatpush.msra.mxu0 %v1704
    %2336 = vmatpush.msra.mxu0 %v1700
    %2337 = vmatmul.f32.gmra.mxu0 %v2279
    %v2338 = vpop.f32.mrf.mxu0
    %v2339 = vadd.f32 0.0, %v2338
    %2340 = vdwg.mxu0
    %2341 = vmatpush.msra.mxu0 %v1761
    %2342 = vmatpush.msra.mxu0 %v1757
    %2343 = vmatpush.msra.mxu0 %v1753
    %2344 = vmatpush.msra.mxu0 %v1749
    %2345 = vmatpush.msra.mxu0 %v1745
    %2346 = vmatpush.msra.mxu0 %v1741
    %2347 = vmatpush.msra.mxu0 %v1737
    %2348 = vmatpush.msra.mxu0 %v1733
    %2349 = vmatpush.msra.mxu0 %v1729
    %2350 = vmatpush.msra.mxu0 %v1725
    %2351 = vmatpush.msra.mxu0 %v1721
    %2352 = vmatpush.msra.mxu0 %v1717
    %2353 = vmatpush.msra.mxu0 %v1713
    %2354 = vmatpush.msra.mxu0 %v1709
    %2355 = vmatpush.msra.mxu0 %v1705
    %2356 = vmatpush.msra.mxu0 %v1701
    %2357 = vmatmul.f32.gmra.mxu0 %v2279
    %v2358 = vpop.f32.mrf.mxu0
    %v2359 = vadd.f32 0.0, %v2358
    %2360 = vdwg.mxu0
    %v2365 = vrot.slane %v2299, 2
    %v2366 = vrot.slane %v2319, 2
    %v2367 = vrot.slane %v2339, 2
    %v2368 = vrot.slane %v2359, 2
    %v2373 = vadd.f32 %v2274, %v2365
    %v2374 = vadd.f32 %v2275, %v2366
    %v2375 = vadd.f32 %v2276, %v2367
    %v2376 = vadd.f32 %v2277, %v2368
    %v2377 = vadd.f32 %v2373, %v1765
    %v2378 = vadd.f32 %v2374, %v1766
    %v2379 = vadd.f32 %v2375, %v1767
    %v2380 = vadd.f32 %v2376, %v1768
    %v2381 = vxor.u32 %v2377, 2147483648
    %v2382 = vxor.u32 %v2378, 2147483648
    %v2383 = vmul.f32 %v2381, 1.442695
    %v2384 = vpow.pop %v2383
    %v2385 = vmul.f32 %v2382, 1.442695
    %v2386 = vpow.pop %v2385
    %v2387 = vadd.f32 %v2384, 1.0
    %v2388 = vadd.f32 %v2386, 1.0
    %v2389 = vrcp.pop %v2387
    %v2390 = vmul.f32 %v2387, %v2389
    %v2391 = vsub.f32 1.0, %v2390
    %v2392 = vmul.f32 %v2389, %v2391
    %v2393 = vadd.f32 %v2389, %v2392
    %vm2394 = vweird.f32 %v2387
    %vm2395 = vweird.f32 %v2389
    %vm2396 = vmor %vm2394, %vm2395
    %v2397 = vsel %vm2396, %v2389, %v2393
    %v2398 = vand.u32 2147483647, %v2387
    %vm2399 = vcmp.eq.f32.partialorder %v2398, 8.507059e+37
    %v2400 = vand.u32 %v2387, 2147483648
    %v2401 = vor.u32 1.1754944e-38, %v2400
    %v2402 = vsel %vm2399, %v2401, %v2397
    %v2403 = vmul.f32 1.0, %v2402
    %v2404 = vrcp.pop %v2388
    %v2405 = vmul.f32 %v2388, %v2404
    %v2406 = vsub.f32 1.0, %v2405
    %v2407 = vmul.f32 %v2404, %v2406
    %v2408 = vadd.f32 %v2404, %v2407
    %vm2409 = vweird.f32 %v2388
    %vm2410 = vweird.f32 %v2404
    %vm2411 = vmor %vm2409, %vm2410
    %v2412 = vsel %vm2411, %v2404, %v2408
    %v2413 = vand.u32 2147483647, %v2388
    %vm2414 = vcmp.eq.f32.partialorder %v2413, 8.507059e+37
    %v2415 = vand.u32 %v2388, 2147483648
    %v2416 = vor.u32 1.1754944e-38, %v2415
    %v2417 = vsel %vm2414, %v2416, %v2412
    %v2418 = vmul.f32 1.0, %v2417
    %v2419 = vtanh.pop %v2379
    %v2420 = vxor.u32 %v2380, 2147483648
    %v2421 = vmul.f32 %v2420, 1.442695
    %v2422 = vpow.pop %v2421
    %v2423 = vadd.f32 %v2422, 1.0
    %v2424 = vrcp.pop %v2423
    %v2425 = vmul.f32 %v2423, %v2424
    %v2426 = vsub.f32 1.0, %v2425
    %v2427 = vmul.f32 %v2424, %v2426
    %v2428 = vadd.f32 %v2424, %v2427
    %vm2429 = vweird.f32 %v2423
    %vm2430 = vweird.f32 %v2424
    %vm2431 = vmor %vm2429, %vm2430
    %v2432 = vsel %vm2431, %v2424, %v2428
    %v2433 = vand.u32 2147483647, %v2423
    %vm2434 = vcmp.eq.f32.partialorder %v2433, 8.507059e+37
    %v2435 = vand.u32 %v2423, 2147483648
    %v2436 = vor.u32 1.1754944e-38, %v2435
    %v2437 = vsel %vm2434, %v2436, %v2432
    %v2438 = vmul.f32 1.0, %v2437
    %v2440 = vrot.slane %v2270, 6
    %v2442 = vmul.f32 %v2418, %v2440
    %v2443 = vmul.f32 %v2403, %v2419
    %v2444 = vadd.f32 %v2442, %v2443
    %v2445 = vtanh.pop %v2444
    %v2446 = vmul.f32 %v2438, %v2445
    %2447 = vst [vmem:[#allocation4] sm:$0xc0] %v2446
    %v2448 = vld [vmem:[#allocation3 + $0x20] sm:$0x3]
    %v2449 = vld [vmem:[#allocation3 + $0x28] sm:$0x3]
    %v2450 = vld [vmem:[#allocation3 + $0x30] sm:$0x3]
    %v2451 = vld [vmem:[#allocation3 + $0x38] sm:$0x3]
    %v2453 = vrot.slane %v2446, 6
    %2455 = vmatpush.msra.mxu0 %v1758
    %2456 = vmatpush.msra.mxu0 %v1754
    %2457 = vmatpush.msra.mxu0 %v1750
    %2458 = vmatpush.msra.mxu0 %v1746
    %2459 = vmatpush.msra.mxu0 %v1742
    %2460 = vmatpush.msra.mxu0 %v1738
    %2461 = vmatpush.msra.mxu0 %v1734
    %2462 = vmatpush.msra.mxu0 %v1730
    %2463 = vmatpush.msra.mxu0 %v1726
    %2464 = vmatpush.msra.mxu0 %v1722
    %2465 = vmatpush.msra.mxu0 %v1718
    %2466 = vmatpush.msra.mxu0 %v1714
    %2467 = vmatpush.msra.mxu0 %v1710
    %2468 = vmatpush.msra.mxu0 %v1706
    %2469 = vmatpush.msra.mxu0 %v1702
    %2470 = vmatpush.msra.mxu0 %v1698
    %2471 = vmatmul.f32.gmra.mxu0 %v2453
    %v2472 = vpop.f32.mrf.mxu0
    %v2473 = vadd.f32 0.0, %v2472
    %2474 = vdwg.mxu0
    %2475 = vmatpush.msra.mxu0 %v1759
    %2476 = vmatpush.msra.mxu0 %v1755
    %2477 = vmatpush.msra.mxu0 %v1751
    %2478 = vmatpush.msra.mxu0 %v1747
    %2479 = vmatpush.msra.mxu0 %v1743
    %2480 = vmatpush.msra.mxu0 %v1739
    %2481 = vmatpush.msra.mxu0 %v1735
    %2482 = vmatpush.msra.mxu0 %v1731
    %2483 = vmatpush.msra.mxu0 %v1727
    %2484 = vmatpush.msra.mxu0 %v1723
    %2485 = vmatpush.msra.mxu0 %v1719
    %2486 = vmatpush.msra.mxu0 %v1715
    %2487 = vmatpush.msra.mxu0 %v1711
    %2488 = vmatpush.msra.mxu0 %v1707
    %2489 = vmatpush.msra.mxu0 %v1703
    %2490 = vmatpush.msra.mxu0 %v1699
    %2491 = vmatmul.f32.gmra.mxu0 %v2453
    %v2492 = vpop.f32.mrf.mxu0
    %v2493 = vadd.f32 0.0, %v2492
    %2494 = vdwg.mxu0
    %2495 = vmatpush.msra.mxu0 %v1760
    %2496 = vmatpush.msra.mxu0 %v1756
    %2497 = vmatpush.msra.mxu0 %v1752
    %2498 = vmatpush.msra.mxu0 %v1748
    %2499 = vmatpush.msra.mxu0 %v1744
    %2500 = vmatpush.msra.mxu0 %v1740
    %2501 = vmatpush.msra.mxu0 %v1736
    %2502 = vmatpush.msra.mxu0 %v1732
    %2503 = vmatpush.msra.mxu0 %v1728
    %2504 = vmatpush.msra.mxu0 %v1724
    %2505 = vmatpush.msra.mxu0 %v1720
    %2506 = vmatpush.msra.mxu0 %v1716
    %2507 = vmatpush.msra.mxu0 %v1712
    %2508 = vmatpush.msra.mxu0 %v1708
    %2509 = vmatpush.msra.mxu0 %v1704
    %2510 = vmatpush.msra.mxu0 %v1700
    %2511 = vmatmul.f32.gmra.mxu0 %v2453
    %v2512 = vpop.f32.mrf.mxu0
    %v2513 = vadd.f32 0.0, %v2512
    %2514 = vdwg.mxu0
    %2515 = vmatpush.msra.mxu0 %v1761
    %2516 = vmatpush.msra.mxu0 %v1757
    %2517 = vmatpush.msra.mxu0 %v1753
    %2518 = vmatpush.msra.mxu0 %v1749
    %2519 = vmatpush.msra.mxu0 %v1745
    %2520 = vmatpush.msra.mxu0 %v1741
    %2521 = vmatpush.msra.mxu0 %v1737
    %2522 = vmatpush.msra.mxu0 %v1733
    %2523 = vmatpush.msra.mxu0 %v1729
    %2524 = vmatpush.msra.mxu0 %v1725
    %2525 = vmatpush.msra.mxu0 %v1721
    %2526 = vmatpush.msra.mxu0 %v1717
    %2527 = vmatpush.msra.mxu0 %v1713
    %2528 = vmatpush.msra.mxu0 %v1709
    %2529 = vmatpush.msra.mxu0 %v1705
    %2530 = vmatpush.msra.mxu0 %v1701
    %2531 = vmatmul.f32.gmra.mxu0 %v2453
    %v2532 = vpop.f32.mrf.mxu0
    %v2533 = vadd.f32 0.0, %v2532
    %2534 = vdwg.mxu0
    %v2535 = vadd.f32 %v2448, %v2473
    %v2536 = vadd.f32 %v2449, %v2493
    %v2537 = vadd.f32 %v2450, %v2513
    %v2538 = vadd.f32 %v2451, %v2533
    %v2539 = vadd.f32 %v2535, %v1765
    %v2540 = vadd.f32 %v2536, %v1766
    %v2541 = vadd.f32 %v2537, %v1767
    %v2542 = vadd.f32 %v2538, %v1768
    %v2543 = vxor.u32 %v2539, 2147483648
    %v2544 = vxor.u32 %v2540, 2147483648
    %v2545 = vmul.f32 %v2543, 1.442695
    %v2546 = vpow.pop %v2545
    %v2547 = vmul.f32 %v2544, 1.442695
    %v2548 = vpow.pop %v2547
    %v2549 = vadd.f32 %v2546, 1.0
    %v2550 = vadd.f32 %v2548, 1.0
    %v2551 = vrcp.pop %v2549
    %v2552 = vmul.f32 %v2549, %v2551
    %v2553 = vsub.f32 1.0, %v2552
    %v2554 = vmul.f32 %v2551, %v2553
    %v2555 = vadd.f32 %v2551, %v2554
    %vm2556 = vweird.f32 %v2549
    %vm2557 = vweird.f32 %v2551
    %vm2558 = vmor %vm2556, %vm2557
    %v2559 = vsel %vm2558, %v2551, %v2555
    %v2560 = vand.u32 2147483647, %v2549
    %vm2561 = vcmp.eq.f32.partialorder %v2560, 8.507059e+37
    %v2562 = vand.u32 %v2549, 2147483648
    %v2563 = vor.u32 1.1754944e-38, %v2562
    %v2564 = vsel %vm2561, %v2563, %v2559
    %v2565 = vmul.f32 1.0, %v2564
    %v2566 = vrcp.pop %v2550
    %v2567 = vmul.f32 %v2550, %v2566
    %v2568 = vsub.f32 1.0, %v2567
    %v2569 = vmul.f32 %v2566, %v2568
    %v2570 = vadd.f32 %v2566, %v2569
    %vm2571 = vweird.f32 %v2550
    %vm2572 = vweird.f32 %v2566
    %vm2573 = vmor %vm2571, %vm2572
    %v2574 = vsel %vm2573, %v2566, %v2570
    %v2575 = vand.u32 2147483647, %v2550
    %vm2576 = vcmp.eq.f32.partialorder %v2575, 8.507059e+37
    %v2577 = vand.u32 %v2550, 2147483648
    %v2578 = vor.u32 1.1754944e-38, %v2577
    %v2579 = vsel %vm2576, %v2578, %v2574
    %v2580 = vmul.f32 1.0, %v2579
    %v2581 = vtanh.pop %v2541
    %v2582 = vxor.u32 %v2542, 2147483648
    %v2583 = vmul.f32 %v2582, 1.442695
    %v2584 = vpow.pop %v2583
    %v2585 = vadd.f32 %v2584, 1.0
    %v2586 = vrcp.pop %v2585
    %v2587 = vmul.f32 %v2585, %v2586
    %v2588 = vsub.f32 1.0, %v2587
    %v2589 = vmul.f32 %v2586, %v2588
    %v2590 = vadd.f32 %v2586, %v2589
    %vm2591 = vweird.f32 %v2585
    %vm2592 = vweird.f32 %v2586
    %vm2593 = vmor %vm2591, %vm2592
    %v2594 = vsel %vm2593, %v2586, %v2590
    %v2595 = vand.u32 2147483647, %v2585
    %vm2596 = vcmp.eq.f32.partialorder %v2595, 8.507059e+37
    %v2597 = vand.u32 %v2585, 2147483648
    %v2598 = vor.u32 1.1754944e-38, %v2597
    %v2599 = vsel %vm2596, %v2598, %v2594
    %v2600 = vmul.f32 1.0, %v2599
    %v2602 = vrot.slane %v2444, 6
    %v2604 = vmul.f32 %v2580, %v2602
    %v2605 = vmul.f32 %v2565, %v2581
    %v2606 = vadd.f32 %v2604, %v2605
    %v2607 = vtanh.pop %v2606
    %v2608 = vmul.f32 %v2600, %v2607
    %2609 = vst [vmem:[#allocation4 + $0x8] sm:$0x3] %v2608
    %v2610 = vld [vmem:[#allocation3 + $0x20] sm:$0xc]
    %v2611 = vld [vmem:[#allocation3 + $0x28] sm:$0xc]
    %v2612 = vld [vmem:[#allocation3 + $0x30] sm:$0xc]
    %v2613 = vld [vmem:[#allocation3 + $0x38] sm:$0xc]
    %2614 = vmatpush.msra.mxu0 %v1758
    %2615 = vmatpush.msra.mxu0 %v1754
    %2616 = vmatpush.msra.mxu0 %v1750
    %2617 = vmatpush.msra.mxu0 %v1746
    %2618 = vmatpush.msra.mxu0 %v1742
    %2619 = vmatpush.msra.mxu0 %v1738
    %2620 = vmatpush.msra.mxu0 %v1734
    %2621 = vmatpush.msra.mxu0 %v1730
    %2622 = vmatpush.msra.mxu0 %v1726
    %2623 = vmatpush.msra.mxu0 %v1722
    %2624 = vmatpush.msra.mxu0 %v1718
    %2625 = vmatpush.msra.mxu0 %v1714
    %2626 = vmatpush.msra.mxu0 %v1710
    %2627 = vmatpush.msra.mxu0 %v1706
    %2628 = vmatpush.msra.mxu0 %v1702
    %2629 = vmatpush.msra.mxu0 %v1698
    %2630 = vmatmul.f32.gmra.mxu0 %v2608
    %v2631 = vpop.f32.mrf.mxu0
    %v2632 = vadd.f32 0.0, %v2631
    %2633 = vdwg.mxu0
    %2634 = vmatpush.msra.mxu0 %v1759
    %2635 = vmatpush.msra.mxu0 %v1755
    %2636 = vmatpush.msra.mxu0 %v1751
    %2637 = vmatpush.msra.mxu0 %v1747
    %2638 = vmatpush.msra.mxu0 %v1743
    %2639 = vmatpush.msra.mxu0 %v1739
    %2640 = vmatpush.msra.mxu0 %v1735
    %2641 = vmatpush.msra.mxu0 %v1731
    %2642 = vmatpush.msra.mxu0 %v1727
    %2643 = vmatpush.msra.mxu0 %v1723
    %2644 = vmatpush.msra.mxu0 %v1719
    %2645 = vmatpush.msra.mxu0 %v1715
    %2646 = vmatpush.msra.mxu0 %v1711
    %2647 = vmatpush.msra.mxu0 %v1707
    %2648 = vmatpush.msra.mxu0 %v1703
    %2649 = vmatpush.msra.mxu0 %v1699
    %2650 = vmatmul.f32.gmra.mxu0 %v2608
    %v2651 = vpop.f32.mrf.mxu0
    %v2652 = vadd.f32 0.0, %v2651
    %2653 = vdwg.mxu0
    %2654 = vmatpush.msra.mxu0 %v1760
    %2655 = vmatpush.msra.mxu0 %v1756
    %2656 = vmatpush.msra.mxu0 %v1752
    %2657 = vmatpush.msra.mxu0 %v1748
    %2658 = vmatpush.msra.mxu0 %v1744
    %2659 = vmatpush.msra.mxu0 %v1740
    %2660 = vmatpush.msra.mxu0 %v1736
    %2661 = vmatpush.msra.mxu0 %v1732
    %2662 = vmatpush.msra.mxu0 %v1728
    %2663 = vmatpush.msra.mxu0 %v1724
    %2664 = vmatpush.msra.mxu0 %v1720
    %2665 = vmatpush.msra.mxu0 %v1716
    %2666 = vmatpush.msra.mxu0 %v1712
    %2667 = vmatpush.msra.mxu0 %v1708
    %2668 = vmatpush.msra.mxu0 %v1704
    %2669 = vmatpush.msra.mxu0 %v1700
    %2670 = vmatmul.f32.gmra.mxu0 %v2608
    %v2671 = vpop.f32.mrf.mxu0
    %v2672 = vadd.f32 0.0, %v2671
    %2673 = vdwg.mxu0
    %2674 = vmatpush.msra.mxu0 %v1761
    %2675 = vmatpush.msra.mxu0 %v1757
    %2676 = vmatpush.msra.mxu0 %v1753
    %2677 = vmatpush.msra.mxu0 %v1749
    %2678 = vmatpush.msra.mxu0 %v1745
    %2679 = vmatpush.msra.mxu0 %v1741
    %2680 = vmatpush.msra.mxu0 %v1737
    %2681 = vmatpush.msra.mxu0 %v1733
    %2682 = vmatpush.msra.mxu0 %v1729
    %2683 = vmatpush.msra.mxu0 %v1725
    %2684 = vmatpush.msra.mxu0 %v1721
    %2685 = vmatpush.msra.mxu0 %v1717
    %2686 = vmatpush.msra.mxu0 %v1713
    %2687 = vmatpush.msra.mxu0 %v1709
    %2688 = vmatpush.msra.mxu0 %v1705
    %2689 = vmatpush.msra.mxu0 %v1701
    %2690 = vmatmul.f32.gmra.mxu0 %v2608
    %v2691 = vpop.f32.mrf.mxu0
    %v2692 = vadd.f32 0.0, %v2691
    %2693 = vdwg.mxu0
    %v2698 = vrot.slane %v2632, 6
    %v2699 = vrot.slane %v2652, 6
    %v2700 = vrot.slane %v2672, 6
    %v2701 = vrot.slane %v2692, 6
    %v2706 = vadd.f32 %v2610, %v2698
    %v2707 = vadd.f32 %v2611, %v2699
    %v2708 = vadd.f32 %v2612, %v2700
    %v2709 = vadd.f32 %v2613, %v2701
    %v2710 = vadd.f32 %v2706, %v1765
    %v2711 = vadd.f32 %v2707, %v1766
    %v2712 = vadd.f32 %v2708, %v1767
    %v2713 = vadd.f32 %v2709, %v1768
    %v2714 = vxor.u32 %v2710, 2147483648
    %v2715 = vxor.u32 %v2711, 2147483648
    %v2716 = vmul.f32 %v2714, 1.442695
    %v2717 = vpow.pop %v2716
    %v2718 = vmul.f32 %v2715, 1.442695
    %v2719 = vpow.pop %v2718
    %v2720 = vadd.f32 %v2717, 1.0
    %v2721 = vadd.f32 %v2719, 1.0
    %v2722 = vrcp.pop %v2720
    %v2723 = vmul.f32 %v2720, %v2722
    %v2724 = vsub.f32 1.0, %v2723
    %v2725 = vmul.f32 %v2722, %v2724
    %v2726 = vadd.f32 %v2722, %v2725
    %vm2727 = vweird.f32 %v2720
    %vm2728 = vweird.f32 %v2722
    %vm2729 = vmor %vm2727, %vm2728
    %v2730 = vsel %vm2729, %v2722, %v2726
    %v2731 = vand.u32 2147483647, %v2720
    %vm2732 = vcmp.eq.f32.partialorder %v2731, 8.507059e+37
    %v2733 = vand.u32 %v2720, 2147483648
    %v2734 = vor.u32 1.1754944e-38, %v2733
    %v2735 = vsel %vm2732, %v2734, %v2730
    %v2736 = vmul.f32 1.0, %v2735
    %v2737 = vrcp.pop %v2721
    %v2738 = vmul.f32 %v2721, %v2737
    %v2739 = vsub.f32 1.0, %v2738
    %v2740 = vmul.f32 %v2737, %v2739
    %v2741 = vadd.f32 %v2737, %v2740
    %vm2742 = vweird.f32 %v2721
    %vm2743 = vweird.f32 %v2737
    %vm2744 = vmor %vm2742, %vm2743
    %v2745 = vsel %vm2744, %v2737, %v2741
    %v2746 = vand.u32 2147483647, %v2721
    %vm2747 = vcmp.eq.f32.partialorder %v2746, 8.507059e+37
    %v2748 = vand.u32 %v2721, 2147483648
    %v2749 = vor.u32 1.1754944e-38, %v2748
    %v2750 = vsel %vm2747, %v2749, %v2745
    %v2751 = vmul.f32 1.0, %v2750
    %v2752 = vtanh.pop %v2712
    %v2753 = vxor.u32 %v2713, 2147483648
    %v2754 = vmul.f32 %v2753, 1.442695
    %v2755 = vpow.pop %v2754
    %v2756 = vadd.f32 %v2755, 1.0
    %v2757 = vrcp.pop %v2756
    %v2758 = vmul.f32 %v2756, %v2757
    %v2759 = vsub.f32 1.0, %v2758
    %v2760 = vmul.f32 %v2757, %v2759
    %v2761 = vadd.f32 %v2757, %v2760
    %vm2762 = vweird.f32 %v2756
    %vm2763 = vweird.f32 %v2757
    %vm2764 = vmor %vm2762, %vm2763
    %v2765 = vsel %vm2764, %v2757, %v2761
    %v2766 = vand.u32 2147483647, %v2756
    %vm2767 = vcmp.eq.f32.partialorder %v2766, 8.507059e+37
    %v2768 = vand.u32 %v2756, 2147483648
    %v2769 = vor.u32 1.1754944e-38, %v2768
    %v2770 = vsel %vm2767, %v2769, %v2765
    %v2771 = vmul.f32 1.0, %v2770
    %v2773 = vrot.slane %v2606, 6
    %v2775 = vmul.f32 %v2751, %v2773
    %v2776 = vmul.f32 %v2736, %v2752
    %v2777 = vadd.f32 %v2775, %v2776
    %v2778 = vtanh.pop %v2777
    %v2779 = vmul.f32 %v2771, %v2778
    %2780 = vst [vmem:[#allocation4 + $0x8] sm:$0xc] %v2779
    %v2781 = vld [vmem:[#allocation4] sm:$0xff]
    %v2782 = vld [vmem:[#allocation4 + $0x8] sm:$0xf]
    %v2783 = vld [vmem:[#allocation9 + $0x268] sm:$0xff]
    %v2784 = vld [vmem:[#allocation9 + $0x270] sm:$0xff]
    %v2785 = vld [vmem:[#allocation9 + $0x278] sm:$0xff]
    %v2786 = vld [vmem:[#allocation9 + $0x280] sm:$0xff]
    %v2787 = vld [vmem:[#allocation9 + $0x288] sm:$0xff]
    %v2788 = vld [vmem:[#allocation9 + $0x290] sm:$0xff]
    %v2789 = vld [vmem:[#allocation9 + $0x298] sm:$0xff]
    %v2790 = vld [vmem:[#allocation9 + $0x2a0] sm:$0xff]
    %v2791 = vld [vmem:[#allocation9 + $0x2a8] sm:$0xff]
    %v2792 = vld [vmem:[#allocation9 + $0x2b0] sm:$0xff]
    %v2793 = vld [vmem:[#allocation9 + $0x2b8] sm:$0xff]
    %v2794 = vld [vmem:[#allocation9 + $0x2c0] sm:$0xff]
    %v2795 = vld [vmem:[#allocation9 + $0x2c8] sm:$0xff]
    %v2796 = vld [vmem:[#allocation9 + $0x2d0] sm:$0xff]
    %v2797 = vld [vmem:[#allocation9 + $0x2d8] sm:$0xff]
    %v2798 = vld [vmem:[#allocation9 + $0x2e0] sm:$0xff]
    %v2799 = vld [vmem:[#allocation9 + $0x2e8] sm:$0x1]
    %v2800 = vperm.slane %v2799, 0
    %2801 = vmatpush.msra.mxu0 %v2798
    %2802 = vmatpush.msra.mxu0 %v2797
    %2803 = vmatpush.msra.mxu0 %v2796
    %2804 = vmatpush.msra.mxu0 %v2795
    %2805 = vmatpush.msra.mxu0 %v2794
    %2806 = vmatpush.msra.mxu0 %v2793
    %2807 = vmatpush.msra.mxu0 %v2792
    %2808 = vmatpush.msra.mxu0 %v2791
    %2809 = vmatpush.msra.mxu0 %v2790
    %2810 = vmatpush.msra.mxu0 %v2789
    %2811 = vmatpush.msra.mxu0 %v2788
    %2812 = vmatpush.msra.mxu0 %v2787
    %2813 = vmatpush.msra.mxu0 %v2786
    %2814 = vmatpush.msra.mxu0 %v2785
    %2815 = vmatpush.msra.mxu0 %v2784
    %2816 = vmatpush.msra.mxu0 %v2783
    %2817 = vmatmul.f32.gmra.mxu0 %v2781
    %v2818 = vpop.f32.mrf.mxu0
    %v2819 = vadd.f32 %v2800, %v2818
    %2820 = vmatmul.f32.gmra.mxu0 %v2782
    %v2821 = vpop.f32.mrf.mxu0
    %v2822 = vadd.f32 %v2800, %v2821
    %2823 = vdwg.mxu0
    %2824 = vst [vmem:[%s5] sm:$0xff] %v2819
    %2825 = vst [vmem:[%s5 + $0x8] sm:$0xf] %v2822
    %2826 = vst [vmem:[%s5 + $0xc] sm:$0x3] %v1696
    // Predicated region
    $region34: #{vqae_forward.1} parent=1 // pred_check
      _
    $region35: #{vqae_forward.1} parent=1 // pred_check_branch
      %2828 = sbr.rel (0) target = $region37
    $region36: #{vqae_forward.1} parent=1 // pred_region
      _
    $region37: #{vqae_forward.1} parent=1 // pred_fallthru
      _
    // Predicated region
    $region38: #{vqae_forward.1} parent=1 // pred_check
      _
    $region39: #{vqae_forward.1} parent=1 // pred_check_branch
      %2830 = sbr.rel (0) target = $region41
    $region40: #{vqae_forward.1} parent=1 // pred_region
      _
    $region41: #{vqae_forward.1} parent=1 // pred_fallthru
      _
    %2831 = vsyncpa [#allocation6], 1
    %2832 = vsyncpa [#allocation8], 1

</llo_original>
